<compile_context>
chip_gen: v6e
topology: v6e:2x2x1
jax: 0.10.0
libtpu: 0.0.40
codegen_flags: <defaults>
</compile_context>

<pallas_src>
import numpy as np
import jax
import jax.numpy as jnp
from jax.experimental import pallas as pl
from jax.experimental.pallas import tpu as pltpu


# --------------------------------------------------------------------------------------
# Packed-operand layouts (shared by kernel factory and wrapper so offsets cannot drift).
# --------------------------------------------------------------------------------------
def _wslab_layout(H, HEADS, C_IN):
    """Row offsets inside the lane-128 weight slab (constant across grid steps)."""
    HP = ((HEADS + 7) // 8) * 8      # pad head-row blocks to 8 sublanes
    off, r = {}, 0
    for name, rows in (('WGEXT', H),        # [H, H+HEADS]  GAT linear | dst-logit fold
                       ('WSSEL', HP),       # [HEADS, H]    per-head att_src selector
                       ('HMASK', HP),       # [HEADS, H]    0/1 lane masks for head h
                       ('WGIN1', H),        # [H, 2H]       GIN lin1 * bn_gin scale
                       ('WGIN2', 2 * H),    # [2H, H]       GIN lin2 * bn3 scale
                       ('WPROJ', 3 * H),    # [3H, H]       project / 3 (split per layer)
                       ('W1', C_IN),        # [C_IN, H]     GCN weight * bn1 scale (VPU)
                       ('B1', 1), ('BN2S', 1), ('BGAT', 1), ('BGIN1', 1),
                       ('BGIN2', 1), ('BN3S', 1), ('BPROJ', 1)):
        off[name] = r
        r += rows
    return off, ((r + 7) // 8) * 8, HP


def _adj_layout(BN, NGblk):
    """Row offsets inside one per-block adjacency/pooling slab (lane width = BN)."""
    off = {'ANORM': 0,            # [BN, BN]  D^-1/2 (A+I) D^-1/2
           'AGIN': BN,            # [BN, BN]  A + (1+eps) I
           'NEG': 2 * BN,         # [BN, BN]  0 on edges/self-loops, -1e30 elsewhere
           'PCOMB': 3 * BN}       # [NGblk, BN]  P + P/cnt  (sum + mean pooling rows)
    rows = ((3 * BN + NGblk + 7) // 8) * 8
    return off, rows


# --------------------------------------------------------------------------------------
# Kernel
# --------------------------------------------------------------------------------------
def make_pose_gnn_kernel(BN, NGblk, NPG, C_IN, H, HEADS, HP, WO, AO):
    H2 = 2 * H
    f32 = jnp.float32

    def kernel(x_ref, adj_ref, w_ref, out_ref, xs_ref):
        # ===== GCNConv (+BN1+ReLU): BN/bias folded into w1/b1, a_norm precomputed =====
        # Input projection (K = C_IN = 2) on the VPU: broadcast FMAs, no MXU fill/drain.
        x = x_ref[...]                                                # [BN, C_IN]
        h0 = x[:, 0:1] * w_ref[WO['W1']:WO['W1'] + 1, 0:H]
        for c in range(1, C_IN):
            h0 = h0 + x[:, c:c + 1] * w_ref[WO['W1'] + c:WO['W1'] + c + 1, 0:H]
        x1 = jnp.dot(adj_ref[AO['ANORM']:AO['ANORM'] + BN, :], h0,
                     preferred_element_type=f32) + w_ref[WO['B1']:WO['B1'] + 1, 0:H]
        x1 = jnp.maximum(x1, 0.0)                                     # [BN, H]
        # dropout: eval mode -> identity

        # ===== GATConv (+BN2+ReLU) =====
        # One matmul gives xh (lanes 0:H) and the per-head dst logits (lanes H:H+HEADS).
        xh_ext = jnp.dot(x1, w_ref[WO['WGEXT']:WO['WGEXT'] + H, 0:H + HEADS],
                         preferred_element_type=f32)                  # [BN, H+HEADS]
        xh = xh_ext[:, 0:H]
        # Per-head src logits with source nodes along lanes (QK^T-style contraction).
        a_s = jax.lax.dot_general(
            w_ref[WO['WSSEL']:WO['WSSEL'] + HP, 0:H], xh,
            (((1,), (1,)), ((), ())), preferred_element_type=f32)     # [HP, BN]
        neg = adj_ref[AO['NEG']:AO['NEG'] + BN, :]                    # [BN, BN] single copy
        attn = jnp.zeros((BN, H), f32)
        for h in range(HEADS):
            e = xh_ext[:, H + h:H + h + 1] + a_s[h:h + 1, :]          # e[i,j] = ad_i + as_j
            e = jnp.maximum(e, 0.2 * e) + neg                         # leaky_relu + edge mask
            e = e - jnp.max(e, axis=1, keepdims=True)
            p = jnp.exp(e)
            alpha = p * pl.reciprocal(jnp.sum(p, axis=1, keepdims=True), approx=True)
            out_h = jnp.dot(alpha, xh, preferred_element_type=f32)    # [BN, H]
            attn = attn + out_h * w_ref[WO['HMASK'] + h:WO['HMASK'] + h + 1, 0:H]
        x2 = jnp.maximum(attn * w_ref[WO['BN2S']:WO['BN2S'] + 1, 0:H]
                         + w_ref[WO['BGAT']:WO['BGAT'] + 1, 0:H], 0.0)

        # ===== GINConv (+x1 skip, BN3+ReLU); (1+eps) folded into adjacency diagonal =====
        gin_in = jnp.dot(adj_ref[AO['AGIN']:AO['AGIN'] + BN, :], x2,
                         preferred_element_type=f32)
        g1 = jnp.maximum(
            jnp.dot(gin_in, w_ref[WO['WGIN1']:WO['WGIN1'] + H, 0:H2],
                    preferred_element_type=f32)
            + w_ref[WO['BGIN1']:WO['BGIN1'] + 1, 0:H2], 0.0)
        g2 = jnp.dot(g1, w_ref[WO['WGIN2']:WO['WGIN2'] + H2, 0:H],
                     preferred_element_type=f32) + w_ref[WO['BGIN2']:WO['BGIN2'] + 1, 0:H]
        x3 = jnp.maximum(g2 + x1 * w_ref[WO['BN3S']:WO['BN3S'] + 1, 0:H], 0.0)

        # ===== JK('cat') + (mean + max + sum)/3 pooling + projection =====
        # No xcat scratch / lane-offset stores: accumulate sum_k (Pcomb@xk + max_k) @ wproj_k.
        # Per-graph max: stage xk once, then NPG strided sublane reads (graphs own NPG
        # contiguous rows) -> constant op count regardless of the number of graphs.
        p_comb = adj_ref[AO['PCOMB']:AO['PCOMB'] + NGblk, :]          # [NGblk, BN]
        acc = jnp.zeros((NGblk, 128), f32)
        for k, xk in enumerate((x1, x2, x3)):
            xs_ref[...] = xk
            gmax = xs_ref[pl.ds(0, NGblk, stride=NPG), :]             # rows 0, NPG, 2*NPG, ...
            for r in range(1, NPG):
                gmax = jnp.maximum(gmax, xs_ref[pl.ds(r, NGblk, stride=NPG), :])
            pooled = jnp.dot(p_comb, xk, preferred_element_type=f32) + gmax   # [NGblk, H]
            acc = acc + jnp.dot(
                pooled, w_ref[WO['WPROJ'] + k * H:WO['WPROJ'] + (k + 1) * H, :],
                preferred_element_type=f32)                           # [NGblk, 128]
        # Lane-dense 128-wide output store; lanes H:128 are zero by construction.
        out_ref[...] = acc + w_ref[WO['BPROJ']:WO['BPROJ'] + 1, :]

    return kernel


# --------------------------------------------------------------------------------------
# Wrapper: graph constants + BN/bias folding + operand packing + pallas_call
# --------------------------------------------------------------------------------------
def pose_gnn_forward(x, edge_index, batch, params, *, hidden=32, heads=4,
                     num_graphs=2, block_nodes=128):
    f32 = jnp.float32
    NEG = -1e30
    Nt, C_IN = x.shape
    H, NG, BN = hidden, num_graphs, block_nodes
    assert H % heads == 0
    assert Nt % NG == 0, "graphs must have a uniform node count"
    NPG = Nt // NG
    # TODO(synk): support ragged graphs / tail blocks (non-uniform node counts or a node
    # total that is not a multiple of block_nodes) via padding graphs.
    assert BN % NPG == 0 and Nt % BN == 0
    batch_np = np.asarray(jax.device_get(batch))
    assert np.array_equal(batch_np, np.repeat(np.arange(NG), NPG)), \
        "nodes must be grouped contiguously by graph"
    NGblk = BN // NPG
    num_blocks = Nt // BN

    # ---- graph-structure constants (XLA glue; depend only on edge_index / batch) ----
    A = jnp.zeros((Nt, Nt), f32).at[edge_index[1], edge_index[0]].set(1.0)
    eye = jnp.eye(Nt, dtype=f32)
    a_hat = A + eye
    dinv = jax.lax.rsqrt(a_hat.sum(axis=1))
    a_norm = dinv[:, None] * a_hat * dinv[None, :]
    a_gin = A + (1.0 + params['eps_gin']) * eye
    neg = jnp.where(a_hat > 0, 0.0, NEG)

    P = (batch[None, :] == jnp.arange(NG, dtype=batch.dtype)[:, None]).astype(f32)
    cnt = jnp.maximum(P.sum(axis=1, keepdims=True), 1.0)          # guard empty graphs
    p_comb = P + P / cnt                                          # sum + mean (/3 in w_proj)

    # Per-block diagonal slabs (graphs never span blocks, so this is exact).
    AO, R_ADJ = _adj_layout(BN, NGblk)
    blocks = []
    for b in range(num_blocks):
        ns = slice(b * BN, (b + 1) * BN)
        gs = slice(b * NGblk, (b + 1) * NGblk)
        blk = jnp.zeros((R_ADJ, BN), f32)
        blk = blk.at[AO['ANORM']:AO['ANORM'] + BN, :].set(a_norm[ns, ns])
        blk = blk.at[AO['AGIN']:AO['AGIN'] + BN, :].set(a_gin[ns, ns])
        blk = blk.at[AO['NEG']:AO['NEG'] + BN, :].set(neg[ns, ns])
        blk = blk.at[AO['PCOMB']:AO['PCOMB'] + NGblk, :].set(p_comb[gs, ns])
        blocks.append(blk)
    adj_pack = jnp.concatenate(blocks, axis=0)                    # [num_blocks*R_ADJ, BN]

    # ---- eval-mode BatchNorm folding + bias folding into weights ----
    def fold_bn(g, b, rm, rv, eps=1e-5):
        s = g / jnp.sqrt(rv + eps)
        return s.astype(f32), (b - rm * s).astype(f32)

    bn1s, bn1b = fold_bn(*params['bn1'])
    bn2s, bn2b = fold_bn(*params['bn2'])
    bn3s, bn3b = fold_bn(*params['bn3'])
    bngs, bngb = fold_bn(*params['bn_gin'])

    w1f = params['w1'] * bn1s[None, :]
    b1f = params['b1'] * bn1s + bn1b
    bgatf = params['b_gat'] * bn2s + bn2b                         # bn2 scale can't fold into wg
    wgin1f = params['w_gin1'] * bngs[None, :]
    bgin1f = params['b_gin1'] * bngs + bngb
    wgin2f = params['w_gin2'] * bn3s[None, :]
    bgin2f = params['b_gin2'] * bn3s + bn3b
    wproj3 = params['w_proj'] / 3.0

    HD = H // heads
    hoh = (jnp.arange(H)[None, :] // HD == jnp.arange(heads)[:, None]).astype(f32)  # [heads,H]
    w_d = hoh.T * params['att_dst'][:, None]                       # [H, heads]
    wg_ext = jnp.concatenate([params['wg'], params['wg'] @ w_d], axis=1)  # [H, H+heads]
    w_ssel = hoh * params['att_src'][None, :]                      # [heads, H]
    hmask = hoh                                                    # [heads, H]

    # ---- single lane-128 weight slab (constant across grid steps -> VMEM-resident) ----
    WO, RW, HP = _wslab_layout(H, heads, C_IN)
    W = jnp.zeros((RW, 128), f32)
    W = W.at[WO['WGEXT']:WO['WGEXT'] + H, 0:H + heads].set(wg_ext)
    W = W.at[WO['WSSEL']:WO['WSSEL'] + heads, 0:H].set(w_ssel)
    W = W.at[WO['HMASK']:WO['HMASK'] + heads, 0:H].set(hmask)
    W = W.at[WO['WGIN1']:WO['WGIN1'] + H, 0:2 * H].set(wgin1f)
    W = W.at[WO['WGIN2']:WO['WGIN2'] + 2 * H, 0:H].set(wgin2f)
    W = W.at[WO['WPROJ']:WO['WPROJ'] + 3 * H, 0:H].set(wproj3)
    W = W.at[WO['W1']:WO['W1'] + C_IN, 0:H].set(w1f)
    W = W.at[WO['B1'], 0:H].set(b1f)
    W = W.at[WO['BN2S'], 0:H].set(bn2s)
    W = W.at[WO['BGAT'], 0:H].set(bgatf)
    W = W.at[WO['BGIN1'], 0:2 * H].set(bgin1f)
    W = W.at[WO['BGIN2'], 0:H].set(bgin2f)
    W = W.at[WO['BN3S'], 0:H].set(bn3s)
    W = W.at[WO['BPROJ'], 0:H].set(params['b_proj'])

    kernel = make_pose_gnn_kernel(BN, NGblk, NPG, C_IN, H, heads, HP, WO, AO)
    out_pad = pl.pallas_call(
        kernel,
        out_shape=jax.ShapeDtypeStruct((NG, 128), f32),
        grid=(num_blocks,),
        in_specs=[
            pl.BlockSpec((BN, C_IN), lambda i: (i, 0)),            # node features
            pl.BlockSpec((R_ADJ, BN), lambda i: (i, 0)),           # per-block adj/pool slab
            pl.BlockSpec((RW, 128), lambda i: (0, 0)),             # weights: VMEM-resident
        ],
        out_specs=pl.BlockSpec((NGblk, 128), lambda i: (i, 0)),    # lane-dense output slab
        scratch_shapes=[pltpu.VMEM((BN, H), f32)],                 # staging for strided max
        compiler_params=pltpu.CompilerParams(
            dimension_semantics=("parallel",),                     # v7x: shard across 2 TCs
            vmem_limit_bytes=32 * 1024 * 1024),
    )(x.astype(f32), adj_pack, W)
    return out_pad[:, :H]


# --------------------------------------------------------------------------------------
# Pure-JAX reference (unfused dense math) for verification.
# --------------------------------------------------------------------------------------
def ref_forward(x, edge_index, batch, params, *, hidden=32, heads=4, num_graphs=2):
    f32 = jnp.float32
    N = x.shape[0]
    H, HD, B = hidden, hidden // heads, num_graphs
    A = jnp.zeros((N, N), f32).at[edge_index[1], edge_index[0]].set(1.0)
    eye = jnp.eye(N, dtype=f32)

    def fold_bn(g, b, rm, rv, eps=1e-5):
        s = g / jnp.sqrt(rv + eps)
        return s, b - rm * s

    bn1s, bn1b = fold_bn(*params['bn1'])
    bn2s, bn2b = fold_bn(*params['bn2'])
    bn3s, bn3b = fold_bn(*params['bn3'])
    bngs, bngb = fold_bn(*params['bn_gin'])

    a_hat = A + eye
    dinv = 1.0 / jnp.sqrt(a_hat.sum(axis=1))
    a_norm = dinv[:, None] * a_hat * dinv[None, :]
    x1 = a_norm @ (x @ params['w1']) + params['b1']
    x1 = jnp.maximum(x1 * bn1s + bn1b, 0.0)

    xh = x1 @ params['wg']
    mask = a_hat > 0
    outs = []
    for hd in range(heads):
        sl = slice(hd * HD, (hd + 1) * HD)
        xh_h = xh[:, sl]
        a_s = (xh_h * params['att_src'][sl]).sum(-1)
        a_d = (xh_h * params['att_dst'][sl]).sum(-1)
        e = a_d[:, None] + a_s[None, :]
        e = jnp.where(e > 0, e, 0.2 * e)
        e = jnp.where(mask, e, -1e30)
        e = e - e.max(axis=1, keepdims=True)
        p = jnp.exp(e)
        outs.append((p / p.sum(axis=1, keepdims=True)) @ xh_h)
    x2 = jnp.concatenate(outs, axis=1) + params['b_gat']
    x2 = jnp.maximum(x2 * bn2s + bn2b, 0.0)

    gin_in = (1.0 + params['eps_gin']) * x2 + A @ x2
    g1 = jnp.maximum((gin_in @ params['w_gin1'] + params['b_gin1']) * bngs + bngb, 0.0)
    g2 = g1 @ params['w_gin2'] + params['b_gin2']
    x3 = jnp.maximum((g2 + x1) * bn3s + bn3b, 0.0)

    xcat = jnp.concatenate([x1, x2, x3], axis=1)
    P = (batch[None, :] == jnp.arange(B, dtype=batch.dtype)[:, None]).astype(f32)
    s = P @ xcat
    mean = s / P.sum(axis=1, keepdims=True)
    mx = jnp.stack([jnp.where(P[b][:, None] > 0, xcat, -1e30).max(axis=0)
                    for b in range(B)])
    pooled = (mean + mx + s) / 3.0
    return pooled @ params['w_proj'] + params['b_proj']


def init_params(key, c_in, h):
    f32 = jnp.float32
    ks = jax.random.split(key, 24)

    def nrm(k, shape, scale=0.1):
        return (scale * jax.random.normal(k, shape)).astype(f32)

    def bn(kg, kb, n):
        return (1.0 + 0.1 * jax.random.normal(kg, (n,)).astype(f32),   # gamma
                nrm(kb, (n,)),                                          # beta
                jnp.zeros((n,), f32),                                    # running_mean
                jnp.ones((n,), f32))                                     # running_var

    return {
        'w1': nrm(ks[0], (c_in, h)), 'b1': nrm(ks[1], (h,)),
        'bn1': bn(ks[2], ks[3], h),
        'wg': nrm(ks[4], (h, h)),
        'att_src': nrm(ks[5], (h,)), 'att_dst': nrm(ks[6], (h,)),
        'b_gat': nrm(ks[7], (h,)),
        'bn2': bn(ks[8], ks[9], h),
        'eps_gin': 0.0,                      # GINConv(train_eps=True) initial eps
        'w_gin1': nrm(ks[10], (h, 2 * h)), 'b_gin1': nrm(ks[11], (2 * h,)),
        'bn_gin': bn(ks[12], ks[13], 2 * h),
        'w_gin2': nrm(ks[14], (2 * h, h)), 'b_gin2': nrm(ks[15], (h,)),
        'bn3': bn(ks[16], ks[17], h),
        'w_proj': nrm(ks[18], (3 * h, h)), 'b_proj': nrm(ks[19], (h,)),
    }


if __name__ == "__main__":
    # 32 pose graphs x 8 keypoints x (x,y) features; 128-node blocks -> 2 "parallel" steps.
    NPG, NUM_GRAPHS = 8, 32
    C_IN, H, HEADS = 2, 32, 4
    BN = 128
    N = NUM_GRAPHS * NPG

    key = jax.random.PRNGKey(0)
    kx, kp = jax.random.split(key)
    x = jax.random.normal(kx, (N, C_IN), dtype=jnp.float32)

    # Deterministic pose-like skeleton per graph: bidirectional chain + one extra bone.
    edges = []
    for g in range(NUM_GRAPHS):
        off = g * NPG
        for k in range(NPG - 1):
            edges.append((off + k, off + k + 1))
            edges.append((off + k + 1, off + k))
        edges.append((off + 0, off + 4))
        edges.append((off + 4, off + 0))
    edge_index = jnp.array(edges, dtype=jnp.int32).T             # [2, num_edges]
    batch = jnp.repeat(jnp.arange(NUM_GRAPHS, dtype=jnp.int32), NPG)

    params = init_params(kp, C_IN, H)

    out = pose_gnn_forward(x, edge_index, batch, params,
                           hidden=H, heads=HEADS, num_graphs=NUM_GRAPHS, block_nodes=BN)
    out = jax.block_until_ready(out)
    assert out.shape == (NUM_GRAPHS, H), out.shape

    ref = ref_forward(x, edge_index, batch, params,
                      hidden=H, heads=HEADS, num_graphs=NUM_GRAPHS)
    assert jnp.allclose(out, ref, atol=3e-2, rtol=3e-2), (
        float(jnp.max(jnp.abs(out - ref))))

    print("KERNEL_OK")
</pallas_src>

<mosaic_0001>
module attributes {stable_mosaic.version = 11 : i64} {
  func.func @kernel(%arg0: i32, %arg1: memref<128x2xf32, #tpu.memory_space<vmem>>, %arg2: memref<400x128xf32, #tpu.memory_space<vmem>>, %arg3: memref<256x128xf32, #tpu.memory_space<vmem>>, %arg4: memref<16x128xf32, #tpu.memory_space<vmem>>, %arg5: memref<128x32xf32, #tpu.memory_space<vmem>>) attributes {dimension_semantics = [#tpu.dimension_semantics<parallel>], iteration_bounds = array<i64: 2>, scalar_prefetch = 0 : i64, scratch_operands = 1 : i64, tpu.core_type = #tpu.core_type<tc>, window_params = [{transform_indices = @transform_0, window_bounds = array<i64: 128, 2>}, {transform_indices = @transform_1, window_bounds = array<i64: 400, 128>}, {pipeline_mode = #tpu.pipeline_mode<synchronous>, transform_indices = @transform_2, window_bounds = array<i64: 256, 128>}, {transform_indices = @transform_3, window_bounds = array<i64: 16, 128>}]} {
    %c0 = arith.constant 0 : index
    %c0_0 = arith.constant 0 : index
    %0 = vector.load %arg1[%c0, %c0_0] : memref<128x2xf32, #tpu.memory_space<vmem>>, vector<128x2xf32>
    %1 = vector.extract_strided_slice %0 {offsets = [0, 0], sizes = [128, 1], strides = [1, 1]} : vector<128x2xf32> to vector<128x1xf32>
    %c240 = arith.constant 240 : index
    %c0_1 = arith.constant 0 : index
    %2 = vector.load %arg3[%c240, %c0_1] : memref<256x128xf32, #tpu.memory_space<vmem>>, vector<1x32xf32>
    %3 = vector.broadcast %1 : vector<128x1xf32> to vector<128x32xf32>
    %4 = vector.broadcast %2 : vector<1x32xf32> to vector<128x32xf32>
    %5 = arith.mulf %3, %4 : vector<128x32xf32>
    %6 = vector.extract_strided_slice %0 {offsets = [0, 1], sizes = [128, 1], strides = [1, 1]} : vector<128x2xf32> to vector<128x1xf32>
    %c241 = arith.constant 241 : index
    %c0_2 = arith.constant 0 : index
    %7 = vector.load %arg3[%c241, %c0_2] : memref<256x128xf32, #tpu.memory_space<vmem>>, vector<1x32xf32>
    %8 = vector.broadcast %6 : vector<128x1xf32> to vector<128x32xf32>
    %9 = vector.broadcast %7 : vector<1x32xf32> to vector<128x32xf32>
    %10 = arith.mulf %8, %9 : vector<128x32xf32>
    %11 = arith.addf %5, %10 : vector<128x32xf32>
    %c0_3 = arith.constant 0 : index
    %c0_4 = arith.constant 0 : index
    %12 = vector.load %arg2[%c0_3, %c0_4] : memref<400x128xf32, #tpu.memory_space<vmem>>, vector<128x128xf32>
    %cst = arith.constant dense<0.000000e+00> : vector<128x32xf32>
    %13 = tpu.matmul %12, %11, %cst {dimension_numbers = #tpu.dot_dimension_numbers<[1], [0], [0], [1], [0, 0, 1, 1], [], []>} : vector<128x128xf32>, vector<128x32xf32>, vector<128x32xf32> -> vector<128x32xf32>
    %c242 = arith.constant 242 : index
    %c0_5 = arith.constant 0 : index
    %14 = vector.load %arg3[%c242, %c0_5] : memref<256x128xf32, #tpu.memory_space<vmem>>, vector<1x32xf32>
    %15 = vector.broadcast %14 : vector<1x32xf32> to vector<128x32xf32>
    %16 = arith.addf %13, %15 : vector<128x32xf32>
    %cst_6 = arith.constant 0.000000e+00 : f32
    %17 = vector.broadcast %cst_6 : f32 to vector<128x32xf32>
    %18 = arith.maximumf %16, %17 : vector<128x32xf32>
    %c0_7 = arith.constant 0 : index
    %c0_8 = arith.constant 0 : index
    %19 = vector.load %arg3[%c0_7, %c0_8] : memref<256x128xf32, #tpu.memory_space<vmem>>, vector<32x36xf32>
    %cst_9 = arith.constant dense<0.000000e+00> : vector<128x36xf32>
    %20 = tpu.matmul %18, %19, %cst_9 {dimension_numbers = #tpu.dot_dimension_numbers<[1], [0], [0], [1], [0, 0, 1, 1], [], []>} : vector<128x32xf32>, vector<32x36xf32>, vector<128x36xf32> -> vector<128x36xf32>
    %21 = vector.extract_strided_slice %20 {offsets = [0, 0], sizes = [128, 32], strides = [1, 1]} : vector<128x36xf32> to vector<128x32xf32>
    %c32 = arith.constant 32 : index
    %c0_10 = arith.constant 0 : index
    %22 = vector.load %arg3[%c32, %c0_10] : memref<256x128xf32, #tpu.memory_space<vmem>>, vector<8x32xf32>
    %cst_11 = arith.constant dense<0.000000e+00> : vector<8x128xf32>
    %23 = tpu.matmul %22, %21, %cst_11 {dimension_numbers = #tpu.dot_dimension_numbers<[1], [1], [0], [0], [0, 0, 1, 0], [], []>} : vector<8x32xf32>, vector<128x32xf32>, vector<8x128xf32> -> vector<8x128xf32>
    %c256 = arith.constant 256 : index
    %c0_12 = arith.constant 0 : index
    %24 = vector.load %arg2[%c256, %c0_12] : memref<400x128xf32, #tpu.memory_space<vmem>>, vector<128x128xf32>
    %cst_13 = arith.constant 0.000000e+00 : f32
    %25 = vector.broadcast %cst_13 : f32 to vector<128x32xf32>
    %26 = vector.extract_strided_slice %20 {offsets = [0, 32], sizes = [128, 1], strides = [1, 1]} : vector<128x36xf32> to vector<128x1xf32>
    %27 = vector.extract_strided_slice %23 {offsets = [0, 0], sizes = [1, 128], strides = [1, 1]} : vector<8x128xf32> to vector<1x128xf32>
    %28 = vector.broadcast %26 : vector<128x1xf32> to vector<128x128xf32>
    %29 = vector.broadcast %27 : vector<1x128xf32> to vector<128x128xf32>
    %30 = arith.addf %28, %29 : vector<128x128xf32>
    %cst_14 = arith.constant 2.000000e-01 : f32
    %31 = vector.broadcast %cst_14 : f32 to vector<128x128xf32>
    %32 = arith.mulf %31, %30 : vector<128x128xf32>
    %33 = arith.maximumf %30, %32 : vector<128x128xf32>
    %34 = arith.addf %33, %24 : vector<128x128xf32>
    %cst_15 = arith.constant dense<0xFF800000> : vector<128xf32>
    %35 = vector.multi_reduction <maximumf>, %34, %cst_15 [1] : vector<128x128xf32> to vector<128xf32>
    %36 = vector.shape_cast %35 : vector<128xf32> to vector<128x1xf32>
    %37 = vector.broadcast %36 : vector<128x1xf32> to vector<128x128xf32>
    %38 = arith.subf %34, %37 : vector<128x128xf32>
    %39 = math.exp %38 : vector<128x128xf32>
    %cst_16 = arith.constant dense<0.000000e+00> : vector<128xf32>
    %40 = vector.multi_reduction <add>, %39, %cst_16 [1] : vector<128x128xf32> to vector<128xf32>
    %41 = vector.shape_cast %40 : vector<128xf32> to vector<128x1xf32>
    %42 = tpu.reciprocal %41 {approx = true} : vector<128x1xf32> -> vector<128x1xf32>
    %43 = vector.broadcast %42 : vector<128x1xf32> to vector<128x128xf32>
    %44 = arith.mulf %39, %43 : vector<128x128xf32>
    %cst_17 = arith.constant dense<0.000000e+00> : vector<128x32xf32>
    %45 = tpu.matmul %44, %21, %cst_17 {dimension_numbers = #tpu.dot_dimension_numbers<[1], [0], [0], [1], [0, 0, 1, 1], [], []>} : vector<128x128xf32>, vector<128x32xf32>, vector<128x32xf32> -> vector<128x32xf32>
    %c40 = arith.constant 40 : index
    %c0_18 = arith.constant 0 : index
    %46 = vector.load %arg3[%c40, %c0_18] : memref<256x128xf32, #tpu.memory_space<vmem>>, vector<1x32xf32>
    %47 = vector.broadcast %46 : vector<1x32xf32> to vector<128x32xf32>
    %48 = arith.mulf %45, %47 : vector<128x32xf32>
    %49 = arith.addf %25, %48 : vector<128x32xf32>
    %50 = vector.extract_strided_slice %20 {offsets = [0, 33], sizes = [128, 1], strides = [1, 1]} : vector<128x36xf32> to vector<128x1xf32>
    %51 = vector.extract_strided_slice %23 {offsets = [1, 0], sizes = [1, 128], strides = [1, 1]} : vector<8x128xf32> to vector<1x128xf32>
    %52 = vector.broadcast %50 : vector<128x1xf32> to vector<128x128xf32>
    %53 = vector.broadcast %51 : vector<1x128xf32> to vector<128x128xf32>
    %54 = arith.addf %52, %53 : vector<128x128xf32>
    %cst_19 = arith.constant 2.000000e-01 : f32
    %55 = vector.broadcast %cst_19 : f32 to vector<128x128xf32>
    %56 = arith.mulf %55, %54 : vector<128x128xf32>
    %57 = arith.maximumf %54, %56 : vector<128x128xf32>
    %58 = arith.addf %57, %24 : vector<128x128xf32>
    %cst_20 = arith.constant dense<0xFF800000> : vector<128xf32>
    %59 = vector.multi_reduction <maximumf>, %58, %cst_20 [1] : vector<128x128xf32> to vector<128xf32>
    %60 = vector.shape_cast %59 : vector<128xf32> to vector<128x1xf32>
    %61 = vector.broadcast %60 : vector<128x1xf32> to vector<128x128xf32>
    %62 = arith.subf %58, %61 : vector<128x128xf32>
    %63 = math.exp %62 : vector<128x128xf32>
    %cst_21 = arith.constant dense<0.000000e+00> : vector<128xf32>
    %64 = vector.multi_reduction <add>, %63, %cst_21 [1] : vector<128x128xf32> to vector<128xf32>
    %65 = vector.shape_cast %64 : vector<128xf32> to vector<128x1xf32>
    %66 = tpu.reciprocal %65 {approx = true} : vector<128x1xf32> -> vector<128x1xf32>
    %67 = vector.broadcast %66 : vector<128x1xf32> to vector<128x128xf32>
    %68 = arith.mulf %63, %67 : vector<128x128xf32>
    %cst_22 = arith.constant dense<0.000000e+00> : vector<128x32xf32>
    %69 = tpu.matmul %68, %21, %cst_22 {dimension_numbers = #tpu.dot_dimension_numbers<[1], [0], [0], [1], [0, 0, 1, 1], [], []>} : vector<128x128xf32>, vector<128x32xf32>, vector<128x32xf32> -> vector<128x32xf32>
    %c41 = arith.constant 41 : index
    %c0_23 = arith.constant 0 : index
    %70 = vector.load %arg3[%c41, %c0_23] : memref<256x128xf32, #tpu.memory_space<vmem>>, vector<1x32xf32>
    %71 = vector.broadcast %70 : vector<1x32xf32> to vector<128x32xf32>
    %72 = arith.mulf %69, %71 : vector<128x32xf32>
    %73 = arith.addf %49, %72 : vector<128x32xf32>
    %74 = vector.extract_strided_slice %20 {offsets = [0, 34], sizes = [128, 1], strides = [1, 1]} : vector<128x36xf32> to vector<128x1xf32>
    %75 = vector.extract_strided_slice %23 {offsets = [2, 0], sizes = [1, 128], strides = [1, 1]} : vector<8x128xf32> to vector<1x128xf32>
    %76 = vector.broadcast %74 : vector<128x1xf32> to vector<128x128xf32>
    %77 = vector.broadcast %75 : vector<1x128xf32> to vector<128x128xf32>
    %78 = arith.addf %76, %77 : vector<128x128xf32>
    %cst_24 = arith.constant 2.000000e-01 : f32
    %79 = vector.broadcast %cst_24 : f32 to vector<128x128xf32>
    %80 = arith.mulf %79, %78 : vector<128x128xf32>
    %81 = arith.maximumf %78, %80 : vector<128x128xf32>
    %82 = arith.addf %81, %24 : vector<128x128xf32>
    %cst_25 = arith.constant dense<0xFF800000> : vector<128xf32>
    %83 = vector.multi_reduction <maximumf>, %82, %cst_25 [1] : vector<128x128xf32> to vector<128xf32>
    %84 = vector.shape_cast %83 : vector<128xf32> to vector<128x1xf32>
    %85 = vector.broadcast %84 : vector<128x1xf32> to vector<128x128xf32>
    %86 = arith.subf %82, %85 : vector<128x128xf32>
    %87 = math.exp %86 : vector<128x128xf32>
    %cst_26 = arith.constant dense<0.000000e+00> : vector<128xf32>
    %88 = vector.multi_reduction <add>, %87, %cst_26 [1] : vector<128x128xf32> to vector<128xf32>
    %89 = vector.shape_cast %88 : vector<128xf32> to vector<128x1xf32>
    %90 = tpu.reciprocal %89 {approx = true} : vector<128x1xf32> -> vector<128x1xf32>
    %91 = vector.broadcast %90 : vector<128x1xf32> to vector<128x128xf32>
    %92 = arith.mulf %87, %91 : vector<128x128xf32>
    %cst_27 = arith.constant dense<0.000000e+00> : vector<128x32xf32>
    %93 = tpu.matmul %92, %21, %cst_27 {dimension_numbers = #tpu.dot_dimension_numbers<[1], [0], [0], [1], [0, 0, 1, 1], [], []>} : vector<128x128xf32>, vector<128x32xf32>, vector<128x32xf32> -> vector<128x32xf32>
    %c42 = arith.constant 42 : index
    %c0_28 = arith.constant 0 : index
    %94 = vector.load %arg3[%c42, %c0_28] : memref<256x128xf32, #tpu.memory_space<vmem>>, vector<1x32xf32>
    %95 = vector.broadcast %94 : vector<1x32xf32> to vector<128x32xf32>
    %96 = arith.mulf %93, %95 : vector<128x32xf32>
    %97 = arith.addf %73, %96 : vector<128x32xf32>
    %98 = vector.extract_strided_slice %20 {offsets = [0, 35], sizes = [128, 1], strides = [1, 1]} : vector<128x36xf32> to vector<128x1xf32>
    %99 = vector.extract_strided_slice %23 {offsets = [3, 0], sizes = [1, 128], strides = [1, 1]} : vector<8x128xf32> to vector<1x128xf32>
    %100 = vector.broadcast %98 : vector<128x1xf32> to vector<128x128xf32>
    %101 = vector.broadcast %99 : vector<1x128xf32> to vector<128x128xf32>
    %102 = arith.addf %100, %101 : vector<128x128xf32>
    %cst_29 = arith.constant 2.000000e-01 : f32
    %103 = vector.broadcast %cst_29 : f32 to vector<128x128xf32>
    %104 = arith.mulf %103, %102 : vector<128x128xf32>
    %105 = arith.maximumf %102, %104 : vector<128x128xf32>
    %106 = arith.addf %105, %24 : vector<128x128xf32>
    %cst_30 = arith.constant dense<0xFF800000> : vector<128xf32>
    %107 = vector.multi_reduction <maximumf>, %106, %cst_30 [1] : vector<128x128xf32> to vector<128xf32>
    %108 = vector.shape_cast %107 : vector<128xf32> to vector<128x1xf32>
    %109 = vector.broadcast %108 : vector<128x1xf32> to vector<128x128xf32>
    %110 = arith.subf %106, %109 : vector<128x128xf32>
    %111 = math.exp %110 : vector<128x128xf32>
    %cst_31 = arith.constant dense<0.000000e+00> : vector<128xf32>
    %112 = vector.multi_reduction <add>, %111, %cst_31 [1] : vector<128x128xf32> to vector<128xf32>
    %113 = vector.shape_cast %112 : vector<128xf32> to vector<128x1xf32>
    %114 = tpu.reciprocal %113 {approx = true} : vector<128x1xf32> -> vector<128x1xf32>
    %115 = vector.broadcast %114 : vector<128x1xf32> to vector<128x128xf32>
    %116 = arith.mulf %111, %115 : vector<128x128xf32>
    %cst_32 = arith.constant dense<0.000000e+00> : vector<128x32xf32>
    %117 = tpu.matmul %116, %21, %cst_32 {dimension_numbers = #tpu.dot_dimension_numbers<[1], [0], [0], [1], [0, 0, 1, 1], [], []>} : vector<128x128xf32>, vector<128x32xf32>, vector<128x32xf32> -> vector<128x32xf32>
    %c43 = arith.constant 43 : index
    %c0_33 = arith.constant 0 : index
    %118 = vector.load %arg3[%c43, %c0_33] : memref<256x128xf32, #tpu.memory_space<vmem>>, vector<1x32xf32>
    %119 = vector.broadcast %118 : vector<1x32xf32> to vector<128x32xf32>
    %120 = arith.mulf %117, %119 : vector<128x32xf32>
    %121 = arith.addf %97, %120 : vector<128x32xf32>
    %c243 = arith.constant 243 : index
    %c0_34 = arith.constant 0 : index
    %122 = vector.load %arg3[%c243, %c0_34] : memref<256x128xf32, #tpu.memory_space<vmem>>, vector<1x32xf32>
    %123 = vector.broadcast %122 : vector<1x32xf32> to vector<128x32xf32>
    %124 = arith.mulf %121, %123 : vector<128x32xf32>
    %c244 = arith.constant 244 : index
    %c0_35 = arith.constant 0 : index
    %125 = vector.load %arg3[%c244, %c0_35] : memref<256x128xf32, #tpu.memory_space<vmem>>, vector<1x32xf32>
    %126 = vector.broadcast %125 : vector<1x32xf32> to vector<128x32xf32>
    %127 = arith.addf %124, %126 : vector<128x32xf32>
    %cst_36 = arith.constant 0.000000e+00 : f32
    %128 = vector.broadcast %cst_36 : f32 to vector<128x32xf32>
    %129 = arith.maximumf %127, %128 : vector<128x32xf32>
    %c128 = arith.constant 128 : index
    %c0_37 = arith.constant 0 : index
    %130 = vector.load %arg2[%c128, %c0_37] : memref<400x128xf32, #tpu.memory_space<vmem>>, vector<128x128xf32>
    %cst_38 = arith.constant dense<0.000000e+00> : vector<128x32xf32>
    %131 = tpu.matmul %130, %129, %cst_38 {dimension_numbers = #tpu.dot_dimension_numbers<[1], [0], [0], [1], [0, 0, 1, 1], [], []>} : vector<128x128xf32>, vector<128x32xf32>, vector<128x32xf32> -> vector<128x32xf32>
    %c48 = arith.constant 48 : index
    %c0_39 = arith.constant 0 : index
    %132 = vector.load %arg3[%c48, %c0_39] : memref<256x128xf32, #tpu.memory_space<vmem>>, vector<32x64xf32>
    %cst_40 = arith.constant dense<0.000000e+00> : vector<128x64xf32>
    %133 = tpu.matmul %131, %132, %cst_40 {dimension_numbers = #tpu.dot_dimension_numbers<[1], [0], [0], [1], [0, 0, 1, 1], [], []>} : vector<128x32xf32>, vector<32x64xf32>, vector<128x64xf32> -> vector<128x64xf32>
    %c245 = arith.constant 245 : index
    %c0_41 = arith.constant 0 : index
    %134 = vector.load %arg3[%c245, %c0_41] : memref<256x128xf32, #tpu.memory_space<vmem>>, vector<1x64xf32>
    %135 = vector.broadcast %134 : vector<1x64xf32> to vector<128x64xf32>
    %136 = arith.addf %133, %135 : vector<128x64xf32>
    %cst_42 = arith.constant 0.000000e+00 : f32
    %137 = vector.broadcast %cst_42 : f32 to vector<128x64xf32>
    %138 = arith.maximumf %136, %137 : vector<128x64xf32>
    %c80 = arith.constant 80 : index
    %c0_43 = arith.constant 0 : index
    %139 = vector.load %arg3[%c80, %c0_43] : memref<256x128xf32, #tpu.memory_space<vmem>>, vector<64x32xf32>
    %cst_44 = arith.constant dense<0.000000e+00> : vector<128x32xf32>
    %140 = tpu.matmul %138, %139, %cst_44 {dimension_numbers = #tpu.dot_dimension_numbers<[1], [0], [0], [1], [0, 0, 1, 1], [], []>} : vector<128x64xf32>, vector<64x32xf32>, vector<128x32xf32> -> vector<128x32xf32>
    %c246 = arith.constant 246 : index
    %c0_45 = arith.constant 0 : index
    %141 = vector.load %arg3[%c246, %c0_45] : memref<256x128xf32, #tpu.memory_space<vmem>>, vector<1x32xf32>
    %142 = vector.broadcast %141 : vector<1x32xf32> to vector<128x32xf32>
    %143 = arith.addf %140, %142 : vector<128x32xf32>
    %c247 = arith.constant 247 : index
    %c0_46 = arith.constant 0 : index
    %144 = vector.load %arg3[%c247, %c0_46] : memref<256x128xf32, #tpu.memory_space<vmem>>, vector<1x32xf32>
    %145 = vector.broadcast %144 : vector<1x32xf32> to vector<128x32xf32>
    %146 = arith.mulf %18, %145 : vector<128x32xf32>
    %147 = arith.addf %143, %146 : vector<128x32xf32>
    %cst_47 = arith.constant 0.000000e+00 : f32
    %148 = vector.broadcast %cst_47 : f32 to vector<128x32xf32>
    %149 = arith.maximumf %147, %148 : vector<128x32xf32>
    %c384 = arith.constant 384 : index
    %c0_48 = arith.constant 0 : index
    %150 = vector.load %arg2[%c384, %c0_48] : memref<400x128xf32, #tpu.memory_space<vmem>>, vector<16x128xf32>
    %cst_49 = arith.constant 0.000000e+00 : f32
    %151 = vector.broadcast %cst_49 : f32 to vector<16x128xf32>
    %c0_50 = arith.constant 0 : index
    %c0_51 = arith.constant 0 : index
    %152 = vector.load %arg5[%c0_50, %c0_51] : memref<128x32xf32, #tpu.memory_space<vmem>>, vector<128x32xf32>
    tpu.vector_store %arg5[%c0_50, %c0_51], %18 {strides = array<i32>} : memref<128x32xf32, #tpu.memory_space<vmem>>, vector<128x32xf32>,
    %c0_52 = arith.constant 0 : index
    %c0_53 = arith.constant 0 : index
    %153 = tpu.strided_load %arg5[%c0_52, %c0_53] {strides = array<i32: 8, 1>} : memref<128x32xf32, #tpu.memory_space<vmem>>, vector<16x32xf32>
    %c1 = arith.constant 1 : index
    %c0_54 = arith.constant 0 : index
    %154 = tpu.strided_load %arg5[%c1, %c0_54] {strides = array<i32: 8, 1>} : memref<128x32xf32, #tpu.memory_space<vmem>>, vector<16x32xf32>
    %155 = arith.maximumf %153, %154 : vector<16x32xf32>
    %c2 = arith.constant 2 : index
    %c0_55 = arith.constant 0 : index
    %156 = tpu.strided_load %arg5[%c2, %c0_55] {strides = array<i32: 8, 1>} : memref<128x32xf32, #tpu.memory_space<vmem>>, vector<16x32xf32>
    %157 = arith.maximumf %155, %156 : vector<16x32xf32>
    %c3 = arith.constant 3 : index
    %c0_56 = arith.constant 0 : index
    %158 = tpu.strided_load %arg5[%c3, %c0_56] {strides = array<i32: 8, 1>} : memref<128x32xf32, #tpu.memory_space<vmem>>, vector<16x32xf32>
    %159 = arith.maximumf %157, %158 : vector<16x32xf32>
    %c4 = arith.constant 4 : index
    %c0_57 = arith.constant 0 : index
    %160 = tpu.strided_load %arg5[%c4, %c0_57] {strides = array<i32: 8, 1>} : memref<128x32xf32, #tpu.memory_space<vmem>>, vector<16x32xf32>
    %161 = arith.maximumf %159, %160 : vector<16x32xf32>
    %c5 = arith.constant 5 : index
    %c0_58 = arith.constant 0 : index
    %162 = tpu.strided_load %arg5[%c5, %c0_58] {strides = array<i32: 8, 1>} : memref<128x32xf32, #tpu.memory_space<vmem>>, vector<16x32xf32>
    %163 = arith.maximumf %161, %162 : vector<16x32xf32>
    %c6 = arith.constant 6 : index
    %c0_59 = arith.constant 0 : index
    %164 = tpu.strided_load %arg5[%c6, %c0_59] {strides = array<i32: 8, 1>} : memref<128x32xf32, #tpu.memory_space<vmem>>, vector<16x32xf32>
    %165 = arith.maximumf %163, %164 : vector<16x32xf32>
    %c7 = arith.constant 7 : index
    %c0_60 = arith.constant 0 : index
    %166 = tpu.strided_load %arg5[%c7, %c0_60] {strides = array<i32: 8, 1>} : memref<128x32xf32, #tpu.memory_space<vmem>>, vector<16x32xf32>
    %167 = arith.maximumf %165, %166 : vector<16x32xf32>
    %cst_61 = arith.constant dense<0.000000e+00> : vector<16x32xf32>
    %168 = tpu.matmul %150, %18, %cst_61 {dimension_numbers = #tpu.dot_dimension_numbers<[1], [0], [0], [1], [0, 0, 1, 1], [], []>} : vector<16x128xf32>, vector<128x32xf32>, vector<16x32xf32> -> vector<16x32xf32>
    %169 = arith.addf %168, %167 : vector<16x32xf32>
    %c144 = arith.constant 144 : index
    %c0_62 = arith.constant 0 : index
    %170 = vector.load %arg3[%c144, %c0_62] : memref<256x128xf32, #tpu.memory_space<vmem>>, vector<32x128xf32>
    %cst_63 = arith.constant dense<0.000000e+00> : vector<16x128xf32>
    %171 = tpu.matmul %169, %170, %cst_63 {dimension_numbers = #tpu.dot_dimension_numbers<[1], [0], [0], [1], [0, 0, 1, 1], [], []>} : vector<16x32xf32>, vector<32x128xf32>, vector<16x128xf32> -> vector<16x128xf32>
    %172 = arith.addf %151, %171 : vector<16x128xf32>
    %c0_64 = arith.constant 0 : index
    %c0_65 = arith.constant 0 : index
    %173 = vector.load %arg5[%c0_64, %c0_65] : memref<128x32xf32, #tpu.memory_space<vmem>>, vector<128x32xf32>
    tpu.vector_store %arg5[%c0_64, %c0_65], %129 {strides = array<i32>} : memref<128x32xf32, #tpu.memory_space<vmem>>, vector<128x32xf32>,
    %c0_66 = arith.constant 0 : index
    %c0_67 = arith.constant 0 : index
    %174 = tpu.strided_load %arg5[%c0_66, %c0_67] {strides = array<i32: 8, 1>} : memref<128x32xf32, #tpu.memory_space<vmem>>, vector<16x32xf32>
    %c1_68 = arith.constant 1 : index
    %c0_69 = arith.constant 0 : index
    %175 = tpu.strided_load %arg5[%c1_68, %c0_69] {strides = array<i32: 8, 1>} : memref<128x32xf32, #tpu.memory_space<vmem>>, vector<16x32xf32>
    %176 = arith.maximumf %174, %175 : vector<16x32xf32>
    %c2_70 = arith.constant 2 : index
    %c0_71 = arith.constant 0 : index
    %177 = tpu.strided_load %arg5[%c2_70, %c0_71] {strides = array<i32: 8, 1>} : memref<128x32xf32, #tpu.memory_space<vmem>>, vector<16x32xf32>
    %178 = arith.maximumf %176, %177 : vector<16x32xf32>
    %c3_72 = arith.constant 3 : index
    %c0_73 = arith.constant 0 : index
    %179 = tpu.strided_load %arg5[%c3_72, %c0_73] {strides = array<i32: 8, 1>} : memref<128x32xf32, #tpu.memory_space<vmem>>, vector<16x32xf32>
    %180 = arith.maximumf %178, %179 : vector<16x32xf32>
    %c4_74 = arith.constant 4 : index
    %c0_75 = arith.constant 0 : index
    %181 = tpu.strided_load %arg5[%c4_74, %c0_75] {strides = array<i32: 8, 1>} : memref<128x32xf32, #tpu.memory_space<vmem>>, vector<16x32xf32>
    %182 = arith.maximumf %180, %181 : vector<16x32xf32>
    %c5_76 = arith.constant 5 : index
    %c0_77 = arith.constant 0 : index
    %183 = tpu.strided_load %arg5[%c5_76, %c0_77] {strides = array<i32: 8, 1>} : memref<128x32xf32, #tpu.memory_space<vmem>>, vector<16x32xf32>
    %184 = arith.maximumf %182, %183 : vector<16x32xf32>
    %c6_78 = arith.constant 6 : index
    %c0_79 = arith.constant 0 : index
    %185 = tpu.strided_load %arg5[%c6_78, %c0_79] {strides = array<i32: 8, 1>} : memref<128x32xf32, #tpu.memory_space<vmem>>, vector<16x32xf32>
    %186 = arith.maximumf %184, %185 : vector<16x32xf32>
    %c7_80 = arith.constant 7 : index
    %c0_81 = arith.constant 0 : index
    %187 = tpu.strided_load %arg5[%c7_80, %c0_81] {strides = array<i32: 8, 1>} : memref<128x32xf32, #tpu.memory_space<vmem>>, vector<16x32xf32>
    %188 = arith.maximumf %186, %187 : vector<16x32xf32>
    %cst_82 = arith.constant dense<0.000000e+00> : vector<16x32xf32>
    %189 = tpu.matmul %150, %129, %cst_82 {dimension_numbers = #tpu.dot_dimension_numbers<[1], [0], [0], [1], [0, 0, 1, 1], [], []>} : vector<16x128xf32>, vector<128x32xf32>, vector<16x32xf32> -> vector<16x32xf32>
    %190 = arith.addf %189, %188 : vector<16x32xf32>
    %c176 = arith.constant 176 : index
    %c0_83 = arith.constant 0 : index
    %191 = vector.load %arg3[%c176, %c0_83] : memref<256x128xf32, #tpu.memory_space<vmem>>, vector<32x128xf32>
    %cst_84 = arith.constant dense<0.000000e+00> : vector<16x128xf32>
    %192 = tpu.matmul %190, %191, %cst_84 {dimension_numbers = #tpu.dot_dimension_numbers<[1], [0], [0], [1], [0, 0, 1, 1], [], []>} : vector<16x32xf32>, vector<32x128xf32>, vector<16x128xf32> -> vector<16x128xf32>
    %193 = arith.addf %172, %192 : vector<16x128xf32>
    %c0_85 = arith.constant 0 : index
    %c0_86 = arith.constant 0 : index
    %194 = vector.load %arg5[%c0_85, %c0_86] : memref<128x32xf32, #tpu.memory_space<vmem>>, vector<128x32xf32>
    tpu.vector_store %arg5[%c0_85, %c0_86], %149 {strides = array<i32>} : memref<128x32xf32, #tpu.memory_space<vmem>>, vector<128x32xf32>,
    %c0_87 = arith.constant 0 : index
    %c0_88 = arith.constant 0 : index
    %195 = tpu.strided_load %arg5[%c0_87, %c0_88] {strides = array<i32: 8, 1>} : memref<128x32xf32, #tpu.memory_space<vmem>>, vector<16x32xf32>
    %c1_89 = arith.constant 1 : index
    %c0_90 = arith.constant 0 : index
    %196 = tpu.strided_load %arg5[%c1_89, %c0_90] {strides = array<i32: 8, 1>} : memref<128x32xf32, #tpu.memory_space<vmem>>, vector<16x32xf32>
    %197 = arith.maximumf %195, %196 : vector<16x32xf32>
    %c2_91 = arith.constant 2 : index
    %c0_92 = arith.constant 0 : index
    %198 = tpu.strided_load %arg5[%c2_91, %c0_92] {strides = array<i32: 8, 1>} : memref<128x32xf32, #tpu.memory_space<vmem>>, vector<16x32xf32>
    %199 = arith.maximumf %197, %198 : vector<16x32xf32>
    %c3_93 = arith.constant 3 : index
    %c0_94 = arith.constant 0 : index
    %200 = tpu.strided_load %arg5[%c3_93, %c0_94] {strides = array<i32: 8, 1>} : memref<128x32xf32, #tpu.memory_space<vmem>>, vector<16x32xf32>
    %201 = arith.maximumf %199, %200 : vector<16x32xf32>
    %c4_95 = arith.constant 4 : index
    %c0_96 = arith.constant 0 : index
    %202 = tpu.strided_load %arg5[%c4_95, %c0_96] {strides = array<i32: 8, 1>} : memref<128x32xf32, #tpu.memory_space<vmem>>, vector<16x32xf32>
    %203 = arith.maximumf %201, %202 : vector<16x32xf32>
    %c5_97 = arith.constant 5 : index
    %c0_98 = arith.constant 0 : index
    %204 = tpu.strided_load %arg5[%c5_97, %c0_98] {strides = array<i32: 8, 1>} : memref<128x32xf32, #tpu.memory_space<vmem>>, vector<16x32xf32>
    %205 = arith.maximumf %203, %204 : vector<16x32xf32>
    %c6_99 = arith.constant 6 : index
    %c0_100 = arith.constant 0 : index
    %206 = tpu.strided_load %arg5[%c6_99, %c0_100] {strides = array<i32: 8, 1>} : memref<128x32xf32, #tpu.memory_space<vmem>>, vector<16x32xf32>
    %207 = arith.maximumf %205, %206 : vector<16x32xf32>
    %c7_101 = arith.constant 7 : index
    %c0_102 = arith.constant 0 : index
    %208 = tpu.strided_load %arg5[%c7_101, %c0_102] {strides = array<i32: 8, 1>} : memref<128x32xf32, #tpu.memory_space<vmem>>, vector<16x32xf32>
    %209 = arith.maximumf %207, %208 : vector<16x32xf32>
    %cst_103 = arith.constant dense<0.000000e+00> : vector<16x32xf32>
    %210 = tpu.matmul %150, %149, %cst_103 {dimension_numbers = #tpu.dot_dimension_numbers<[1], [0], [0], [1], [0, 0, 1, 1], [], []>} : vector<16x128xf32>, vector<128x32xf32>, vector<16x32xf32> -> vector<16x32xf32>
    %211 = arith.addf %210, %209 : vector<16x32xf32>
    %c208 = arith.constant 208 : index
    %c0_104 = arith.constant 0 : index
    %212 = vector.load %arg3[%c208, %c0_104] : memref<256x128xf32, #tpu.memory_space<vmem>>, vector<32x128xf32>
    %cst_105 = arith.constant dense<0.000000e+00> : vector<16x128xf32>
    %213 = tpu.matmul %211, %212, %cst_105 {dimension_numbers = #tpu.dot_dimension_numbers<[1], [0], [0], [1], [0, 0, 1, 1], [], []>} : vector<16x32xf32>, vector<32x128xf32>, vector<16x128xf32> -> vector<16x128xf32>
    %214 = arith.addf %193, %213 : vector<16x128xf32>
    %c248 = arith.constant 248 : index
    %c0_106 = arith.constant 0 : index
    %215 = vector.load %arg3[%c248, %c0_106] : memref<256x128xf32, #tpu.memory_space<vmem>>, vector<1x128xf32>
    %216 = vector.broadcast %215 : vector<1x128xf32> to vector<16x128xf32>
    %217 = arith.addf %214, %216 : vector<16x128xf32>
    %c0_107 = arith.constant 0 : index
    %c0_108 = arith.constant 0 : index
    %218 = vector.load %arg4[%c0_107, %c0_108] : memref<16x128xf32, #tpu.memory_space<vmem>>, vector<16x128xf32>
    tpu.vector_store %arg4[%c0_107, %c0_108], %217 {strides = array<i32>} : memref<16x128xf32, #tpu.memory_space<vmem>>, vector<16x128xf32>,
    return
  }
  func.func @transform_0(%arg0: i32) -> (i32, i32) {
    %c0_i32 = arith.constant 0 : i32
    %c0_i32_0 = arith.constant 0 : i32
    return %arg0, %c0_i32 : i32, i32
  }
  func.func @transform_1(%arg0: i32) -> (i32, i32) {
    %c0_i32 = arith.constant 0 : i32
    %c0_i32_0 = arith.constant 0 : i32
    return %arg0, %c0_i32 : i32, i32
  }
  func.func @transform_2(%arg0: i32) -> (i32, i32) {
    %c0_i32 = arith.constant 0 : i32
    %c0_i32_0 = arith.constant 0 : i32
    %c0_i32_1 = arith.constant 0 : i32
    return %c0_i32, %c0_i32_0 : i32, i32
  }
  func.func @transform_3(%arg0: i32) -> (i32, i32) {
    %c0_i32 = arith.constant 0 : i32
    %c0_i32_0 = arith.constant 0 : i32
    return %arg0, %c0_i32 : i32, i32
  }
}

</mosaic_0001>

<llo_original>
// kernel: tpu_custom_call.1
$region0: #{tpu_custom_call.1}
  #allocation0 [shape = 'u32[]', space=smem, size = 0x4, offset = 0x4, fixed_abs, tag = 'smem constant byte address 0x4 - core index']
  #allocation1 [shape = 'u32[144,128]{1,0:T(1,128)}', space=vmem, size = 0x12000, scoped, tag = 'internal scratch']
  #allocation2 [shape = 'f32[128,32]{1,0:T(8,128)}', space=vmem, size = 0x10000, scoped, tag = 'scratch operand']
  %s0 = inlined_call_operand.vmem [shape: f32[256,2], index: 0, kind: input, shape index: {}]
  %s1 = inlined_call_operand.hbm [shape: f32[800,128], index: 1, kind: input, shape index: {}]
  %s2 = inlined_call_operand.vmem [shape: f32[256,128], index: 2, kind: input, shape index: {}]
  %s3 = inlined_call_operand.hbm [shape: f32[32,128], index: 3, kind: output, shape index: {}]
  %s4 = sld [smem:[#allocation0]]
  $region49: #{tpu_custom_call.1} parent=0
    _
  %s6 = ssub.s32 1, %s4
  %s7 = scalar_select 0, %s6, %s4
  $region1: #{tpu_custom_call.1} parent=0
    #allocation3 [shape = 'u8[409600]{0}', space=vmem, size = 0x64000, scoped, tag = 'input window, operand 1']
    #allocation4 [shape = 's32[2]{0}', space=sflag, size = 0x8, scoped, tag = 'scoped memory for tpu_custom_call.1']
    #allocation5 [shape = 's32[2]{0}', space=sflag, size = 0x8, scoped, tag = 'scoped memory for tpu_custom_call.1']
    #allocation6 [shape = 'u8[16384]{0}', space=vmem, size = 0x4000, scoped, tag = 'output window, operand 0']
    %8 = vsyncpa [#allocation4], 0
    %s9 = scalar_lea.sflag [#allocation4], 1
    %10 = vsyncpa %s9, 0
    %11 = vsyncpa [#allocation5], 0
    %s12 = scalar_lea.sflag [#allocation5], 1
    %13 = vsyncpa %s12, 0
    loop: start=0, step=1, limit=4
    $region2: #{tpu_custom_call.1} parent=1 // loop_pre_header
      _
    $region3: #{tpu_custom_call.1} parent=1 // loop_header
      %s15 = sphi 0, %s19
      %p16 = scmp.ge.s32.totalorder %s15, 4
      %s25 = sphi 0, %s27
      %s28 = sphi 0, %s25
      %s29 = sphi 0, %s28
      %s45 = sphi 0, %s29
      %s51 = sphi 0, %s53
      %s54 = sphi 0, %s51
      %s55 = sphi 0, %s54
      %s71 = sphi 0, %s55
      %s75 = sphi 0, %s75
      %s77 = sphi 0, %s75
      %s78 = sphi 0, %s77
      %s92 = sphi 0, %s78
      %s98 = sphi 0, %s100
      %s101 = sphi 0, %s98
      %s102 = sphi 0, %s101
      %s118 = sphi 0, %s102
    $region4: #{tpu_custom_call.1} parent=1 // loop_header_branch
      %18 = sbr.rel (%p16) target = $region8
    $region5: #{tpu_custom_call.1} parent=1 // loop_body
      %s20 = ssub.s32 %s15, 1
      %s21 = ssub.s32 %s15, 2
      %s22 = sadd.s32 %s15, 1
      %s23 = ssub.s32 %s15, %s22
      %p24 = scmp.eq.s32.totalorder %s23, 0
      %s26 = sadd.s32 %s25, 1
      %s27 = scalar_select %p24, %s25, %s26
      %p30 = pneg %p24
      %p31 = scmp.eq.s32.totalorder %s15, 1
      %p32 = por %p30, %p31
      %p33 = scmp.ne.s32.totalorder %s25, %s28
      %p34 = scmp.eq.s32.totalorder %s15, 0
      %p35 = por %p33, %p34
      %p36 = scmp.ne.s32.totalorder %s25, %s28
      %p37 = scmp.eq.s32.totalorder %s20, 1
      %p38 = por %p36, %p37
      %p39 = scmp.ne.s32.totalorder %s28, %s29
      %p40 = scmp.eq.s32.totalorder %s20, 0
      %p41 = por %p39, %p40
      %p42 = scmp.ne.s32.totalorder %s28, %s29
      %p43 = scmp.eq.s32.totalorder %s21, 1
      %p44 = por %p42, %p43
      %p46 = scmp.ne.s32.totalorder %s29, %s45
      %p47 = scmp.eq.s32.totalorder %s21, 0
      %p48 = por %p46, %p47
      %s49 = ssub.s32 %s15, %s22
      %p50 = scmp.eq.s32.totalorder %s49, 0
      %s52 = sadd.s32 %s51, 1
      %s53 = scalar_select %p50, %s51, %s52
      %p56 = pneg %p50
      %p57 = scmp.eq.s32.totalorder %s15, 1
      %p58 = por %p56, %p57
      %p59 = scmp.ne.s32.totalorder %s51, %s54
      %p60 = scmp.eq.s32.totalorder %s15, 0
      %p61 = por %p59, %p60
      %p62 = scmp.ne.s32.totalorder %s51, %s54
      %p63 = scmp.eq.s32.totalorder %s20, 1
      %p64 = por %p62, %p63
      %p65 = scmp.ne.s32.totalorder %s54, %s55
      %p66 = scmp.eq.s32.totalorder %s20, 0
      %p67 = por %p65, %p66
      %p68 = scmp.ne.s32.totalorder %s54, %s55
      %p69 = scmp.eq.s32.totalorder %s21, 1
      %p70 = por %p68, %p69
      %p72 = scmp.ne.s32.totalorder %s55, %s71
      %p73 = scmp.eq.s32.totalorder %s21, 0
      %p74 = por %p72, %p73
      %s76 = sadd.s32 %s75, 1
      %p79 = scmp.eq.s32.totalorder %s15, 1
      %p80 = scmp.ne.s32.totalorder %s75, %s77
      %p81 = scmp.eq.s32.totalorder %s15, 0
      %p82 = por %p80, %p81
      %p83 = scmp.ne.s32.totalorder %s75, %s77
      %p84 = scmp.eq.s32.totalorder %s20, 1
      %p85 = por %p83, %p84
      %p86 = scmp.ne.s32.totalorder %s77, %s78
      %p87 = scmp.eq.s32.totalorder %s20, 0
      %p88 = por %p86, %p87
      %p89 = scmp.ne.s32.totalorder %s77, %s78
      %p90 = scmp.eq.s32.totalorder %s21, 1
      %p91 = por %p89, %p90
      %p93 = scmp.ne.s32.totalorder %s78, %s92
      %p94 = scmp.eq.s32.totalorder %s21, 0
      %p95 = por %p93, %p94
      %s96 = ssub.s32 %s15, %s22
      %p97 = scmp.eq.s32.totalorder %s96, 0
      %s99 = sadd.s32 %s98, 1
      %s100 = scalar_select %p97, %s98, %s99
      %p103 = pneg %p97
      %p104 = scmp.eq.s32.totalorder %s15, 1
      %p105 = por %p103, %p104
      %p106 = scmp.ne.s32.totalorder %s98, %s101
      %p107 = scmp.eq.s32.totalorder %s15, 0
      %p108 = por %p106, %p107
      %p109 = scmp.ne.s32.totalorder %s98, %s101
      %p110 = scmp.eq.s32.totalorder %s20, 1
      %p111 = por %p109, %p110
      %p112 = scmp.ne.s32.totalorder %s101, %s102
      %p113 = scmp.eq.s32.totalorder %s20, 0
      %p114 = por %p112, %p113
      %p115 = scmp.ne.s32.totalorder %s101, %s102
      %p116 = scmp.eq.s32.totalorder %s21, 1
      %p117 = por %p115, %p116
      %p119 = scmp.ne.s32.totalorder %s102, %s118
      %p120 = scmp.eq.s32.totalorder %s21, 0
      %p121 = por %p119, %p120
      %p122 = scmp.le.s32.totalorder 1, %s15
      %p123 = scmp.lt.s32.totalorder %s15, 3
      %p124 = pnand %p122, %p123
      %p125 = pneg %p124
      // Predicated region
      $region9: #{tpu_custom_call.1} parent=5 // pred_check
        _
      $region10: #{tpu_custom_call.1} parent=5 // pred_check_branch
        %127 = sbr.rel (%p124) target = $region12
      $region11: #{tpu_custom_call.1} parent=5 // pred_region
        %s128 = ssub.s32 %s15, 1
        // Predicated region
        $region13: #{tpu_custom_call.1} parent=11 // pred_check
          %p129 = pneg %p88
        $region14: #{tpu_custom_call.1} parent=11 // pred_check_branch
          %131 = sbr.rel (%p129) target = $region16
        $region15: #{tpu_custom_call.1} parent=11 // pred_region
          _
        $region16: #{tpu_custom_call.1} parent=11 // pred_fallthru
          _
      $region12: #{tpu_custom_call.1} parent=5 // pred_fallthru
        _
      %p132 = scmp.lt.s32.totalorder %s15, 2
      // Predicated region
      $region17: #{tpu_custom_call.1} parent=5 // pred_check
        %p133 = pneg %p132
      $region18: #{tpu_custom_call.1} parent=5 // pred_check_branch
        %135 = sbr.rel (%p133) target = $region20
      $region19: #{tpu_custom_call.1} parent=5 // pred_region
        // Predicated region
        $region21: #{tpu_custom_call.1} parent=19 // pred_check
          %p136 = pneg %p35
        $region22: #{tpu_custom_call.1} parent=19 // pred_check_branch
          %138 = sbr.rel (%p136) target = $region24
        $region23: #{tpu_custom_call.1} parent=19 // pred_region
          %s139 = smul.u32 16, %s15
          %p140 = scmp.lt.s32.totalorder %s139, 31
          %s141 = scalar_select %p140, %s139, 31
          %s142 = smul.addr %s141, 8
          %s143 = scalar_lea.vmem %s0, %s142
          %s144 = smul.u32 16, %s15
        $region24: #{tpu_custom_call.1} parent=19 // pred_fallthru
          _
        // Predicated region
        $region25: #{tpu_custom_call.1} parent=19 // pred_check
          %p145 = pneg %p61
        $region26: #{tpu_custom_call.1} parent=19 // pred_check_branch
          %147 = sbr.rel (%p145) target = $region28
        $region27: #{tpu_custom_call.1} parent=19 // pred_region
          %s148 = sand.u32 %s51, 1
          %s149 = scalar_lea.sflag [#allocation4], %s148
          %s150 = sand.u32 %s51, 1
          %s151 = smul.addr %s150, 400
          %s152 = scalar_lea.vmem [#allocation3], %s151
          %s153 = smul.u32 50, %s15
          %s155 = ssub.s32 6400, 6400
          %156 = vsyncadd %s149, %s155
          %s157 = smul.addr %s153, 128
          %s158 = scalar_lea.hbm %s1, %s157
          %s159 = sshll.u32 %s152, 4
          %s160 = int_to_ptr.vmem [resolvable:$true] %s159
          %165 = dma.hbm_to_vmem [thread:$0]  %s158, 6400, %s160, %s149, 128, 128, 8
        $region28: #{tpu_custom_call.1} parent=19 // pred_fallthru
          _
      $region20: #{tpu_custom_call.1} parent=5 // pred_fallthru
        _
      %p166 = scmp.le.s32.totalorder 1, %s15
      %p167 = scmp.lt.s32.totalorder %s15, 3
      %p168 = pnand %p166, %p167
      %p169 = pneg %p168
      // Predicated region
      $region29: #{tpu_custom_call.1} parent=5 // pred_check
        _
      $region30: #{tpu_custom_call.1} parent=5 // pred_check_branch
        %171 = sbr.rel (%p168) target = $region32
      $region31: #{tpu_custom_call.1} parent=5 // pred_region
        %s172 = ssub.s32 %s15, 1
        %s173 = sand.u32 %s54, 1
        %s174 = scalar_lea.sflag [#allocation4], %s173
        %s175 = sand.u32 %s54, 1
        %s176 = smul.addr %s175, 400
        %s177 = scalar_lea.vmem [#allocation3], %s176
        // Predicated region
        $region33: #{tpu_custom_call.1} parent=31 // pred_check
          %p178 = pneg %p67
        $region34: #{tpu_custom_call.1} parent=31 // pred_check_branch
          %180 = sbr.rel (%p178) target = $region36
        $region35: #{tpu_custom_call.1} parent=31 // pred_region
          %181 = dma.done %s174, 6400
        $region36: #{tpu_custom_call.1} parent=31 // pred_fallthru
          _
        %s182 = smul.u32 16, %s20
        %p183 = scmp.lt.s32.totalorder %s182, 31
        %s184 = scalar_select %p183, %s182, 31
        %s185 = smul.addr %s184, 8
        %s186 = scalar_lea.vmem %s0, %s185
        %p187 = pneg %p41
        %p188 = pneg %p38
        %s189 = sand.u32 %s54, 1
        %s190 = scalar_lea.sflag [#allocation4], %s189
        %s191 = sand.u32 %s54, 1
        %s192 = smul.addr %s191, 400
        %s193 = scalar_lea.vmem [#allocation3], %s192
        %p194 = pneg %p67
        %p195 = pneg %p64
        %p196 = pneg %p88
        %p197 = pneg %p85
        %p198 = pneg %p114
        %p199 = pneg %p111
        %s200 = sand.u32 %s101, 1
        %s201 = scalar_lea.sflag [#allocation5], %s200
        %s202 = sand.u32 %s101, 1
        %s203 = smul.addr %s202, 16
        %s204 = scalar_lea.vmem [#allocation6], %s203
        %s205 = smul.u32 16, %s20
        %p206 = scmp.lt.s32.totalorder %s205, 31
        %s207 = scalar_select %p206, %s205, 31
        %s208 = smul.addr %s207, 8
        %s209 = scalar_lea.vmem %s0, %s208
        %s210 = smul.u32 16, %s20
        %s211 = smul.u32 50, %s20
        %s212 = smul.u32 2, %s20
        %v213 = vld [vmem:[%s209] sm:$0xff]
        %v214 = vld [vmem:[%s209 + $0x8] sm:$0xff]
        %v215 = vld [vmem:[%s209 + $0x10] sm:$0xff]
        %v216 = vld [vmem:[%s209 + $0x18] sm:$0xff]
        %v217 = vld [vmem:[%s209 + $0x20] sm:$0xff]
        %v218 = vld [vmem:[%s209 + $0x28] sm:$0xff]
        %v219 = vld [vmem:[%s209 + $0x30] sm:$0xff]
        %v220 = vld [vmem:[%s209 + $0x38] sm:$0xff]
        %v221 = vld [vmem:[%s209 + $0x40] sm:$0xff]
        %v222 = vld [vmem:[%s209 + $0x48] sm:$0xff]
        %v223 = vld [vmem:[%s209 + $0x50] sm:$0xff]
        %v224 = vld [vmem:[%s209 + $0x58] sm:$0xff]
        %v225 = vld [vmem:[%s209 + $0x60] sm:$0xff]
        %v226 = vld [vmem:[%s209 + $0x68] sm:$0xff]
        %v227 = vld [vmem:[%s209 + $0x70] sm:$0xff]
        %v228 = vld [vmem:[%s209 + $0x78] sm:$0xff]
        %v229 = vld [vmem:[%s2 + $0xf0] sm:$0x1]
        %231 = vset.pattern.permute.xlu0 0
        %232 = vperm.xlu0 %231, %v213
        %v233 = vpop.permute.xlu0 %232
        %236 = vset.pattern.permute.xlu0 0
        %237 = vperm.xlu0 %236, %v214
        %v238 = vpop.permute.xlu0 %237
        %241 = vset.pattern.permute.xlu0 0
        %242 = vperm.xlu0 %241, %v215
        %v243 = vpop.permute.xlu0 %242
        %246 = vset.pattern.permute.xlu0 0
        %247 = vperm.xlu0 %246, %v216
        %v248 = vpop.permute.xlu0 %247
        %251 = vset.pattern.permute.xlu0 0
        %252 = vperm.xlu0 %251, %v217
        %v253 = vpop.permute.xlu0 %252
        %256 = vset.pattern.permute.xlu0 0
        %257 = vperm.xlu0 %256, %v218
        %v258 = vpop.permute.xlu0 %257
        %261 = vset.pattern.permute.xlu0 0
        %262 = vperm.xlu0 %261, %v219
        %v263 = vpop.permute.xlu0 %262
        %266 = vset.pattern.permute.xlu0 0
        %267 = vperm.xlu0 %266, %v220
        %v268 = vpop.permute.xlu0 %267
        %271 = vset.pattern.permute.xlu0 0
        %272 = vperm.xlu0 %271, %v221
        %v273 = vpop.permute.xlu0 %272
        %276 = vset.pattern.permute.xlu0 0
        %277 = vperm.xlu0 %276, %v222
        %v278 = vpop.permute.xlu0 %277
        %281 = vset.pattern.permute.xlu0 0
        %282 = vperm.xlu0 %281, %v223
        %v283 = vpop.permute.xlu0 %282
        %286 = vset.pattern.permute.xlu0 0
        %287 = vperm.xlu0 %286, %v224
        %v288 = vpop.permute.xlu0 %287
        %291 = vset.pattern.permute.xlu0 0
        %292 = vperm.xlu0 %291, %v225
        %v293 = vpop.permute.xlu0 %292
        %296 = vset.pattern.permute.xlu0 0
        %297 = vperm.xlu0 %296, %v226
        %v298 = vpop.permute.xlu0 %297
        %301 = vset.pattern.permute.xlu0 0
        %302 = vperm.xlu0 %301, %v227
        %v303 = vpop.permute.xlu0 %302
        %306 = vset.pattern.permute.xlu0 0
        %307 = vperm.xlu0 %306, %v228
        %v308 = vpop.permute.xlu0 %307
        %v310 = vlaneseq
        %v311 = vshrl.u32 %v310, 7
        %v312 = vsub.s32 0, %v311
        %v313 = vrot.slane %v229, %v312
        %v314 = vmul.f32 %v233, %v313
        %v315 = vmul.f32 %v238, %v313
        %v316 = vmul.f32 %v243, %v313
        %v317 = vmul.f32 %v248, %v313
        %v318 = vmul.f32 %v253, %v313
        %v319 = vmul.f32 %v258, %v313
        %v320 = vmul.f32 %v263, %v313
        %v321 = vmul.f32 %v268, %v313
        %v322 = vmul.f32 %v273, %v313
        %v323 = vmul.f32 %v278, %v313
        %v324 = vmul.f32 %v283, %v313
        %v325 = vmul.f32 %v288, %v313
        %v326 = vmul.f32 %v293, %v313
        %v327 = vmul.f32 %v298, %v313
        %v328 = vmul.f32 %v303, %v313
        %v329 = vmul.f32 %v308, %v313
        %v330 = vld [vmem:[%s2 + $0xf1] sm:$0x1]
        %331 = vset.pattern.permute.xlu0 1
        %332 = vperm.xlu0 %331, %v213
        %v333 = vpop.permute.xlu0 %332
        %335 = vset.pattern.permute.xlu0 1
        %336 = vperm.xlu0 %335, %v214
        %v337 = vpop.permute.xlu0 %336
        %339 = vset.pattern.permute.xlu0 1
        %340 = vperm.xlu0 %339, %v215
        %v341 = vpop.permute.xlu0 %340
        %343 = vset.pattern.permute.xlu0 1
        %344 = vperm.xlu0 %343, %v216
        %v345 = vpop.permute.xlu0 %344
        %347 = vset.pattern.permute.xlu0 1
        %348 = vperm.xlu0 %347, %v217
        %v349 = vpop.permute.xlu0 %348
        %351 = vset.pattern.permute.xlu0 1
        %352 = vperm.xlu0 %351, %v218
        %v353 = vpop.permute.xlu0 %352
        %355 = vset.pattern.permute.xlu0 1
        %356 = vperm.xlu0 %355, %v219
        %v357 = vpop.permute.xlu0 %356
        %359 = vset.pattern.permute.xlu0 1
        %360 = vperm.xlu0 %359, %v220
        %v361 = vpop.permute.xlu0 %360
        %363 = vset.pattern.permute.xlu0 1
        %364 = vperm.xlu0 %363, %v221
        %v365 = vpop.permute.xlu0 %364
        %367 = vset.pattern.permute.xlu0 1
        %368 = vperm.xlu0 %367, %v222
        %v369 = vpop.permute.xlu0 %368
        %371 = vset.pattern.permute.xlu0 1
        %372 = vperm.xlu0 %371, %v223
        %v373 = vpop.permute.xlu0 %372
        %375 = vset.pattern.permute.xlu0 1
        %376 = vperm.xlu0 %375, %v224
        %v377 = vpop.permute.xlu0 %376
        %379 = vset.pattern.permute.xlu0 1
        %380 = vperm.xlu0 %379, %v225
        %v381 = vpop.permute.xlu0 %380
        %383 = vset.pattern.permute.xlu0 1
        %384 = vperm.xlu0 %383, %v226
        %v385 = vpop.permute.xlu0 %384
        %387 = vset.pattern.permute.xlu0 1
        %388 = vperm.xlu0 %387, %v227
        %v389 = vpop.permute.xlu0 %388
        %391 = vset.pattern.permute.xlu0 1
        %392 = vperm.xlu0 %391, %v228
        %v393 = vpop.permute.xlu0 %392
        %v395 = vlaneseq
        %v396 = vshrl.u32 %v395, 7
        %v397 = vsub.s32 0, %v396
        %v398 = vrot.slane %v330, %v397
        %v399 = vmul.f32 %v333, %v398
        %v400 = vmul.f32 %v337, %v398
        %v401 = vmul.f32 %v341, %v398
        %v402 = vmul.f32 %v345, %v398
        %v403 = vmul.f32 %v349, %v398
        %v404 = vmul.f32 %v353, %v398
        %v405 = vmul.f32 %v357, %v398
        %v406 = vmul.f32 %v361, %v398
        %v407 = vmul.f32 %v365, %v398
        %v408 = vmul.f32 %v369, %v398
        %v409 = vmul.f32 %v373, %v398
        %v410 = vmul.f32 %v377, %v398
        %v411 = vmul.f32 %v381, %v398
        %v412 = vmul.f32 %v385, %v398
        %v413 = vmul.f32 %v389, %v398
        %v414 = vmul.f32 %v393, %v398
        %v415 = vadd.f32 %v314, %v399
        %v416 = vadd.f32 %v315, %v400
        %v417 = vadd.f32 %v316, %v401
        %v418 = vadd.f32 %v317, %v402
        %v419 = vadd.f32 %v318, %v403
        %v420 = vadd.f32 %v319, %v404
        %v421 = vadd.f32 %v320, %v405
        %v422 = vadd.f32 %v321, %v406
        %v423 = vadd.f32 %v322, %v407
        %v424 = vadd.f32 %v323, %v408
        %v425 = vadd.f32 %v324, %v409
        %v426 = vadd.f32 %v325, %v410
        %v427 = vadd.f32 %v326, %v411
        %v428 = vadd.f32 %v327, %v412
        %v429 = vadd.f32 %v328, %v413
        %v430 = vadd.f32 %v329, %v414
        %v431 = vld [vmem:[%s177] sm:$0xff]
        %v432 = vld [vmem:[%s177 + $0x8] sm:$0xff]
        %v433 = vld [vmem:[%s177 + $0x10] sm:$0xff]
        %v434 = vld [vmem:[%s177 + $0x18] sm:$0xff]
        %v435 = vld [vmem:[%s177 + $0x20] sm:$0xff]
        %v436 = vld [vmem:[%s177 + $0x28] sm:$0xff]
        %v437 = vld [vmem:[%s177 + $0x30] sm:$0xff]
        %v438 = vld [vmem:[%s177 + $0x38] sm:$0xff]
        %v439 = vld [vmem:[%s177 + $0x40] sm:$0xff]
        %v440 = vld [vmem:[%s177 + $0x48] sm:$0xff]
        %v441 = vld [vmem:[%s177 + $0x50] sm:$0xff]
        %v442 = vld [vmem:[%s177 + $0x58] sm:$0xff]
        %v443 = vld [vmem:[%s177 + $0x60] sm:$0xff]
        %v444 = vld [vmem:[%s177 + $0x68] sm:$0xff]
        %v445 = vld [vmem:[%s177 + $0x70] sm:$0xff]
        %v446 = vld [vmem:[%s177 + $0x78] sm:$0xff]
        %v447 = vld [vmem:[%s2 + $0xf2] sm:$0x1]
        %v448 = vlaneseq
        %v449 = vshrl.u32 %v448, 7
        %v450 = vsub.s32 0, %v449
        %v451 = vrot.slane %v447, %v450
        %452 = vmatprep.subr.mxu0 0.0
        %453 = vmatpush1.msra.mxu0 %v430
        %454 = vmatprep.subr.mxu0 0.0
        %455 = vmatpush1.msra.mxu0 %v429
        %456 = vmatprep.subr.mxu0 0.0
        %457 = vmatpush1.msra.mxu0 %v428
        %458 = vmatprep.subr.mxu0 0.0
        %459 = vmatpush1.msra.mxu0 %v427
        %460 = vmatprep.subr.mxu0 0.0
        %461 = vmatpush1.msra.mxu0 %v426
        %462 = vmatprep.subr.mxu0 0.0
        %463 = vmatpush1.msra.mxu0 %v425
        %464 = vmatprep.subr.mxu0 0.0
        %465 = vmatpush1.msra.mxu0 %v424
        %466 = vmatprep.subr.mxu0 0.0
        %467 = vmatpush1.msra.mxu0 %v423
        %468 = vmatprep.subr.mxu0 0.0
        %469 = vmatpush1.msra.mxu0 %v422
        %470 = vmatprep.subr.mxu0 0.0
        %471 = vmatpush1.msra.mxu0 %v421
        %472 = vmatprep.subr.mxu0 0.0
        %473 = vmatpush1.msra.mxu0 %v420
        %474 = vmatprep.subr.mxu0 0.0
        %475 = vmatpush1.msra.mxu0 %v419
        %476 = vmatprep.subr.mxu0 0.0
        %477 = vmatpush1.msra.mxu0 %v418
        %478 = vmatprep.subr.mxu0 0.0
        %479 = vmatpush1.msra.mxu0 %v417
        %480 = vmatprep.subr.mxu0 0.0
        %481 = vmatpush1.msra.mxu0 %v416
        %482 = vmatprep.subr.mxu0 0.0
        %483 = vmatpush1.msra.mxu0 %v415
        %484 = vmatprep.subr.mxu0 0.0
        %485 = vmatpush2.msra.mxu0 0.0
        %486 = vmatprep.subr.mxu0 0.0
        %487 = vmatpush2.msra.mxu0 0.0
        %488 = vmatprep.subr.mxu0 0.0
        %489 = vmatpush2.msra.mxu0 0.0
        %490 = vmatprep.subr.mxu0 0.0
        %491 = vmatpush2.msra.mxu0 0.0
        %492 = vmatprep.subr.mxu0 0.0
        %493 = vmatpush2.msra.mxu0 0.0
        %494 = vmatprep.subr.mxu0 0.0
        %495 = vmatpush2.msra.mxu0 0.0
        %496 = vmatprep.subr.mxu0 0.0
        %497 = vmatpush2.msra.mxu0 0.0
        %498 = vmatprep.subr.mxu0 0.0
        %499 = vmatpush2.msra.mxu0 0.0
        %500 = vmatprep.subr.mxu0 0.0
        %501 = vmatpush2.msra.mxu0 0.0
        %502 = vmatprep.subr.mxu0 0.0
        %503 = vmatpush2.msra.mxu0 0.0
        %504 = vmatprep.subr.mxu0 0.0
        %505 = vmatpush2.msra.mxu0 0.0
        %506 = vmatprep.subr.mxu0 0.0
        %507 = vmatpush2.msra.mxu0 0.0
        %508 = vmatprep.subr.mxu0 0.0
        %509 = vmatpush2.msra.mxu0 0.0
        %510 = vmatprep.subr.mxu0 0.0
        %511 = vmatpush2.msra.mxu0 0.0
        %512 = vmatprep.subr.mxu0 0.0
        %513 = vmatpush2.msra.mxu0 0.0
        %514 = vmatprep.subr.mxu0 0.0
        %515 = vmatpush2.msra.mxu0 0.0
        %516 = vmatprep.mubr.f32.mxu0 0.0
        %517 = vmatmul.mubr.f32.gmra.mxu0 %v431
        %v518 = vpop.f32.mrf.mxu0
        %v519 = vadd.f32 %v451, %v518
        %v520 = vpop.f32.mrf.mxu0
        %521 = vmatprep.mubr.f32.mxu0 0.0
        %522 = vmatmul.mubr.f32.gmra.mxu0 %v432
        %v523 = vpop.f32.mrf.mxu0
        %v524 = vadd.f32 %v451, %v523
        %v525 = vpop.f32.mrf.mxu0
        %526 = vmatprep.mubr.f32.mxu0 0.0
        %527 = vmatmul.mubr.f32.gmra.mxu0 %v433
        %v528 = vpop.f32.mrf.mxu0
        %v529 = vadd.f32 %v451, %v528
        %v530 = vpop.f32.mrf.mxu0
        %531 = vmatprep.mubr.f32.mxu0 0.0
        %532 = vmatmul.mubr.f32.gmra.mxu0 %v434
        %v533 = vpop.f32.mrf.mxu0
        %v534 = vadd.f32 %v451, %v533
        %v535 = vpop.f32.mrf.mxu0
        %536 = vmatprep.mubr.f32.mxu0 0.0
        %537 = vmatmul.mubr.f32.gmra.mxu0 %v435
        %v538 = vpop.f32.mrf.mxu0
        %v539 = vadd.f32 %v451, %v538
        %v540 = vpop.f32.mrf.mxu0
        %541 = vmatprep.mubr.f32.mxu0 0.0
        %542 = vmatmul.mubr.f32.gmra.mxu0 %v436
        %v543 = vpop.f32.mrf.mxu0
        %v544 = vadd.f32 %v451, %v543
        %v545 = vpop.f32.mrf.mxu0
        %546 = vmatprep.mubr.f32.mxu0 0.0
        %547 = vmatmul.mubr.f32.gmra.mxu0 %v437
        %v548 = vpop.f32.mrf.mxu0
        %v549 = vadd.f32 %v451, %v548
        %v550 = vpop.f32.mrf.mxu0
        %551 = vmatprep.mubr.f32.mxu0 0.0
        %552 = vmatmul.mubr.f32.gmra.mxu0 %v438
        %v553 = vpop.f32.mrf.mxu0
        %v554 = vadd.f32 %v451, %v553
        %v555 = vpop.f32.mrf.mxu0
        %556 = vmatprep.mubr.f32.mxu0 0.0
        %557 = vmatmul.mubr.f32.gmra.mxu0 %v439
        %v558 = vpop.f32.mrf.mxu0
        %v559 = vadd.f32 %v451, %v558
        %v560 = vpop.f32.mrf.mxu0
        %561 = vmatprep.mubr.f32.mxu0 0.0
        %562 = vmatmul.mubr.f32.gmra.mxu0 %v440
        %v563 = vpop.f32.mrf.mxu0
        %v564 = vadd.f32 %v451, %v563
        %v565 = vpop.f32.mrf.mxu0
        %566 = vmatprep.mubr.f32.mxu0 0.0
        %567 = vmatmul.mubr.f32.gmra.mxu0 %v441
        %v568 = vpop.f32.mrf.mxu0
        %v569 = vadd.f32 %v451, %v568
        %v570 = vpop.f32.mrf.mxu0
        %571 = vmatprep.mubr.f32.mxu0 0.0
        %572 = vmatmul.mubr.f32.gmra.mxu0 %v442
        %v573 = vpop.f32.mrf.mxu0
        %v574 = vadd.f32 %v451, %v573
        %v575 = vpop.f32.mrf.mxu0
        %576 = vmatprep.mubr.f32.mxu0 0.0
        %577 = vmatmul.mubr.f32.gmra.mxu0 %v443
        %v578 = vpop.f32.mrf.mxu0
        %v579 = vadd.f32 %v451, %v578
        %v580 = vpop.f32.mrf.mxu0
        %581 = vmatprep.mubr.f32.mxu0 0.0
        %582 = vmatmul.mubr.f32.gmra.mxu0 %v444
        %v583 = vpop.f32.mrf.mxu0
        %v584 = vadd.f32 %v451, %v583
        %v585 = vpop.f32.mrf.mxu0
        %586 = vmatprep.mubr.f32.mxu0 0.0
        %587 = vmatmul.mubr.f32.gmra.mxu0 %v445
        %v588 = vpop.f32.mrf.mxu0
        %v589 = vadd.f32 %v451, %v588
        %v590 = vpop.f32.mrf.mxu0
        %591 = vmatprep.mubr.f32.mxu0 0.0
        %592 = vmatmul.mubr.f32.gmra.mxu0 %v446
        %v593 = vpop.f32.mrf.mxu0
        %v594 = vadd.f32 %v451, %v593
        %v595 = vpop.f32.mrf.mxu0
        %596 = vdwg.mxu0
        %v597 = vmax.f32 %v519, 0.0
        %v598 = vmax.f32 %v524, 0.0
        %v599 = vmax.f32 %v529, 0.0
        %v600 = vmax.f32 %v534, 0.0
        %v601 = vmax.f32 %v539, 0.0
        %v602 = vmax.f32 %v544, 0.0
        %v603 = vmax.f32 %v549, 0.0
        %v604 = vmax.f32 %v554, 0.0
        %v605 = vmax.f32 %v559, 0.0
        %v606 = vmax.f32 %v564, 0.0
        %v607 = vmax.f32 %v569, 0.0
        %v608 = vmax.f32 %v574, 0.0
        %v609 = vmax.f32 %v579, 0.0
        %v610 = vmax.f32 %v584, 0.0
        %v611 = vmax.f32 %v589, 0.0
        %v612 = vmax.f32 %v594, 0.0
        %v613 = vld [vmem:[%s2] sm:$0xff]
        %v614 = vld [vmem:[%s2 + $0x8] sm:$0xff]
        %v615 = vld [vmem:[%s2 + $0x10] sm:$0xff]
        %v616 = vld [vmem:[%s2 + $0x18] sm:$0xff]
        %vm617 = vcmask 261120
        %v619 = vsel %vm617, %v597, 0
        %v622 = vsel %vm617, %v598, 0
        %v625 = vsel %vm617, %v599, 0
        %v628 = vsel %vm617, %v600, 0
        %v631 = vsel %vm617, %v601, 0
        %v634 = vsel %vm617, %v602, 0
        %v637 = vsel %vm617, %v603, 0
        %v640 = vsel %vm617, %v604, 0
        %v643 = vsel %vm617, %v605, 0
        %v646 = vsel %vm617, %v606, 0
        %v649 = vsel %vm617, %v607, 0
        %v652 = vsel %vm617, %v608, 0
        %v655 = vsel %vm617, %v609, 0
        %v658 = vsel %vm617, %v610, 0
        %v661 = vsel %vm617, %v611, 0
        %v664 = vsel %vm617, %v612, 0
        %666 = vmatprep.subr.mxu0 0.0
        %667 = vmatpush1.msra.mxu0 0.0
        %668 = vmatprep.subr.mxu0 0.0
        %669 = vmatpush1.msra.mxu0 0.0
        %670 = vmatprep.subr.mxu0 0.0
        %671 = vmatpush1.msra.mxu0 0.0
        %672 = vmatprep.subr.mxu0 0.0
        %673 = vmatpush1.msra.mxu0 0.0
        %674 = vmatprep.subr.mxu0 0.0
        %675 = vmatpush1.msra.mxu0 0.0
        %676 = vmatprep.subr.mxu0 0.0
        %677 = vmatpush1.msra.mxu0 0.0
        %678 = vmatprep.subr.mxu0 0.0
        %679 = vmatpush1.msra.mxu0 0.0
        %680 = vmatprep.subr.mxu0 0.0
        %681 = vmatpush1.msra.mxu0 0.0
        %682 = vmatprep.subr.mxu0 0.0
        %683 = vmatpush1.msra.mxu0 0.0
        %684 = vmatprep.subr.mxu0 0.0
        %685 = vmatpush1.msra.mxu0 0.0
        %686 = vmatprep.subr.mxu0 0.0
        %687 = vmatpush1.msra.mxu0 0.0
        %688 = vmatprep.subr.mxu0 0.0
        %689 = vmatpush1.msra.mxu0 0.0
        %690 = vmatprep.subr.mxu0 0.0
        %691 = vmatpush1.msra.mxu0 %v616
        %692 = vmatprep.subr.mxu0 0.0
        %693 = vmatpush1.msra.mxu0 %v615
        %694 = vmatprep.subr.mxu0 0.0
        %695 = vmatpush1.msra.mxu0 %v614
        %696 = vmatprep.subr.mxu0 0.0
        %697 = vmatpush1.msra.mxu0 %v613
        %698 = vmatprep.subr.mxu0 0.0
        %699 = vmatpush2.msra.mxu0 0.0
        %700 = vmatprep.subr.mxu0 0.0
        %701 = vmatpush2.msra.mxu0 0.0
        %702 = vmatprep.subr.mxu0 0.0
        %703 = vmatpush2.msra.mxu0 0.0
        %704 = vmatprep.subr.mxu0 0.0
        %705 = vmatpush2.msra.mxu0 0.0
        %706 = vmatprep.subr.mxu0 0.0
        %707 = vmatpush2.msra.mxu0 0.0
        %708 = vmatprep.subr.mxu0 0.0
        %709 = vmatpush2.msra.mxu0 0.0
        %710 = vmatprep.subr.mxu0 0.0
        %711 = vmatpush2.msra.mxu0 0.0
        %712 = vmatprep.subr.mxu0 0.0
        %713 = vmatpush2.msra.mxu0 0.0
        %714 = vmatprep.subr.mxu0 0.0
        %715 = vmatpush2.msra.mxu0 0.0
        %716 = vmatprep.subr.mxu0 0.0
        %717 = vmatpush2.msra.mxu0 0.0
        %718 = vmatprep.subr.mxu0 0.0
        %719 = vmatpush2.msra.mxu0 0.0
        %720 = vmatprep.subr.mxu0 0.0
        %721 = vmatpush2.msra.mxu0 0.0
        %722 = vmatprep.subr.mxu0 0.0
        %723 = vmatpush2.msra.mxu0 0.0
        %724 = vmatprep.subr.mxu0 0.0
        %725 = vmatpush2.msra.mxu0 0.0
        %726 = vmatprep.subr.mxu0 0.0
        %727 = vmatpush2.msra.mxu0 0.0
        %728 = vmatprep.subr.mxu0 0.0
        %729 = vmatpush2.msra.mxu0 0.0
        %730 = vmatprep.mubr.f32.mxu0 0.0
        %731 = vmatmul.mubr.f32.gmra.mxu0 %v619
        %v732 = vpop.f32.mrf.mxu0
        %v733 = vadd.f32 0.0, %v732
        %v734 = vpop.f32.mrf.mxu0
        %735 = vmatprep.mubr.f32.mxu0 0.0
        %736 = vmatmul.mubr.f32.gmra.mxu0 %v622
        %v737 = vpop.f32.mrf.mxu0
        %v738 = vadd.f32 0.0, %v737
        %v739 = vpop.f32.mrf.mxu0
        %740 = vmatprep.mubr.f32.mxu0 0.0
        %741 = vmatmul.mubr.f32.gmra.mxu0 %v625
        %v742 = vpop.f32.mrf.mxu0
        %v743 = vadd.f32 0.0, %v742
        %v744 = vpop.f32.mrf.mxu0
        %745 = vmatprep.mubr.f32.mxu0 0.0
        %746 = vmatmul.mubr.f32.gmra.mxu0 %v628
        %v747 = vpop.f32.mrf.mxu0
        %v748 = vadd.f32 0.0, %v747
        %v749 = vpop.f32.mrf.mxu0
        %750 = vmatprep.mubr.f32.mxu0 0.0
        %751 = vmatmul.mubr.f32.gmra.mxu0 %v631
        %v752 = vpop.f32.mrf.mxu0
        %v753 = vadd.f32 0.0, %v752
        %v754 = vpop.f32.mrf.mxu0
        %755 = vmatprep.mubr.f32.mxu0 0.0
        %756 = vmatmul.mubr.f32.gmra.mxu0 %v634
        %v757 = vpop.f32.mrf.mxu0
        %v758 = vadd.f32 0.0, %v757
        %v759 = vpop.f32.mrf.mxu0
        %760 = vmatprep.mubr.f32.mxu0 0.0
        %761 = vmatmul.mubr.f32.gmra.mxu0 %v637
        %v762 = vpop.f32.mrf.mxu0
        %v763 = vadd.f32 0.0, %v762
        %v764 = vpop.f32.mrf.mxu0
        %765 = vmatprep.mubr.f32.mxu0 0.0
        %766 = vmatmul.mubr.f32.gmra.mxu0 %v640
        %v767 = vpop.f32.mrf.mxu0
        %v768 = vadd.f32 0.0, %v767
        %v769 = vpop.f32.mrf.mxu0
        %770 = vmatprep.mubr.f32.mxu0 0.0
        %771 = vmatmul.mubr.f32.gmra.mxu0 %v643
        %v772 = vpop.f32.mrf.mxu0
        %v773 = vadd.f32 0.0, %v772
        %v774 = vpop.f32.mrf.mxu0
        %775 = vmatprep.mubr.f32.mxu0 0.0
        %776 = vmatmul.mubr.f32.gmra.mxu0 %v646
        %v777 = vpop.f32.mrf.mxu0
        %v778 = vadd.f32 0.0, %v777
        %v779 = vpop.f32.mrf.mxu0
        %780 = vmatprep.mubr.f32.mxu0 0.0
        %781 = vmatmul.mubr.f32.gmra.mxu0 %v649
        %v782 = vpop.f32.mrf.mxu0
        %v783 = vadd.f32 0.0, %v782
        %v784 = vpop.f32.mrf.mxu0
        %785 = vmatprep.mubr.f32.mxu0 0.0
        %786 = vmatmul.mubr.f32.gmra.mxu0 %v652
        %v787 = vpop.f32.mrf.mxu0
        %v788 = vadd.f32 0.0, %v787
        %v789 = vpop.f32.mrf.mxu0
        %790 = vmatprep.mubr.f32.mxu0 0.0
        %791 = vmatmul.mubr.f32.gmra.mxu0 %v655
        %v792 = vpop.f32.mrf.mxu0
        %v793 = vadd.f32 0.0, %v792
        %v794 = vpop.f32.mrf.mxu0
        %795 = vmatprep.mubr.f32.mxu0 0.0
        %796 = vmatmul.mubr.f32.gmra.mxu0 %v658
        %v797 = vpop.f32.mrf.mxu0
        %v798 = vadd.f32 0.0, %v797
        %v799 = vpop.f32.mrf.mxu0
        %800 = vmatprep.mubr.f32.mxu0 0.0
        %801 = vmatmul.mubr.f32.gmra.mxu0 %v661
        %v802 = vpop.f32.mrf.mxu0
        %v803 = vadd.f32 0.0, %v802
        %v804 = vpop.f32.mrf.mxu0
        %805 = vmatprep.mubr.f32.mxu0 0.0
        %806 = vmatmul.mubr.f32.gmra.mxu0 %v664
        %v807 = vpop.f32.mrf.mxu0
        %v808 = vadd.f32 0.0, %v807
        %v809 = vpop.f32.mrf.mxu0
        %810 = vdwg.mxu0
        %v811 = vld [vmem:[%s2 + $0x20] sm:$0xff]
        %v813 = vsel %vm617, %v811, 0
        %v816 = vsel %vm617, %v733, 0
        %v819 = vsel %vm617, %v738, 0
        %v822 = vsel %vm617, %v743, 0
        %v825 = vsel %vm617, %v748, 0
        %v828 = vsel %vm617, %v753, 0
        %v831 = vsel %vm617, %v758, 0
        %v834 = vsel %vm617, %v763, 0
        %v837 = vsel %vm617, %v768, 0
        %v840 = vsel %vm617, %v773, 0
        %v843 = vsel %vm617, %v778, 0
        %v846 = vsel %vm617, %v783, 0
        %v849 = vsel %vm617, %v788, 0
        %v852 = vsel %vm617, %v793, 0
        %v855 = vsel %vm617, %v798, 0
        %v858 = vsel %vm617, %v803, 0
        %v861 = vsel %vm617, %v808, 0
        %863 = vmatprep.subr.mxu0 0.0
        %864 = vmatpush1.xpose.msra.mxu0 %v861
        %865 = vmatprep.subr.mxu0 0.0
        %866 = vmatpush1.xpose.msra.mxu0 %v858
        %867 = vmatprep.subr.mxu0 0.0
        %868 = vmatpush1.xpose.msra.mxu0 %v855
        %869 = vmatprep.subr.mxu0 0.0
        %870 = vmatpush1.xpose.msra.mxu0 %v852
        %871 = vmatprep.subr.mxu0 0.0
        %872 = vmatpush1.xpose.msra.mxu0 %v849
        %873 = vmatprep.subr.mxu0 0.0
        %874 = vmatpush1.xpose.msra.mxu0 %v846
        %875 = vmatprep.subr.mxu0 0.0
        %876 = vmatpush1.xpose.msra.mxu0 %v843
        %877 = vmatprep.subr.mxu0 0.0
        %878 = vmatpush1.xpose.msra.mxu0 %v840
        %879 = vmatprep.subr.mxu0 0.0
        %880 = vmatpush1.xpose.msra.mxu0 %v837
        %881 = vmatprep.subr.mxu0 0.0
        %882 = vmatpush1.xpose.msra.mxu0 %v834
        %883 = vmatprep.subr.mxu0 0.0
        %884 = vmatpush1.xpose.msra.mxu0 %v831
        %885 = vmatprep.subr.mxu0 0.0
        %886 = vmatpush1.xpose.msra.mxu0 %v828
        %887 = vmatprep.subr.mxu0 0.0
        %888 = vmatpush1.xpose.msra.mxu0 %v825
        %889 = vmatprep.subr.mxu0 0.0
        %890 = vmatpush1.xpose.msra.mxu0 %v822
        %891 = vmatprep.subr.mxu0 0.0
        %892 = vmatpush1.xpose.msra.mxu0 %v819
        %893 = vmatprep.subr.mxu0 0.0
        %894 = vmatpush1.xpose.msra.mxu0 %v816
        %895 = vmatprep.subr.mxu0 0.0
        %896 = vmatpush2.xpose.msra.mxu0 0.0
        %897 = vmatprep.subr.mxu0 0.0
        %898 = vmatpush2.xpose.msra.mxu0 0.0
        %899 = vmatprep.subr.mxu0 0.0
        %900 = vmatpush2.xpose.msra.mxu0 0.0
        %901 = vmatprep.subr.mxu0 0.0
        %902 = vmatpush2.xpose.msra.mxu0 0.0
        %903 = vmatprep.subr.mxu0 0.0
        %904 = vmatpush2.xpose.msra.mxu0 0.0
        %905 = vmatprep.subr.mxu0 0.0
        %906 = vmatpush2.xpose.msra.mxu0 0.0
        %907 = vmatprep.subr.mxu0 0.0
        %908 = vmatpush2.xpose.msra.mxu0 0.0
        %909 = vmatprep.subr.mxu0 0.0
        %910 = vmatpush2.xpose.msra.mxu0 0.0
        %911 = vmatprep.subr.mxu0 0.0
        %912 = vmatpush2.xpose.msra.mxu0 0.0
        %913 = vmatprep.subr.mxu0 0.0
        %914 = vmatpush2.xpose.msra.mxu0 0.0
        %915 = vmatprep.subr.mxu0 0.0
        %916 = vmatpush2.xpose.msra.mxu0 0.0
        %917 = vmatprep.subr.mxu0 0.0
        %918 = vmatpush2.xpose.msra.mxu0 0.0
        %919 = vmatprep.subr.mxu0 0.0
        %920 = vmatpush2.xpose.msra.mxu0 0.0
        %921 = vmatprep.subr.mxu0 0.0
        %922 = vmatpush2.xpose.msra.mxu0 0.0
        %923 = vmatprep.subr.mxu0 0.0
        %924 = vmatpush2.xpose.msra.mxu0 0.0
        %925 = vmatprep.subr.mxu0 0.0
        %926 = vmatpush2.xpose.msra.mxu0 0.0
        %927 = vmatprep.mubr.f32.mxu0 0.0
        %928 = vmatmul.mubr.f32.gmra.mxu0 %v813
        %v929 = vpop.f32.mrf.mxu0
        %v930 = vadd.f32 0.0, %v929
        %v931 = vpop.f32.mrf.mxu0
        %932 = vdwg.mxu0
        %v933 = vld [vmem:[%s177 + $0x100] sm:$0xff]
        %v934 = vld [vmem:[%s177 + $0x108] sm:$0xff]
        %v935 = vld [vmem:[%s177 + $0x110] sm:$0xff]
        %v936 = vld [vmem:[%s177 + $0x118] sm:$0xff]
        %v937 = vld [vmem:[%s177 + $0x120] sm:$0xff]
        %v938 = vld [vmem:[%s177 + $0x128] sm:$0xff]
        %v939 = vld [vmem:[%s177 + $0x130] sm:$0xff]
        %v940 = vld [vmem:[%s177 + $0x138] sm:$0xff]
        %v941 = vld [vmem:[%s177 + $0x140] sm:$0xff]
        %v942 = vld [vmem:[%s177 + $0x148] sm:$0xff]
        %v943 = vld [vmem:[%s177 + $0x150] sm:$0xff]
        %v944 = vld [vmem:[%s177 + $0x158] sm:$0xff]
        %v945 = vld [vmem:[%s177 + $0x160] sm:$0xff]
        %v946 = vld [vmem:[%s177 + $0x168] sm:$0xff]
        %v947 = vld [vmem:[%s177 + $0x170] sm:$0xff]
        %v948 = vld [vmem:[%s177 + $0x178] sm:$0xff]
        %949 = vset.pattern.permute.xlu0 32
        %950 = vperm.xlu0 %949, %v733
        %v951 = vpop.permute.xlu0 %950
        %953 = vset.pattern.permute.xlu0 32
        %954 = vperm.xlu0 %953, %v738
        %v955 = vpop.permute.xlu0 %954
        %957 = vset.pattern.permute.xlu0 32
        %958 = vperm.xlu0 %957, %v743
        %v959 = vpop.permute.xlu0 %958
        %961 = vset.pattern.permute.xlu0 32
        %962 = vperm.xlu0 %961, %v748
        %v963 = vpop.permute.xlu0 %962
        %965 = vset.pattern.permute.xlu0 32
        %966 = vperm.xlu0 %965, %v753
        %v967 = vpop.permute.xlu0 %966
        %969 = vset.pattern.permute.xlu0 32
        %970 = vperm.xlu0 %969, %v758
        %v971 = vpop.permute.xlu0 %970
        %973 = vset.pattern.permute.xlu0 32
        %974 = vperm.xlu0 %973, %v763
        %v975 = vpop.permute.xlu0 %974
        %977 = vset.pattern.permute.xlu0 32
        %978 = vperm.xlu0 %977, %v768
        %v979 = vpop.permute.xlu0 %978
        %981 = vset.pattern.permute.xlu0 32
        %982 = vperm.xlu0 %981, %v773
        %v983 = vpop.permute.xlu0 %982
        %985 = vset.pattern.permute.xlu0 32
        %986 = vperm.xlu0 %985, %v778
        %v987 = vpop.permute.xlu0 %986
        %989 = vset.pattern.permute.xlu0 32
        %990 = vperm.xlu0 %989, %v783
        %v991 = vpop.permute.xlu0 %990
        %993 = vset.pattern.permute.xlu0 32
        %994 = vperm.xlu0 %993, %v788
        %v995 = vpop.permute.xlu0 %994
        %997 = vset.pattern.permute.xlu0 32
        %998 = vperm.xlu0 %997, %v793
        %v999 = vpop.permute.xlu0 %998
        %1001 = vset.pattern.permute.xlu0 32
        %1002 = vperm.xlu0 %1001, %v798
        %v1003 = vpop.permute.xlu0 %1002
        %1005 = vset.pattern.permute.xlu0 32
        %1006 = vperm.xlu0 %1005, %v803
        %v1007 = vpop.permute.xlu0 %1006
        %1009 = vset.pattern.permute.xlu0 32
        %1010 = vperm.xlu0 %1009, %v808
        %v1011 = vpop.permute.xlu0 %1010
        %v1013 = vlaneseq
        %v1014 = vshrl.u32 %v1013, 7
        %v1015 = vsub.s32 0, %v1014
        %v1016 = vrot.slane %v930, %v1015
        %v1017 = vadd.f32 %v951, %v1016
        %v1018 = vadd.f32 %v955, %v1016
        %v1019 = vadd.f32 %v959, %v1016
        %v1020 = vadd.f32 %v963, %v1016
        %v1021 = vadd.f32 %v967, %v1016
        %v1022 = vadd.f32 %v971, %v1016
        %v1023 = vadd.f32 %v975, %v1016
        %v1024 = vadd.f32 %v979, %v1016
        %v1025 = vadd.f32 %v983, %v1016
        %v1026 = vadd.f32 %v987, %v1016
        %v1027 = vadd.f32 %v991, %v1016
        %v1028 = vadd.f32 %v995, %v1016
        %v1029 = vadd.f32 %v999, %v1016
        %v1030 = vadd.f32 %v1003, %v1016
        %v1031 = vadd.f32 %v1007, %v1016
        %v1032 = vadd.f32 %v1011, %v1016
        %v1033 = vmul.f32 %v1017, 0.2
        %v1034 = vmul.f32 %v1018, 0.2
        %v1035 = vmul.f32 %v1019, 0.2
        %v1036 = vmul.f32 %v1020, 0.2
        %v1037 = vmul.f32 %v1021, 0.2
        %v1038 = vmul.f32 %v1022, 0.2
        %v1039 = vmul.f32 %v1023, 0.2
        %v1040 = vmul.f32 %v1024, 0.2
        %v1041 = vmul.f32 %v1025, 0.2
        %v1042 = vmul.f32 %v1026, 0.2
        %v1043 = vmul.f32 %v1027, 0.2
        %v1044 = vmul.f32 %v1028, 0.2
        %v1045 = vmul.f32 %v1029, 0.2
        %v1046 = vmul.f32 %v1030, 0.2
        %v1047 = vmul.f32 %v1031, 0.2
        %v1048 = vmul.f32 %v1032, 0.2
        %v1049 = vmax.f32 %v1017, %v1033
        %v1050 = vmax.f32 %v1018, %v1034
        %v1051 = vmax.f32 %v1019, %v1035
        %v1052 = vmax.f32 %v1020, %v1036
        %v1053 = vmax.f32 %v1021, %v1037
        %v1054 = vmax.f32 %v1022, %v1038
        %v1055 = vmax.f32 %v1023, %v1039
        %v1056 = vmax.f32 %v1024, %v1040
        %v1057 = vmax.f32 %v1025, %v1041
        %v1058 = vmax.f32 %v1026, %v1042
        %v1059 = vmax.f32 %v1027, %v1043
        %v1060 = vmax.f32 %v1028, %v1044
        %v1061 = vmax.f32 %v1029, %v1045
        %v1062 = vmax.f32 %v1030, %v1046
        %v1063 = vmax.f32 %v1031, %v1047
        %v1064 = vmax.f32 %v1032, %v1048
        %v1065 = vadd.f32 %v1049, %v933
        %v1066 = vadd.f32 %v1050, %v934
        %v1067 = vadd.f32 %v1051, %v935
        %v1068 = vadd.f32 %v1052, %v936
        %v1069 = vadd.f32 %v1053, %v937
        %v1070 = vadd.f32 %v1054, %v938
        %v1071 = vadd.f32 %v1055, %v939
        %v1072 = vadd.f32 %v1056, %v940
        %v1073 = vadd.f32 %v1057, %v941
        %v1074 = vadd.f32 %v1058, %v942
        %v1075 = vadd.f32 %v1059, %v943
        %v1076 = vadd.f32 %v1060, %v944
        %v1077 = vadd.f32 %v1061, %v945
        %v1078 = vadd.f32 %v1062, %v946
        %v1079 = vadd.f32 %v1063, %v947
        %v1080 = vadd.f32 %v1064, %v948
        %1081 = vmax.xlane.f32.xlu0 %v1065
        %v1082 = vpop.xlane.xlu0 %1081
        %1083 = vmax.xlane.f32.xlu0 %v1066
        %v1084 = vpop.xlane.xlu0 %1083
        %1085 = vmax.xlane.f32.xlu0 %v1067
        %v1086 = vpop.xlane.xlu0 %1085
        %1087 = vmax.xlane.f32.xlu0 %v1068
        %v1088 = vpop.xlane.xlu0 %1087
        %1089 = vmax.xlane.f32.xlu0 %v1069
        %v1090 = vpop.xlane.xlu0 %1089
        %1091 = vmax.xlane.f32.xlu0 %v1070
        %v1092 = vpop.xlane.xlu0 %1091
        %1093 = vmax.xlane.f32.xlu0 %v1071
        %v1094 = vpop.xlane.xlu0 %1093
        %1095 = vmax.xlane.f32.xlu0 %v1072
        %v1096 = vpop.xlane.xlu0 %1095
        %1097 = vmax.xlane.f32.xlu0 %v1073
        %v1098 = vpop.xlane.xlu0 %1097
        %1099 = vmax.xlane.f32.xlu0 %v1074
        %v1100 = vpop.xlane.xlu0 %1099
        %1101 = vmax.xlane.f32.xlu0 %v1075
        %v1102 = vpop.xlane.xlu0 %1101
        %1103 = vmax.xlane.f32.xlu0 %v1076
        %v1104 = vpop.xlane.xlu0 %1103
        %1105 = vmax.xlane.f32.xlu0 %v1077
        %v1106 = vpop.xlane.xlu0 %1105
        %1107 = vmax.xlane.f32.xlu0 %v1078
        %v1108 = vpop.xlane.xlu0 %1107
        %1109 = vmax.xlane.f32.xlu0 %v1079
        %v1110 = vpop.xlane.xlu0 %1109
        %1111 = vmax.xlane.f32.xlu0 %v1080
        %v1112 = vpop.xlane.xlu0 %1111
        %v1113 = vsub.f32 %v1065, %v1082
        %v1114 = vsub.f32 %v1066, %v1084
        %v1115 = vsub.f32 %v1067, %v1086
        %v1116 = vsub.f32 %v1068, %v1088
        %v1117 = vsub.f32 %v1069, %v1090
        %v1118 = vsub.f32 %v1070, %v1092
        %v1119 = vsub.f32 %v1071, %v1094
        %v1120 = vsub.f32 %v1072, %v1096
        %v1121 = vsub.f32 %v1073, %v1098
        %v1122 = vsub.f32 %v1074, %v1100
        %v1123 = vsub.f32 %v1075, %v1102
        %v1124 = vsub.f32 %v1076, %v1104
        %v1125 = vsub.f32 %v1077, %v1106
        %v1126 = vsub.f32 %v1078, %v1108
        %v1127 = vsub.f32 %v1079, %v1110
        %v1128 = vsub.f32 %v1080, %v1112
        %v1129 = vmul.f32 %v1113, 1.442695
        %v1130 = vpow.pop %v1129
        %v1131 = vmul.f32 %v1114, 1.442695
        %v1132 = vpow.pop %v1131
        %v1133 = vmul.f32 %v1115, 1.442695
        %v1134 = vpow.pop %v1133
        %v1135 = vmul.f32 %v1116, 1.442695
        %v1136 = vpow.pop %v1135
        %v1137 = vmul.f32 %v1117, 1.442695
        %v1138 = vpow.pop %v1137
        %v1139 = vmul.f32 %v1118, 1.442695
        %v1140 = vpow.pop %v1139
        %v1141 = vmul.f32 %v1119, 1.442695
        %v1142 = vpow.pop %v1141
        %v1143 = vmul.f32 %v1120, 1.442695
        %v1144 = vpow.pop %v1143
        %v1145 = vmul.f32 %v1121, 1.442695
        %v1146 = vpow.pop %v1145
        %v1147 = vmul.f32 %v1122, 1.442695
        %v1148 = vpow.pop %v1147
        %v1149 = vmul.f32 %v1123, 1.442695
        %v1150 = vpow.pop %v1149
        %v1151 = vmul.f32 %v1124, 1.442695
        %v1152 = vpow.pop %v1151
        %v1153 = vmul.f32 %v1125, 1.442695
        %v1154 = vpow.pop %v1153
        %v1155 = vmul.f32 %v1126, 1.442695
        %v1156 = vpow.pop %v1155
        %v1157 = vmul.f32 %v1127, 1.442695
        %v1158 = vpow.pop %v1157
        %v1159 = vmul.f32 %v1128, 1.442695
        %v1160 = vpow.pop %v1159
        %1161 = vadd.xlane.f32.xlu0 %v1130
        %v1162 = vpop.xlane.xlu0 %1161
        %1163 = vadd.xlane.f32.xlu0 %v1132
        %v1164 = vpop.xlane.xlu0 %1163
        %1165 = vadd.xlane.f32.xlu0 %v1134
        %v1166 = vpop.xlane.xlu0 %1165
        %1167 = vadd.xlane.f32.xlu0 %v1136
        %v1168 = vpop.xlane.xlu0 %1167
        %1169 = vadd.xlane.f32.xlu0 %v1138
        %v1170 = vpop.xlane.xlu0 %1169
        %1171 = vadd.xlane.f32.xlu0 %v1140
        %v1172 = vpop.xlane.xlu0 %1171
        %1173 = vadd.xlane.f32.xlu0 %v1142
        %v1174 = vpop.xlane.xlu0 %1173
        %1175 = vadd.xlane.f32.xlu0 %v1144
        %v1176 = vpop.xlane.xlu0 %1175
        %1177 = vadd.xlane.f32.xlu0 %v1146
        %v1178 = vpop.xlane.xlu0 %1177
        %1179 = vadd.xlane.f32.xlu0 %v1148
        %v1180 = vpop.xlane.xlu0 %1179
        %1181 = vadd.xlane.f32.xlu0 %v1150
        %v1182 = vpop.xlane.xlu0 %1181
        %1183 = vadd.xlane.f32.xlu0 %v1152
        %v1184 = vpop.xlane.xlu0 %1183
        %1185 = vadd.xlane.f32.xlu0 %v1154
        %v1186 = vpop.xlane.xlu0 %1185
        %1187 = vadd.xlane.f32.xlu0 %v1156
        %v1188 = vpop.xlane.xlu0 %1187
        %1189 = vadd.xlane.f32.xlu0 %v1158
        %v1190 = vpop.xlane.xlu0 %1189
        %1191 = vadd.xlane.f32.xlu0 %v1160
        %v1192 = vpop.xlane.xlu0 %1191
        %v1193 = vrcp.pop %v1162
        %v1194 = vrcp.pop %v1164
        %v1195 = vrcp.pop %v1166
        %v1196 = vrcp.pop %v1168
        %v1197 = vrcp.pop %v1170
        %v1198 = vrcp.pop %v1172
        %v1199 = vrcp.pop %v1174
        %v1200 = vrcp.pop %v1176
        %v1201 = vrcp.pop %v1178
        %v1202 = vrcp.pop %v1180
        %v1203 = vrcp.pop %v1182
        %v1204 = vrcp.pop %v1184
        %v1205 = vrcp.pop %v1186
        %v1206 = vrcp.pop %v1188
        %v1207 = vrcp.pop %v1190
        %v1208 = vrcp.pop %v1192
        %v1209 = vmul.f32 %v1130, %v1193
        %v1210 = vmul.f32 %v1132, %v1194
        %v1211 = vmul.f32 %v1134, %v1195
        %v1212 = vmul.f32 %v1136, %v1196
        %v1213 = vmul.f32 %v1138, %v1197
        %v1214 = vmul.f32 %v1140, %v1198
        %v1215 = vmul.f32 %v1142, %v1199
        %v1216 = vmul.f32 %v1144, %v1200
        %v1217 = vmul.f32 %v1146, %v1201
        %v1218 = vmul.f32 %v1148, %v1202
        %v1219 = vmul.f32 %v1150, %v1203
        %v1220 = vmul.f32 %v1152, %v1204
        %v1221 = vmul.f32 %v1154, %v1205
        %v1222 = vmul.f32 %v1156, %v1206
        %v1223 = vmul.f32 %v1158, %v1207
        %v1224 = vmul.f32 %v1160, %v1208
        %1225 = vmatprep.subr.mxu0 0.0
        %1226 = vmatpush1.msra.mxu0 %v808
        %1227 = vmatprep.subr.mxu0 0.0
        %1228 = vmatpush1.msra.mxu0 %v803
        %1229 = vmatprep.subr.mxu0 0.0
        %1230 = vmatpush1.msra.mxu0 %v798
        %1231 = vmatprep.subr.mxu0 0.0
        %1232 = vmatpush1.msra.mxu0 %v793
        %1233 = vmatprep.subr.mxu0 0.0
        %1234 = vmatpush1.msra.mxu0 %v788
        %1235 = vmatprep.subr.mxu0 0.0
        %1236 = vmatpush1.msra.mxu0 %v783
        %1237 = vmatprep.subr.mxu0 0.0
        %1238 = vmatpush1.msra.mxu0 %v778
        %1239 = vmatprep.subr.mxu0 0.0
        %1240 = vmatpush1.msra.mxu0 %v773
        %1241 = vmatprep.subr.mxu0 0.0
        %1242 = vmatpush1.msra.mxu0 %v768
        %1243 = vmatprep.subr.mxu0 0.0
        %1244 = vmatpush1.msra.mxu0 %v763
        %1245 = vmatprep.subr.mxu0 0.0
        %1246 = vmatpush1.msra.mxu0 %v758
        %1247 = vmatprep.subr.mxu0 0.0
        %1248 = vmatpush1.msra.mxu0 %v753
        %1249 = vmatprep.subr.mxu0 0.0
        %1250 = vmatpush1.msra.mxu0 %v748
        %1251 = vmatprep.subr.mxu0 0.0
        %1252 = vmatpush1.msra.mxu0 %v743
        %1253 = vmatprep.subr.mxu0 0.0
        %1254 = vmatpush1.msra.mxu0 %v738
        %1255 = vmatprep.subr.mxu0 0.0
        %1256 = vmatpush1.msra.mxu0 %v733
        %1257 = vmatprep.subr.mxu0 0.0
        %1258 = vmatpush2.msra.mxu0 0.0
        %1259 = vmatprep.subr.mxu0 0.0
        %1260 = vmatpush2.msra.mxu0 0.0
        %1261 = vmatprep.subr.mxu0 0.0
        %1262 = vmatpush2.msra.mxu0 0.0
        %1263 = vmatprep.subr.mxu0 0.0
        %1264 = vmatpush2.msra.mxu0 0.0
        %1265 = vmatprep.subr.mxu0 0.0
        %1266 = vmatpush2.msra.mxu0 0.0
        %1267 = vmatprep.subr.mxu0 0.0
        %1268 = vmatpush2.msra.mxu0 0.0
        %1269 = vmatprep.subr.mxu0 0.0
        %1270 = vmatpush2.msra.mxu0 0.0
        %1271 = vmatprep.subr.mxu0 0.0
        %1272 = vmatpush2.msra.mxu0 0.0
        %1273 = vmatprep.subr.mxu0 0.0
        %1274 = vmatpush2.msra.mxu0 0.0
        %1275 = vmatprep.subr.mxu0 0.0
        %1276 = vmatpush2.msra.mxu0 0.0
        %1277 = vmatprep.subr.mxu0 0.0
        %1278 = vmatpush2.msra.mxu0 0.0
        %1279 = vmatprep.subr.mxu0 0.0
        %1280 = vmatpush2.msra.mxu0 0.0
        %1281 = vmatprep.subr.mxu0 0.0
        %1282 = vmatpush2.msra.mxu0 0.0
        %1283 = vmatprep.subr.mxu0 0.0
        %1284 = vmatpush2.msra.mxu0 0.0
        %1285 = vmatprep.subr.mxu0 0.0
        %1286 = vmatpush2.msra.mxu0 0.0
        %1287 = vmatprep.subr.mxu0 0.0
        %1288 = vmatpush2.msra.mxu0 0.0
        %1289 = vmatprep.mubr.f32.mxu0 0.0
        %1290 = vmatmul.mubr.f32.gmra.mxu0 %v1209
        %v1291 = vpop.f32.mrf.mxu0
        %v1292 = vadd.f32 0.0, %v1291
        %v1293 = vpop.f32.mrf.mxu0
        %1294 = vmatprep.mubr.f32.mxu0 0.0
        %1295 = vmatmul.mubr.f32.gmra.mxu0 %v1210
        %v1296 = vpop.f32.mrf.mxu0
        %v1297 = vadd.f32 0.0, %v1296
        %v1298 = vpop.f32.mrf.mxu0
        %1299 = vmatprep.mubr.f32.mxu0 0.0
        %1300 = vmatmul.mubr.f32.gmra.mxu0 %v1211
        %v1301 = vpop.f32.mrf.mxu0
        %v1302 = vadd.f32 0.0, %v1301
        %v1303 = vpop.f32.mrf.mxu0
        %1304 = vmatprep.mubr.f32.mxu0 0.0
        %1305 = vmatmul.mubr.f32.gmra.mxu0 %v1212
        %v1306 = vpop.f32.mrf.mxu0
        %v1307 = vadd.f32 0.0, %v1306
        %v1308 = vpop.f32.mrf.mxu0
        %1309 = vmatprep.mubr.f32.mxu0 0.0
        %1310 = vmatmul.mubr.f32.gmra.mxu0 %v1213
        %v1311 = vpop.f32.mrf.mxu0
        %v1312 = vadd.f32 0.0, %v1311
        %v1313 = vpop.f32.mrf.mxu0
        %1314 = vmatprep.mubr.f32.mxu0 0.0
        %1315 = vmatmul.mubr.f32.gmra.mxu0 %v1214
        %v1316 = vpop.f32.mrf.mxu0
        %v1317 = vadd.f32 0.0, %v1316
        %v1318 = vpop.f32.mrf.mxu0
        %1319 = vmatprep.mubr.f32.mxu0 0.0
        %1320 = vmatmul.mubr.f32.gmra.mxu0 %v1215
        %v1321 = vpop.f32.mrf.mxu0
        %v1322 = vadd.f32 0.0, %v1321
        %v1323 = vpop.f32.mrf.mxu0
        %1324 = vmatprep.mubr.f32.mxu0 0.0
        %1325 = vmatmul.mubr.f32.gmra.mxu0 %v1216
        %v1326 = vpop.f32.mrf.mxu0
        %v1327 = vadd.f32 0.0, %v1326
        %v1328 = vpop.f32.mrf.mxu0
        %1329 = vmatprep.mubr.f32.mxu0 0.0
        %1330 = vmatmul.mubr.f32.gmra.mxu0 %v1217
        %v1331 = vpop.f32.mrf.mxu0
        %v1332 = vadd.f32 0.0, %v1331
        %v1333 = vpop.f32.mrf.mxu0
        %1334 = vmatprep.mubr.f32.mxu0 0.0
        %1335 = vmatmul.mubr.f32.gmra.mxu0 %v1218
        %v1336 = vpop.f32.mrf.mxu0
        %v1337 = vadd.f32 0.0, %v1336
        %v1338 = vpop.f32.mrf.mxu0
        %1339 = vmatprep.mubr.f32.mxu0 0.0
        %1340 = vmatmul.mubr.f32.gmra.mxu0 %v1219
        %v1341 = vpop.f32.mrf.mxu0
        %v1342 = vadd.f32 0.0, %v1341
        %v1343 = vpop.f32.mrf.mxu0
        %1344 = vmatprep.mubr.f32.mxu0 0.0
        %1345 = vmatmul.mubr.f32.gmra.mxu0 %v1220
        %v1346 = vpop.f32.mrf.mxu0
        %v1347 = vadd.f32 0.0, %v1346
        %v1348 = vpop.f32.mrf.mxu0
        %1349 = vmatprep.mubr.f32.mxu0 0.0
        %1350 = vmatmul.mubr.f32.gmra.mxu0 %v1221
        %v1351 = vpop.f32.mrf.mxu0
        %v1352 = vadd.f32 0.0, %v1351
        %v1353 = vpop.f32.mrf.mxu0
        %1354 = vmatprep.mubr.f32.mxu0 0.0
        %1355 = vmatmul.mubr.f32.gmra.mxu0 %v1222
        %v1356 = vpop.f32.mrf.mxu0
        %v1357 = vadd.f32 0.0, %v1356
        %v1358 = vpop.f32.mrf.mxu0
        %1359 = vmatprep.mubr.f32.mxu0 0.0
        %1360 = vmatmul.mubr.f32.gmra.mxu0 %v1223
        %v1361 = vpop.f32.mrf.mxu0
        %v1362 = vadd.f32 0.0, %v1361
        %v1363 = vpop.f32.mrf.mxu0
        %1364 = vmatprep.mubr.f32.mxu0 0.0
        %1365 = vmatmul.mubr.f32.gmra.mxu0 %v1224
        %v1366 = vpop.f32.mrf.mxu0
        %v1367 = vadd.f32 0.0, %v1366
        %v1368 = vpop.f32.mrf.mxu0
        %1369 = vdwg.mxu0
        %v1370 = vld [vmem:[%s2 + $0x28] sm:$0x1]
        %v1371 = vlaneseq
        %v1372 = vshrl.u32 %v1371, 7
        %v1373 = vsub.s32 0, %v1372
        %v1374 = vrot.slane %v1370, %v1373
        %v1375 = vmul.f32 %v1292, %v1374
        %v1376 = vmul.f32 %v1297, %v1374
        %v1377 = vmul.f32 %v1302, %v1374
        %v1378 = vmul.f32 %v1307, %v1374
        %v1379 = vmul.f32 %v1312, %v1374
        %v1380 = vmul.f32 %v1317, %v1374
        %v1381 = vmul.f32 %v1322, %v1374
        %v1382 = vmul.f32 %v1327, %v1374
        %v1383 = vmul.f32 %v1332, %v1374
        %v1384 = vmul.f32 %v1337, %v1374
        %v1385 = vmul.f32 %v1342, %v1374
        %v1386 = vmul.f32 %v1347, %v1374
        %v1387 = vmul.f32 %v1352, %v1374
        %v1388 = vmul.f32 %v1357, %v1374
        %v1389 = vmul.f32 %v1362, %v1374
        %v1390 = vmul.f32 %v1367, %v1374
        %v1391 = vadd.f32 %v1375, 0.0
        %v1392 = vadd.f32 %v1376, 0.0
        %v1393 = vadd.f32 %v1377, 0.0
        %v1394 = vadd.f32 %v1378, 0.0
        %v1395 = vadd.f32 %v1379, 0.0
        %v1396 = vadd.f32 %v1380, 0.0
        %v1397 = vadd.f32 %v1381, 0.0
        %v1398 = vadd.f32 %v1382, 0.0
        %v1399 = vadd.f32 %v1383, 0.0
        %v1400 = vadd.f32 %v1384, 0.0
        %v1401 = vadd.f32 %v1385, 0.0
        %v1402 = vadd.f32 %v1386, 0.0
        %v1403 = vadd.f32 %v1387, 0.0
        %v1404 = vadd.f32 %v1388, 0.0
        %v1405 = vadd.f32 %v1389, 0.0
        %v1406 = vadd.f32 %v1390, 0.0
        %1407 = vset.pattern.permute.xlu0 33
        %1408 = vperm.xlu0 %1407, %v733
        %v1409 = vpop.permute.xlu0 %1408
        %1411 = vset.pattern.permute.xlu0 33
        %1412 = vperm.xlu0 %1411, %v738
        %v1413 = vpop.permute.xlu0 %1412
        %1415 = vset.pattern.permute.xlu0 33
        %1416 = vperm.xlu0 %1415, %v743
        %v1417 = vpop.permute.xlu0 %1416
        %1419 = vset.pattern.permute.xlu0 33
        %1420 = vperm.xlu0 %1419, %v748
        %v1421 = vpop.permute.xlu0 %1420
        %1423 = vset.pattern.permute.xlu0 33
        %1424 = vperm.xlu0 %1423, %v753
        %v1425 = vpop.permute.xlu0 %1424
        %1427 = vset.pattern.permute.xlu0 33
        %1428 = vperm.xlu0 %1427, %v758
        %v1429 = vpop.permute.xlu0 %1428
        %1431 = vset.pattern.permute.xlu0 33
        %1432 = vperm.xlu0 %1431, %v763
        %v1433 = vpop.permute.xlu0 %1432
        %1435 = vset.pattern.permute.xlu0 33
        %1436 = vperm.xlu0 %1435, %v768
        %v1437 = vpop.permute.xlu0 %1436
        %1439 = vset.pattern.permute.xlu0 33
        %1440 = vperm.xlu0 %1439, %v773
        %v1441 = vpop.permute.xlu0 %1440
        %1443 = vset.pattern.permute.xlu0 33
        %1444 = vperm.xlu0 %1443, %v778
        %v1445 = vpop.permute.xlu0 %1444
        %1447 = vset.pattern.permute.xlu0 33
        %1448 = vperm.xlu0 %1447, %v783
        %v1449 = vpop.permute.xlu0 %1448
        %1451 = vset.pattern.permute.xlu0 33
        %1452 = vperm.xlu0 %1451, %v788
        %v1453 = vpop.permute.xlu0 %1452
        %1455 = vset.pattern.permute.xlu0 33
        %1456 = vperm.xlu0 %1455, %v793
        %v1457 = vpop.permute.xlu0 %1456
        %1459 = vset.pattern.permute.xlu0 33
        %1460 = vperm.xlu0 %1459, %v798
        %v1461 = vpop.permute.xlu0 %1460
        %1463 = vset.pattern.permute.xlu0 33
        %1464 = vperm.xlu0 %1463, %v803
        %v1465 = vpop.permute.xlu0 %1464
        %1467 = vset.pattern.permute.xlu0 33
        %1468 = vperm.xlu0 %1467, %v808
        %v1469 = vpop.permute.xlu0 %1468
        %v1471 = vlaneseq
        %v1472 = vshrl.u32 %v1471, 7
        %v1473 = vsub.s32 1, %v1472
        %v1474 = vrot.slane %v930, %v1473
        %v1475 = vadd.f32 %v1409, %v1474
        %v1476 = vadd.f32 %v1413, %v1474
        %v1477 = vadd.f32 %v1417, %v1474
        %v1478 = vadd.f32 %v1421, %v1474
        %v1479 = vadd.f32 %v1425, %v1474
        %v1480 = vadd.f32 %v1429, %v1474
        %v1481 = vadd.f32 %v1433, %v1474
        %v1482 = vadd.f32 %v1437, %v1474
        %v1483 = vadd.f32 %v1441, %v1474
        %v1484 = vadd.f32 %v1445, %v1474
        %v1485 = vadd.f32 %v1449, %v1474
        %v1486 = vadd.f32 %v1453, %v1474
        %v1487 = vadd.f32 %v1457, %v1474
        %v1488 = vadd.f32 %v1461, %v1474
        %v1489 = vadd.f32 %v1465, %v1474
        %v1490 = vadd.f32 %v1469, %v1474
        %v1491 = vmul.f32 %v1475, 0.2
        %v1492 = vmul.f32 %v1476, 0.2
        %v1493 = vmul.f32 %v1477, 0.2
        %v1494 = vmul.f32 %v1478, 0.2
        %v1495 = vmul.f32 %v1479, 0.2
        %v1496 = vmul.f32 %v1480, 0.2
        %v1497 = vmul.f32 %v1481, 0.2
        %v1498 = vmul.f32 %v1482, 0.2
        %v1499 = vmul.f32 %v1483, 0.2
        %v1500 = vmul.f32 %v1484, 0.2
        %v1501 = vmul.f32 %v1485, 0.2
        %v1502 = vmul.f32 %v1486, 0.2
        %v1503 = vmul.f32 %v1487, 0.2
        %v1504 = vmul.f32 %v1488, 0.2
        %v1505 = vmul.f32 %v1489, 0.2
        %v1506 = vmul.f32 %v1490, 0.2
        %v1507 = vmax.f32 %v1475, %v1491
        %v1508 = vmax.f32 %v1476, %v1492
        %v1509 = vmax.f32 %v1477, %v1493
        %v1510 = vmax.f32 %v1478, %v1494
        %v1511 = vmax.f32 %v1479, %v1495
        %v1512 = vmax.f32 %v1480, %v1496
        %v1513 = vmax.f32 %v1481, %v1497
        %v1514 = vmax.f32 %v1482, %v1498
        %v1515 = vmax.f32 %v1483, %v1499
        %v1516 = vmax.f32 %v1484, %v1500
        %v1517 = vmax.f32 %v1485, %v1501
        %v1518 = vmax.f32 %v1486, %v1502
        %v1519 = vmax.f32 %v1487, %v1503
        %v1520 = vmax.f32 %v1488, %v1504
        %v1521 = vmax.f32 %v1489, %v1505
        %v1522 = vmax.f32 %v1490, %v1506
        %v1523 = vadd.f32 %v1507, %v933
        %v1524 = vadd.f32 %v1508, %v934
        %v1525 = vadd.f32 %v1509, %v935
        %v1526 = vadd.f32 %v1510, %v936
        %v1527 = vadd.f32 %v1511, %v937
        %v1528 = vadd.f32 %v1512, %v938
        %v1529 = vadd.f32 %v1513, %v939
        %v1530 = vadd.f32 %v1514, %v940
        %v1531 = vadd.f32 %v1515, %v941
        %v1532 = vadd.f32 %v1516, %v942
        %v1533 = vadd.f32 %v1517, %v943
        %v1534 = vadd.f32 %v1518, %v944
        %v1535 = vadd.f32 %v1519, %v945
        %v1536 = vadd.f32 %v1520, %v946
        %v1537 = vadd.f32 %v1521, %v947
        %v1538 = vadd.f32 %v1522, %v948
        %1539 = vmax.xlane.f32.xlu0 %v1523
        %v1540 = vpop.xlane.xlu0 %1539
        %1541 = vmax.xlane.f32.xlu0 %v1524
        %v1542 = vpop.xlane.xlu0 %1541
        %1543 = vmax.xlane.f32.xlu0 %v1525
        %v1544 = vpop.xlane.xlu0 %1543
        %1545 = vmax.xlane.f32.xlu0 %v1526
        %v1546 = vpop.xlane.xlu0 %1545
        %1547 = vmax.xlane.f32.xlu0 %v1527
        %v1548 = vpop.xlane.xlu0 %1547
        %1549 = vmax.xlane.f32.xlu0 %v1528
        %v1550 = vpop.xlane.xlu0 %1549
        %1551 = vmax.xlane.f32.xlu0 %v1529
        %v1552 = vpop.xlane.xlu0 %1551
        %1553 = vmax.xlane.f32.xlu0 %v1530
        %v1554 = vpop.xlane.xlu0 %1553
        %1555 = vmax.xlane.f32.xlu0 %v1531
        %v1556 = vpop.xlane.xlu0 %1555
        %1557 = vmax.xlane.f32.xlu0 %v1532
        %v1558 = vpop.xlane.xlu0 %1557
        %1559 = vmax.xlane.f32.xlu0 %v1533
        %v1560 = vpop.xlane.xlu0 %1559
        %1561 = vmax.xlane.f32.xlu0 %v1534
        %v1562 = vpop.xlane.xlu0 %1561
        %1563 = vmax.xlane.f32.xlu0 %v1535
        %v1564 = vpop.xlane.xlu0 %1563
        %1565 = vmax.xlane.f32.xlu0 %v1536
        %v1566 = vpop.xlane.xlu0 %1565
        %1567 = vmax.xlane.f32.xlu0 %v1537
        %v1568 = vpop.xlane.xlu0 %1567
        %1569 = vmax.xlane.f32.xlu0 %v1538
        %v1570 = vpop.xlane.xlu0 %1569
        %v1571 = vsub.f32 %v1523, %v1540
        %v1572 = vsub.f32 %v1524, %v1542
        %v1573 = vsub.f32 %v1525, %v1544
        %v1574 = vsub.f32 %v1526, %v1546
        %v1575 = vsub.f32 %v1527, %v1548
        %v1576 = vsub.f32 %v1528, %v1550
        %v1577 = vsub.f32 %v1529, %v1552
        %v1578 = vsub.f32 %v1530, %v1554
        %v1579 = vsub.f32 %v1531, %v1556
        %v1580 = vsub.f32 %v1532, %v1558
        %v1581 = vsub.f32 %v1533, %v1560
        %v1582 = vsub.f32 %v1534, %v1562
        %v1583 = vsub.f32 %v1535, %v1564
        %v1584 = vsub.f32 %v1536, %v1566
        %v1585 = vsub.f32 %v1537, %v1568
        %v1586 = vsub.f32 %v1538, %v1570
        %v1587 = vmul.f32 %v1571, 1.442695
        %v1588 = vpow.pop %v1587
        %v1589 = vmul.f32 %v1572, 1.442695
        %v1590 = vpow.pop %v1589
        %v1591 = vmul.f32 %v1573, 1.442695
        %v1592 = vpow.pop %v1591
        %v1593 = vmul.f32 %v1574, 1.442695
        %v1594 = vpow.pop %v1593
        %v1595 = vmul.f32 %v1575, 1.442695
        %v1596 = vpow.pop %v1595
        %v1597 = vmul.f32 %v1576, 1.442695
        %v1598 = vpow.pop %v1597
        %v1599 = vmul.f32 %v1577, 1.442695
        %v1600 = vpow.pop %v1599
        %v1601 = vmul.f32 %v1578, 1.442695
        %v1602 = vpow.pop %v1601
        %v1603 = vmul.f32 %v1579, 1.442695
        %v1604 = vpow.pop %v1603
        %v1605 = vmul.f32 %v1580, 1.442695
        %v1606 = vpow.pop %v1605
        %v1607 = vmul.f32 %v1581, 1.442695
        %v1608 = vpow.pop %v1607
        %v1609 = vmul.f32 %v1582, 1.442695
        %v1610 = vpow.pop %v1609
        %v1611 = vmul.f32 %v1583, 1.442695
        %v1612 = vpow.pop %v1611
        %v1613 = vmul.f32 %v1584, 1.442695
        %v1614 = vpow.pop %v1613
        %v1615 = vmul.f32 %v1585, 1.442695
        %v1616 = vpow.pop %v1615
        %v1617 = vmul.f32 %v1586, 1.442695
        %v1618 = vpow.pop %v1617
        %1619 = vadd.xlane.f32.xlu0 %v1588
        %v1620 = vpop.xlane.xlu0 %1619
        %1621 = vadd.xlane.f32.xlu0 %v1590
        %v1622 = vpop.xlane.xlu0 %1621
        %1623 = vadd.xlane.f32.xlu0 %v1592
        %v1624 = vpop.xlane.xlu0 %1623
        %1625 = vadd.xlane.f32.xlu0 %v1594
        %v1626 = vpop.xlane.xlu0 %1625
        %1627 = vadd.xlane.f32.xlu0 %v1596
        %v1628 = vpop.xlane.xlu0 %1627
        %1629 = vadd.xlane.f32.xlu0 %v1598
        %v1630 = vpop.xlane.xlu0 %1629
        %1631 = vadd.xlane.f32.xlu0 %v1600
        %v1632 = vpop.xlane.xlu0 %1631
        %1633 = vadd.xlane.f32.xlu0 %v1602
        %v1634 = vpop.xlane.xlu0 %1633
        %1635 = vadd.xlane.f32.xlu0 %v1604
        %v1636 = vpop.xlane.xlu0 %1635
        %1637 = vadd.xlane.f32.xlu0 %v1606
        %v1638 = vpop.xlane.xlu0 %1637
        %1639 = vadd.xlane.f32.xlu0 %v1608
        %v1640 = vpop.xlane.xlu0 %1639
        %1641 = vadd.xlane.f32.xlu0 %v1610
        %v1642 = vpop.xlane.xlu0 %1641
        %1643 = vadd.xlane.f32.xlu0 %v1612
        %v1644 = vpop.xlane.xlu0 %1643
        %1645 = vadd.xlane.f32.xlu0 %v1614
        %v1646 = vpop.xlane.xlu0 %1645
        %1647 = vadd.xlane.f32.xlu0 %v1616
        %v1648 = vpop.xlane.xlu0 %1647
        %1649 = vadd.xlane.f32.xlu0 %v1618
        %v1650 = vpop.xlane.xlu0 %1649
        %v1651 = vrcp.pop %v1620
        %v1652 = vrcp.pop %v1622
        %v1653 = vrcp.pop %v1624
        %v1654 = vrcp.pop %v1626
        %v1655 = vrcp.pop %v1628
        %v1656 = vrcp.pop %v1630
        %v1657 = vrcp.pop %v1632
        %v1658 = vrcp.pop %v1634
        %v1659 = vrcp.pop %v1636
        %v1660 = vrcp.pop %v1638
        %v1661 = vrcp.pop %v1640
        %v1662 = vrcp.pop %v1642
        %v1663 = vrcp.pop %v1644
        %v1664 = vrcp.pop %v1646
        %v1665 = vrcp.pop %v1648
        %v1666 = vrcp.pop %v1650
        %v1667 = vmul.f32 %v1588, %v1651
        %v1668 = vmul.f32 %v1590, %v1652
        %v1669 = vmul.f32 %v1592, %v1653
        %v1670 = vmul.f32 %v1594, %v1654
        %v1671 = vmul.f32 %v1596, %v1655
        %v1672 = vmul.f32 %v1598, %v1656
        %v1673 = vmul.f32 %v1600, %v1657
        %v1674 = vmul.f32 %v1602, %v1658
        %v1675 = vmul.f32 %v1604, %v1659
        %v1676 = vmul.f32 %v1606, %v1660
        %v1677 = vmul.f32 %v1608, %v1661
        %v1678 = vmul.f32 %v1610, %v1662
        %v1679 = vmul.f32 %v1612, %v1663
        %v1680 = vmul.f32 %v1614, %v1664
        %v1681 = vmul.f32 %v1616, %v1665
        %v1682 = vmul.f32 %v1618, %v1666
        %1683 = vmatprep.subr.mxu0 0.0
        %1684 = vmatpush1.msra.mxu0 %v808
        %1685 = vmatprep.subr.mxu0 0.0
        %1686 = vmatpush1.msra.mxu0 %v803
        %1687 = vmatprep.subr.mxu0 0.0
        %1688 = vmatpush1.msra.mxu0 %v798
        %1689 = vmatprep.subr.mxu0 0.0
        %1690 = vmatpush1.msra.mxu0 %v793
        %1691 = vmatprep.subr.mxu0 0.0
        %1692 = vmatpush1.msra.mxu0 %v788
        %1693 = vmatprep.subr.mxu0 0.0
        %1694 = vmatpush1.msra.mxu0 %v783
        %1695 = vmatprep.subr.mxu0 0.0
        %1696 = vmatpush1.msra.mxu0 %v778
        %1697 = vmatprep.subr.mxu0 0.0
        %1698 = vmatpush1.msra.mxu0 %v773
        %1699 = vmatprep.subr.mxu0 0.0
        %1700 = vmatpush1.msra.mxu0 %v768
        %1701 = vmatprep.subr.mxu0 0.0
        %1702 = vmatpush1.msra.mxu0 %v763
        %1703 = vmatprep.subr.mxu0 0.0
        %1704 = vmatpush1.msra.mxu0 %v758
        %1705 = vmatprep.subr.mxu0 0.0
        %1706 = vmatpush1.msra.mxu0 %v753
        %1707 = vmatprep.subr.mxu0 0.0
        %1708 = vmatpush1.msra.mxu0 %v748
        %1709 = vmatprep.subr.mxu0 0.0
        %1710 = vmatpush1.msra.mxu0 %v743
        %1711 = vmatprep.subr.mxu0 0.0
        %1712 = vmatpush1.msra.mxu0 %v738
        %1713 = vmatprep.subr.mxu0 0.0
        %1714 = vmatpush1.msra.mxu0 %v733
        %1715 = vmatprep.subr.mxu0 0.0
        %1716 = vmatpush2.msra.mxu0 0.0
        %1717 = vmatprep.subr.mxu0 0.0
        %1718 = vmatpush2.msra.mxu0 0.0
        %1719 = vmatprep.subr.mxu0 0.0
        %1720 = vmatpush2.msra.mxu0 0.0
        %1721 = vmatprep.subr.mxu0 0.0
        %1722 = vmatpush2.msra.mxu0 0.0
        %1723 = vmatprep.subr.mxu0 0.0
        %1724 = vmatpush2.msra.mxu0 0.0
        %1725 = vmatprep.subr.mxu0 0.0
        %1726 = vmatpush2.msra.mxu0 0.0
        %1727 = vmatprep.subr.mxu0 0.0
        %1728 = vmatpush2.msra.mxu0 0.0
        %1729 = vmatprep.subr.mxu0 0.0
        %1730 = vmatpush2.msra.mxu0 0.0
        %1731 = vmatprep.subr.mxu0 0.0
        %1732 = vmatpush2.msra.mxu0 0.0
        %1733 = vmatprep.subr.mxu0 0.0
        %1734 = vmatpush2.msra.mxu0 0.0
        %1735 = vmatprep.subr.mxu0 0.0
        %1736 = vmatpush2.msra.mxu0 0.0
        %1737 = vmatprep.subr.mxu0 0.0
        %1738 = vmatpush2.msra.mxu0 0.0
        %1739 = vmatprep.subr.mxu0 0.0
        %1740 = vmatpush2.msra.mxu0 0.0
        %1741 = vmatprep.subr.mxu0 0.0
        %1742 = vmatpush2.msra.mxu0 0.0
        %1743 = vmatprep.subr.mxu0 0.0
        %1744 = vmatpush2.msra.mxu0 0.0
        %1745 = vmatprep.subr.mxu0 0.0
        %1746 = vmatpush2.msra.mxu0 0.0
        %1747 = vmatprep.mubr.f32.mxu0 0.0
        %1748 = vmatmul.mubr.f32.gmra.mxu0 %v1667
        %v1749 = vpop.f32.mrf.mxu0
        %v1750 = vadd.f32 0.0, %v1749
        %v1751 = vpop.f32.mrf.mxu0
        %1752 = vmatprep.mubr.f32.mxu0 0.0
        %1753 = vmatmul.mubr.f32.gmra.mxu0 %v1668
        %v1754 = vpop.f32.mrf.mxu0
        %v1755 = vadd.f32 0.0, %v1754
        %v1756 = vpop.f32.mrf.mxu0
        %1757 = vmatprep.mubr.f32.mxu0 0.0
        %1758 = vmatmul.mubr.f32.gmra.mxu0 %v1669
        %v1759 = vpop.f32.mrf.mxu0
        %v1760 = vadd.f32 0.0, %v1759
        %v1761 = vpop.f32.mrf.mxu0
        %1762 = vmatprep.mubr.f32.mxu0 0.0
        %1763 = vmatmul.mubr.f32.gmra.mxu0 %v1670
        %v1764 = vpop.f32.mrf.mxu0
        %v1765 = vadd.f32 0.0, %v1764
        %v1766 = vpop.f32.mrf.mxu0
        %1767 = vmatprep.mubr.f32.mxu0 0.0
        %1768 = vmatmul.mubr.f32.gmra.mxu0 %v1671
        %v1769 = vpop.f32.mrf.mxu0
        %v1770 = vadd.f32 0.0, %v1769
        %v1771 = vpop.f32.mrf.mxu0
        %1772 = vmatprep.mubr.f32.mxu0 0.0
        %1773 = vmatmul.mubr.f32.gmra.mxu0 %v1672
        %v1774 = vpop.f32.mrf.mxu0
        %v1775 = vadd.f32 0.0, %v1774
        %v1776 = vpop.f32.mrf.mxu0
        %1777 = vmatprep.mubr.f32.mxu0 0.0
        %1778 = vmatmul.mubr.f32.gmra.mxu0 %v1673
        %v1779 = vpop.f32.mrf.mxu0
        %v1780 = vadd.f32 0.0, %v1779
        %v1781 = vpop.f32.mrf.mxu0
        %1782 = vmatprep.mubr.f32.mxu0 0.0
        %1783 = vmatmul.mubr.f32.gmra.mxu0 %v1674
        %v1784 = vpop.f32.mrf.mxu0
        %v1785 = vadd.f32 0.0, %v1784
        %v1786 = vpop.f32.mrf.mxu0
        %1787 = vmatprep.mubr.f32.mxu0 0.0
        %1788 = vmatmul.mubr.f32.gmra.mxu0 %v1675
        %v1789 = vpop.f32.mrf.mxu0
        %v1790 = vadd.f32 0.0, %v1789
        %v1791 = vpop.f32.mrf.mxu0
        %1792 = vmatprep.mubr.f32.mxu0 0.0
        %1793 = vmatmul.mubr.f32.gmra.mxu0 %v1676
        %v1794 = vpop.f32.mrf.mxu0
        %v1795 = vadd.f32 0.0, %v1794
        %v1796 = vpop.f32.mrf.mxu0
        %1797 = vmatprep.mubr.f32.mxu0 0.0
        %1798 = vmatmul.mubr.f32.gmra.mxu0 %v1677
        %v1799 = vpop.f32.mrf.mxu0
        %v1800 = vadd.f32 0.0, %v1799
        %v1801 = vpop.f32.mrf.mxu0
        %1802 = vmatprep.mubr.f32.mxu0 0.0
        %1803 = vmatmul.mubr.f32.gmra.mxu0 %v1678
        %v1804 = vpop.f32.mrf.mxu0
        %v1805 = vadd.f32 0.0, %v1804
        %v1806 = vpop.f32.mrf.mxu0
        %1807 = vmatprep.mubr.f32.mxu0 0.0
        %1808 = vmatmul.mubr.f32.gmra.mxu0 %v1679
        %v1809 = vpop.f32.mrf.mxu0
        %v1810 = vadd.f32 0.0, %v1809
        %v1811 = vpop.f32.mrf.mxu0
        %1812 = vmatprep.mubr.f32.mxu0 0.0
        %1813 = vmatmul.mubr.f32.gmra.mxu0 %v1680
        %v1814 = vpop.f32.mrf.mxu0
        %v1815 = vadd.f32 0.0, %v1814
        %v1816 = vpop.f32.mrf.mxu0
        %1817 = vmatprep.mubr.f32.mxu0 0.0
        %1818 = vmatmul.mubr.f32.gmra.mxu0 %v1681
        %v1819 = vpop.f32.mrf.mxu0
        %v1820 = vadd.f32 0.0, %v1819
        %v1821 = vpop.f32.mrf.mxu0
        %1822 = vmatprep.mubr.f32.mxu0 0.0
        %1823 = vmatmul.mubr.f32.gmra.mxu0 %v1682
        %v1824 = vpop.f32.mrf.mxu0
        %v1825 = vadd.f32 0.0, %v1824
        %v1826 = vpop.f32.mrf.mxu0
        %1827 = vdwg.mxu0
        %v1828 = vld [vmem:[%s2 + $0x29] sm:$0x1]
        %v1829 = vlaneseq
        %v1830 = vshrl.u32 %v1829, 7
        %v1831 = vsub.s32 0, %v1830
        %v1832 = vrot.slane %v1828, %v1831
        %v1833 = vmul.f32 %v1750, %v1832
        %v1834 = vmul.f32 %v1755, %v1832
        %v1835 = vmul.f32 %v1760, %v1832
        %v1836 = vmul.f32 %v1765, %v1832
        %v1837 = vmul.f32 %v1770, %v1832
        %v1838 = vmul.f32 %v1775, %v1832
        %v1839 = vmul.f32 %v1780, %v1832
        %v1840 = vmul.f32 %v1785, %v1832
        %v1841 = vmul.f32 %v1790, %v1832
        %v1842 = vmul.f32 %v1795, %v1832
        %v1843 = vmul.f32 %v1800, %v1832
        %v1844 = vmul.f32 %v1805, %v1832
        %v1845 = vmul.f32 %v1810, %v1832
        %v1846 = vmul.f32 %v1815, %v1832
        %v1847 = vmul.f32 %v1820, %v1832
        %v1848 = vmul.f32 %v1825, %v1832
        %v1849 = vadd.f32 %v1391, %v1833
        %v1850 = vadd.f32 %v1392, %v1834
        %v1851 = vadd.f32 %v1393, %v1835
        %v1852 = vadd.f32 %v1394, %v1836
        %v1853 = vadd.f32 %v1395, %v1837
        %v1854 = vadd.f32 %v1396, %v1838
        %v1855 = vadd.f32 %v1397, %v1839
        %v1856 = vadd.f32 %v1398, %v1840
        %v1857 = vadd.f32 %v1399, %v1841
        %v1858 = vadd.f32 %v1400, %v1842
        %v1859 = vadd.f32 %v1401, %v1843
        %v1860 = vadd.f32 %v1402, %v1844
        %v1861 = vadd.f32 %v1403, %v1845
        %v1862 = vadd.f32 %v1404, %v1846
        %v1863 = vadd.f32 %v1405, %v1847
        %v1864 = vadd.f32 %v1406, %v1848
        %1865 = vset.pattern.permute.xlu0 34
        %1866 = vperm.xlu0 %1865, %v733
        %v1867 = vpop.permute.xlu0 %1866
        %1869 = vset.pattern.permute.xlu0 34
        %1870 = vperm.xlu0 %1869, %v738
        %v1871 = vpop.permute.xlu0 %1870
        %1873 = vset.pattern.permute.xlu0 34
        %1874 = vperm.xlu0 %1873, %v743
        %v1875 = vpop.permute.xlu0 %1874
        %1877 = vset.pattern.permute.xlu0 34
        %1878 = vperm.xlu0 %1877, %v748
        %v1879 = vpop.permute.xlu0 %1878
        %1881 = vset.pattern.permute.xlu0 34
        %1882 = vperm.xlu0 %1881, %v753
        %v1883 = vpop.permute.xlu0 %1882
        %1885 = vset.pattern.permute.xlu0 34
        %1886 = vperm.xlu0 %1885, %v758
        %v1887 = vpop.permute.xlu0 %1886
        %1889 = vset.pattern.permute.xlu0 34
        %1890 = vperm.xlu0 %1889, %v763
        %v1891 = vpop.permute.xlu0 %1890
        %1893 = vset.pattern.permute.xlu0 34
        %1894 = vperm.xlu0 %1893, %v768
        %v1895 = vpop.permute.xlu0 %1894
        %1897 = vset.pattern.permute.xlu0 34
        %1898 = vperm.xlu0 %1897, %v773
        %v1899 = vpop.permute.xlu0 %1898
        %1901 = vset.pattern.permute.xlu0 34
        %1902 = vperm.xlu0 %1901, %v778
        %v1903 = vpop.permute.xlu0 %1902
        %1905 = vset.pattern.permute.xlu0 34
        %1906 = vperm.xlu0 %1905, %v783
        %v1907 = vpop.permute.xlu0 %1906
        %1909 = vset.pattern.permute.xlu0 34
        %1910 = vperm.xlu0 %1909, %v788
        %v1911 = vpop.permute.xlu0 %1910
        %1913 = vset.pattern.permute.xlu0 34
        %1914 = vperm.xlu0 %1913, %v793
        %v1915 = vpop.permute.xlu0 %1914
        %1917 = vset.pattern.permute.xlu0 34
        %1918 = vperm.xlu0 %1917, %v798
        %v1919 = vpop.permute.xlu0 %1918
        %1921 = vset.pattern.permute.xlu0 34
        %1922 = vperm.xlu0 %1921, %v803
        %v1923 = vpop.permute.xlu0 %1922
        %1925 = vset.pattern.permute.xlu0 34
        %1926 = vperm.xlu0 %1925, %v808
        %v1927 = vpop.permute.xlu0 %1926
        %v1929 = vlaneseq
        %v1930 = vshrl.u32 %v1929, 7
        %v1931 = vsub.s32 2, %v1930
        %v1932 = vrot.slane %v930, %v1931
        %v1933 = vadd.f32 %v1867, %v1932
        %v1934 = vadd.f32 %v1871, %v1932
        %v1935 = vadd.f32 %v1875, %v1932
        %v1936 = vadd.f32 %v1879, %v1932
        %v1937 = vadd.f32 %v1883, %v1932
        %v1938 = vadd.f32 %v1887, %v1932
        %v1939 = vadd.f32 %v1891, %v1932
        %v1940 = vadd.f32 %v1895, %v1932
        %v1941 = vadd.f32 %v1899, %v1932
        %v1942 = vadd.f32 %v1903, %v1932
        %v1943 = vadd.f32 %v1907, %v1932
        %v1944 = vadd.f32 %v1911, %v1932
        %v1945 = vadd.f32 %v1915, %v1932
        %v1946 = vadd.f32 %v1919, %v1932
        %v1947 = vadd.f32 %v1923, %v1932
        %v1948 = vadd.f32 %v1927, %v1932
        %v1949 = vmul.f32 %v1933, 0.2
        %v1950 = vmul.f32 %v1934, 0.2
        %v1951 = vmul.f32 %v1935, 0.2
        %v1952 = vmul.f32 %v1936, 0.2
        %v1953 = vmul.f32 %v1937, 0.2
        %v1954 = vmul.f32 %v1938, 0.2
        %v1955 = vmul.f32 %v1939, 0.2
        %v1956 = vmul.f32 %v1940, 0.2
        %v1957 = vmul.f32 %v1941, 0.2
        %v1958 = vmul.f32 %v1942, 0.2
        %v1959 = vmul.f32 %v1943, 0.2
        %v1960 = vmul.f32 %v1944, 0.2
        %v1961 = vmul.f32 %v1945, 0.2
        %v1962 = vmul.f32 %v1946, 0.2
        %v1963 = vmul.f32 %v1947, 0.2
        %v1964 = vmul.f32 %v1948, 0.2
        %v1965 = vmax.f32 %v1933, %v1949
        %v1966 = vmax.f32 %v1934, %v1950
        %v1967 = vmax.f32 %v1935, %v1951
        %v1968 = vmax.f32 %v1936, %v1952
        %v1969 = vmax.f32 %v1937, %v1953
        %v1970 = vmax.f32 %v1938, %v1954
        %v1971 = vmax.f32 %v1939, %v1955
        %v1972 = vmax.f32 %v1940, %v1956
        %v1973 = vmax.f32 %v1941, %v1957
        %v1974 = vmax.f32 %v1942, %v1958
        %v1975 = vmax.f32 %v1943, %v1959
        %v1976 = vmax.f32 %v1944, %v1960
        %v1977 = vmax.f32 %v1945, %v1961
        %v1978 = vmax.f32 %v1946, %v1962
        %v1979 = vmax.f32 %v1947, %v1963
        %v1980 = vmax.f32 %v1948, %v1964
        %v1981 = vadd.f32 %v1965, %v933
        %v1982 = vadd.f32 %v1966, %v934
        %v1983 = vadd.f32 %v1967, %v935
        %v1984 = vadd.f32 %v1968, %v936
        %v1985 = vadd.f32 %v1969, %v937
        %v1986 = vadd.f32 %v1970, %v938
        %v1987 = vadd.f32 %v1971, %v939
        %v1988 = vadd.f32 %v1972, %v940
        %v1989 = vadd.f32 %v1973, %v941
        %v1990 = vadd.f32 %v1974, %v942
        %v1991 = vadd.f32 %v1975, %v943
        %v1992 = vadd.f32 %v1976, %v944
        %v1993 = vadd.f32 %v1977, %v945
        %v1994 = vadd.f32 %v1978, %v946
        %v1995 = vadd.f32 %v1979, %v947
        %v1996 = vadd.f32 %v1980, %v948
        %1997 = vmax.xlane.f32.xlu0 %v1981
        %v1998 = vpop.xlane.xlu0 %1997
        %1999 = vmax.xlane.f32.xlu0 %v1982
        %v2000 = vpop.xlane.xlu0 %1999
        %2001 = vmax.xlane.f32.xlu0 %v1983
        %v2002 = vpop.xlane.xlu0 %2001
        %2003 = vmax.xlane.f32.xlu0 %v1984
        %v2004 = vpop.xlane.xlu0 %2003
        %2005 = vmax.xlane.f32.xlu0 %v1985
        %v2006 = vpop.xlane.xlu0 %2005
        %2007 = vmax.xlane.f32.xlu0 %v1986
        %v2008 = vpop.xlane.xlu0 %2007
        %2009 = vmax.xlane.f32.xlu0 %v1987
        %v2010 = vpop.xlane.xlu0 %2009
        %2011 = vmax.xlane.f32.xlu0 %v1988
        %v2012 = vpop.xlane.xlu0 %2011
        %2013 = vmax.xlane.f32.xlu0 %v1989
        %v2014 = vpop.xlane.xlu0 %2013
        %2015 = vmax.xlane.f32.xlu0 %v1990
        %v2016 = vpop.xlane.xlu0 %2015
        %2017 = vmax.xlane.f32.xlu0 %v1991
        %v2018 = vpop.xlane.xlu0 %2017
        %2019 = vmax.xlane.f32.xlu0 %v1992
        %v2020 = vpop.xlane.xlu0 %2019
        %2021 = vmax.xlane.f32.xlu0 %v1993
        %v2022 = vpop.xlane.xlu0 %2021
        %2023 = vmax.xlane.f32.xlu0 %v1994
        %v2024 = vpop.xlane.xlu0 %2023
        %2025 = vmax.xlane.f32.xlu0 %v1995
        %v2026 = vpop.xlane.xlu0 %2025
        %2027 = vmax.xlane.f32.xlu0 %v1996
        %v2028 = vpop.xlane.xlu0 %2027
        %v2029 = vsub.f32 %v1981, %v1998
        %v2030 = vsub.f32 %v1982, %v2000
        %v2031 = vsub.f32 %v1983, %v2002
        %v2032 = vsub.f32 %v1984, %v2004
        %v2033 = vsub.f32 %v1985, %v2006
        %v2034 = vsub.f32 %v1986, %v2008
        %v2035 = vsub.f32 %v1987, %v2010
        %v2036 = vsub.f32 %v1988, %v2012
        %v2037 = vsub.f32 %v1989, %v2014
        %v2038 = vsub.f32 %v1990, %v2016
        %v2039 = vsub.f32 %v1991, %v2018
        %v2040 = vsub.f32 %v1992, %v2020
        %v2041 = vsub.f32 %v1993, %v2022
        %v2042 = vsub.f32 %v1994, %v2024
        %v2043 = vsub.f32 %v1995, %v2026
        %v2044 = vsub.f32 %v1996, %v2028
        %v2045 = vmul.f32 %v2029, 1.442695
        %v2046 = vpow.pop %v2045
        %v2047 = vmul.f32 %v2030, 1.442695
        %v2048 = vpow.pop %v2047
        %v2049 = vmul.f32 %v2031, 1.442695
        %v2050 = vpow.pop %v2049
        %v2051 = vmul.f32 %v2032, 1.442695
        %v2052 = vpow.pop %v2051
        %v2053 = vmul.f32 %v2033, 1.442695
        %v2054 = vpow.pop %v2053
        %v2055 = vmul.f32 %v2034, 1.442695
        %v2056 = vpow.pop %v2055
        %v2057 = vmul.f32 %v2035, 1.442695
        %v2058 = vpow.pop %v2057
        %v2059 = vmul.f32 %v2036, 1.442695
        %v2060 = vpow.pop %v2059
        %v2061 = vmul.f32 %v2037, 1.442695
        %v2062 = vpow.pop %v2061
        %v2063 = vmul.f32 %v2038, 1.442695
        %v2064 = vpow.pop %v2063
        %v2065 = vmul.f32 %v2039, 1.442695
        %v2066 = vpow.pop %v2065
        %v2067 = vmul.f32 %v2040, 1.442695
        %v2068 = vpow.pop %v2067
        %v2069 = vmul.f32 %v2041, 1.442695
        %v2070 = vpow.pop %v2069
        %v2071 = vmul.f32 %v2042, 1.442695
        %v2072 = vpow.pop %v2071
        %v2073 = vmul.f32 %v2043, 1.442695
        %v2074 = vpow.pop %v2073
        %v2075 = vmul.f32 %v2044, 1.442695
        %v2076 = vpow.pop %v2075
        %2077 = vadd.xlane.f32.xlu0 %v2046
        %v2078 = vpop.xlane.xlu0 %2077
        %2079 = vadd.xlane.f32.xlu0 %v2048
        %v2080 = vpop.xlane.xlu0 %2079
        %2081 = vadd.xlane.f32.xlu0 %v2050
        %v2082 = vpop.xlane.xlu0 %2081
        %2083 = vadd.xlane.f32.xlu0 %v2052
        %v2084 = vpop.xlane.xlu0 %2083
        %2085 = vadd.xlane.f32.xlu0 %v2054
        %v2086 = vpop.xlane.xlu0 %2085
        %2087 = vadd.xlane.f32.xlu0 %v2056
        %v2088 = vpop.xlane.xlu0 %2087
        %2089 = vadd.xlane.f32.xlu0 %v2058
        %v2090 = vpop.xlane.xlu0 %2089
        %2091 = vadd.xlane.f32.xlu0 %v2060
        %v2092 = vpop.xlane.xlu0 %2091
        %2093 = vadd.xlane.f32.xlu0 %v2062
        %v2094 = vpop.xlane.xlu0 %2093
        %2095 = vadd.xlane.f32.xlu0 %v2064
        %v2096 = vpop.xlane.xlu0 %2095
        %2097 = vadd.xlane.f32.xlu0 %v2066
        %v2098 = vpop.xlane.xlu0 %2097
        %2099 = vadd.xlane.f32.xlu0 %v2068
        %v2100 = vpop.xlane.xlu0 %2099
        %2101 = vadd.xlane.f32.xlu0 %v2070
        %v2102 = vpop.xlane.xlu0 %2101
        %2103 = vadd.xlane.f32.xlu0 %v2072
        %v2104 = vpop.xlane.xlu0 %2103
        %2105 = vadd.xlane.f32.xlu0 %v2074
        %v2106 = vpop.xlane.xlu0 %2105
        %2107 = vadd.xlane.f32.xlu0 %v2076
        %v2108 = vpop.xlane.xlu0 %2107
        %v2109 = vrcp.pop %v2078
        %v2110 = vrcp.pop %v2080
        %v2111 = vrcp.pop %v2082
        %v2112 = vrcp.pop %v2084
        %v2113 = vrcp.pop %v2086
        %v2114 = vrcp.pop %v2088
        %v2115 = vrcp.pop %v2090
        %v2116 = vrcp.pop %v2092
        %v2117 = vrcp.pop %v2094
        %v2118 = vrcp.pop %v2096
        %v2119 = vrcp.pop %v2098
        %v2120 = vrcp.pop %v2100
        %v2121 = vrcp.pop %v2102
        %v2122 = vrcp.pop %v2104
        %v2123 = vrcp.pop %v2106
        %v2124 = vrcp.pop %v2108
        %v2125 = vmul.f32 %v2046, %v2109
        %v2126 = vmul.f32 %v2048, %v2110
        %v2127 = vmul.f32 %v2050, %v2111
        %v2128 = vmul.f32 %v2052, %v2112
        %v2129 = vmul.f32 %v2054, %v2113
        %v2130 = vmul.f32 %v2056, %v2114
        %v2131 = vmul.f32 %v2058, %v2115
        %v2132 = vmul.f32 %v2060, %v2116
        %v2133 = vmul.f32 %v2062, %v2117
        %v2134 = vmul.f32 %v2064, %v2118
        %v2135 = vmul.f32 %v2066, %v2119
        %v2136 = vmul.f32 %v2068, %v2120
        %v2137 = vmul.f32 %v2070, %v2121
        %v2138 = vmul.f32 %v2072, %v2122
        %v2139 = vmul.f32 %v2074, %v2123
        %v2140 = vmul.f32 %v2076, %v2124
        %2141 = vmatprep.subr.mxu0 0.0
        %2142 = vmatpush1.msra.mxu0 %v808
        %2143 = vmatprep.subr.mxu0 0.0
        %2144 = vmatpush1.msra.mxu0 %v803
        %2145 = vmatprep.subr.mxu0 0.0
        %2146 = vmatpush1.msra.mxu0 %v798
        %2147 = vmatprep.subr.mxu0 0.0
        %2148 = vmatpush1.msra.mxu0 %v793
        %2149 = vmatprep.subr.mxu0 0.0
        %2150 = vmatpush1.msra.mxu0 %v788
        %2151 = vmatprep.subr.mxu0 0.0
        %2152 = vmatpush1.msra.mxu0 %v783
        %2153 = vmatprep.subr.mxu0 0.0
        %2154 = vmatpush1.msra.mxu0 %v778
        %2155 = vmatprep.subr.mxu0 0.0
        %2156 = vmatpush1.msra.mxu0 %v773
        %2157 = vmatprep.subr.mxu0 0.0
        %2158 = vmatpush1.msra.mxu0 %v768
        %2159 = vmatprep.subr.mxu0 0.0
        %2160 = vmatpush1.msra.mxu0 %v763
        %2161 = vmatprep.subr.mxu0 0.0
        %2162 = vmatpush1.msra.mxu0 %v758
        %2163 = vmatprep.subr.mxu0 0.0
        %2164 = vmatpush1.msra.mxu0 %v753
        %2165 = vmatprep.subr.mxu0 0.0
        %2166 = vmatpush1.msra.mxu0 %v748
        %2167 = vmatprep.subr.mxu0 0.0
        %2168 = vmatpush1.msra.mxu0 %v743
        %2169 = vmatprep.subr.mxu0 0.0
        %2170 = vmatpush1.msra.mxu0 %v738
        %2171 = vmatprep.subr.mxu0 0.0
        %2172 = vmatpush1.msra.mxu0 %v733
        %2173 = vmatprep.subr.mxu0 0.0
        %2174 = vmatpush2.msra.mxu0 0.0
        %2175 = vmatprep.subr.mxu0 0.0
        %2176 = vmatpush2.msra.mxu0 0.0
        %2177 = vmatprep.subr.mxu0 0.0
        %2178 = vmatpush2.msra.mxu0 0.0
        %2179 = vmatprep.subr.mxu0 0.0
        %2180 = vmatpush2.msra.mxu0 0.0
        %2181 = vmatprep.subr.mxu0 0.0
        %2182 = vmatpush2.msra.mxu0 0.0
        %2183 = vmatprep.subr.mxu0 0.0
        %2184 = vmatpush2.msra.mxu0 0.0
        %2185 = vmatprep.subr.mxu0 0.0
        %2186 = vmatpush2.msra.mxu0 0.0
        %2187 = vmatprep.subr.mxu0 0.0
        %2188 = vmatpush2.msra.mxu0 0.0
        %2189 = vmatprep.subr.mxu0 0.0
        %2190 = vmatpush2.msra.mxu0 0.0
        %2191 = vmatprep.subr.mxu0 0.0
        %2192 = vmatpush2.msra.mxu0 0.0
        %2193 = vmatprep.subr.mxu0 0.0
        %2194 = vmatpush2.msra.mxu0 0.0
        %2195 = vmatprep.subr.mxu0 0.0
        %2196 = vmatpush2.msra.mxu0 0.0
        %2197 = vmatprep.subr.mxu0 0.0
        %2198 = vmatpush2.msra.mxu0 0.0
        %2199 = vmatprep.subr.mxu0 0.0
        %2200 = vmatpush2.msra.mxu0 0.0
        %2201 = vmatprep.subr.mxu0 0.0
        %2202 = vmatpush2.msra.mxu0 0.0
        %2203 = vmatprep.subr.mxu0 0.0
        %2204 = vmatpush2.msra.mxu0 0.0
        %2205 = vmatprep.mubr.f32.mxu0 0.0
        %2206 = vmatmul.mubr.f32.gmra.mxu0 %v2125
        %v2207 = vpop.f32.mrf.mxu0
        %v2208 = vadd.f32 0.0, %v2207
        %v2209 = vpop.f32.mrf.mxu0
        %2210 = vmatprep.mubr.f32.mxu0 0.0
        %2211 = vmatmul.mubr.f32.gmra.mxu0 %v2126
        %v2212 = vpop.f32.mrf.mxu0
        %v2213 = vadd.f32 0.0, %v2212
        %v2214 = vpop.f32.mrf.mxu0
        %2215 = vmatprep.mubr.f32.mxu0 0.0
        %2216 = vmatmul.mubr.f32.gmra.mxu0 %v2127
        %v2217 = vpop.f32.mrf.mxu0
        %v2218 = vadd.f32 0.0, %v2217
        %v2219 = vpop.f32.mrf.mxu0
        %2220 = vmatprep.mubr.f32.mxu0 0.0
        %2221 = vmatmul.mubr.f32.gmra.mxu0 %v2128
        %v2222 = vpop.f32.mrf.mxu0
        %v2223 = vadd.f32 0.0, %v2222
        %v2224 = vpop.f32.mrf.mxu0
        %2225 = vmatprep.mubr.f32.mxu0 0.0
        %2226 = vmatmul.mubr.f32.gmra.mxu0 %v2129
        %v2227 = vpop.f32.mrf.mxu0
        %v2228 = vadd.f32 0.0, %v2227
        %v2229 = vpop.f32.mrf.mxu0
        %2230 = vmatprep.mubr.f32.mxu0 0.0
        %2231 = vmatmul.mubr.f32.gmra.mxu0 %v2130
        %v2232 = vpop.f32.mrf.mxu0
        %v2233 = vadd.f32 0.0, %v2232
        %v2234 = vpop.f32.mrf.mxu0
        %2235 = vmatprep.mubr.f32.mxu0 0.0
        %2236 = vmatmul.mubr.f32.gmra.mxu0 %v2131
        %v2237 = vpop.f32.mrf.mxu0
        %v2238 = vadd.f32 0.0, %v2237
        %v2239 = vpop.f32.mrf.mxu0
        %2240 = vmatprep.mubr.f32.mxu0 0.0
        %2241 = vmatmul.mubr.f32.gmra.mxu0 %v2132
        %v2242 = vpop.f32.mrf.mxu0
        %v2243 = vadd.f32 0.0, %v2242
        %v2244 = vpop.f32.mrf.mxu0
        %2245 = vmatprep.mubr.f32.mxu0 0.0
        %2246 = vmatmul.mubr.f32.gmra.mxu0 %v2133
        %v2247 = vpop.f32.mrf.mxu0
        %v2248 = vadd.f32 0.0, %v2247
        %v2249 = vpop.f32.mrf.mxu0
        %2250 = vmatprep.mubr.f32.mxu0 0.0
        %2251 = vmatmul.mubr.f32.gmra.mxu0 %v2134
        %v2252 = vpop.f32.mrf.mxu0
        %v2253 = vadd.f32 0.0, %v2252
        %v2254 = vpop.f32.mrf.mxu0
        %2255 = vmatprep.mubr.f32.mxu0 0.0
        %2256 = vmatmul.mubr.f32.gmra.mxu0 %v2135
        %v2257 = vpop.f32.mrf.mxu0
        %v2258 = vadd.f32 0.0, %v2257
        %v2259 = vpop.f32.mrf.mxu0
        %2260 = vmatprep.mubr.f32.mxu0 0.0
        %2261 = vmatmul.mubr.f32.gmra.mxu0 %v2136
        %v2262 = vpop.f32.mrf.mxu0
        %v2263 = vadd.f32 0.0, %v2262
        %v2264 = vpop.f32.mrf.mxu0
        %2265 = vmatprep.mubr.f32.mxu0 0.0
        %2266 = vmatmul.mubr.f32.gmra.mxu0 %v2137
        %v2267 = vpop.f32.mrf.mxu0
        %v2268 = vadd.f32 0.0, %v2267
        %v2269 = vpop.f32.mrf.mxu0
        %2270 = vmatprep.mubr.f32.mxu0 0.0
        %2271 = vmatmul.mubr.f32.gmra.mxu0 %v2138
        %v2272 = vpop.f32.mrf.mxu0
        %v2273 = vadd.f32 0.0, %v2272
        %v2274 = vpop.f32.mrf.mxu0
        %2275 = vmatprep.mubr.f32.mxu0 0.0
        %2276 = vmatmul.mubr.f32.gmra.mxu0 %v2139
        %v2277 = vpop.f32.mrf.mxu0
        %v2278 = vadd.f32 0.0, %v2277
        %v2279 = vpop.f32.mrf.mxu0
        %2280 = vmatprep.mubr.f32.mxu0 0.0
        %2281 = vmatmul.mubr.f32.gmra.mxu0 %v2140
        %v2282 = vpop.f32.mrf.mxu0
        %v2283 = vadd.f32 0.0, %v2282
        %v2284 = vpop.f32.mrf.mxu0
        %2285 = vdwg.mxu0
        %v2286 = vld [vmem:[%s2 + $0x2a] sm:$0x1]
        %v2287 = vlaneseq
        %v2288 = vshrl.u32 %v2287, 7
        %v2289 = vsub.s32 0, %v2288
        %v2290 = vrot.slane %v2286, %v2289
        %v2291 = vmul.f32 %v2208, %v2290
        %v2292 = vmul.f32 %v2213, %v2290
        %v2293 = vmul.f32 %v2218, %v2290
        %v2294 = vmul.f32 %v2223, %v2290
        %v2295 = vmul.f32 %v2228, %v2290
        %v2296 = vmul.f32 %v2233, %v2290
        %v2297 = vmul.f32 %v2238, %v2290
        %v2298 = vmul.f32 %v2243, %v2290
        %v2299 = vmul.f32 %v2248, %v2290
        %v2300 = vmul.f32 %v2253, %v2290
        %v2301 = vmul.f32 %v2258, %v2290
        %v2302 = vmul.f32 %v2263, %v2290
        %v2303 = vmul.f32 %v2268, %v2290
        %v2304 = vmul.f32 %v2273, %v2290
        %v2305 = vmul.f32 %v2278, %v2290
        %v2306 = vmul.f32 %v2283, %v2290
        %v2307 = vadd.f32 %v1849, %v2291
        %v2308 = vadd.f32 %v1850, %v2292
        %v2309 = vadd.f32 %v1851, %v2293
        %v2310 = vadd.f32 %v1852, %v2294
        %v2311 = vadd.f32 %v1853, %v2295
        %v2312 = vadd.f32 %v1854, %v2296
        %v2313 = vadd.f32 %v1855, %v2297
        %v2314 = vadd.f32 %v1856, %v2298
        %v2315 = vadd.f32 %v1857, %v2299
        %v2316 = vadd.f32 %v1858, %v2300
        %v2317 = vadd.f32 %v1859, %v2301
        %v2318 = vadd.f32 %v1860, %v2302
        %v2319 = vadd.f32 %v1861, %v2303
        %v2320 = vadd.f32 %v1862, %v2304
        %v2321 = vadd.f32 %v1863, %v2305
        %v2322 = vadd.f32 %v1864, %v2306
        %2323 = vset.pattern.permute.xlu0 35
        %2324 = vperm.xlu0 %2323, %v733
        %v2325 = vpop.permute.xlu0 %2324
        %2327 = vset.pattern.permute.xlu0 35
        %2328 = vperm.xlu0 %2327, %v738
        %v2329 = vpop.permute.xlu0 %2328
        %2331 = vset.pattern.permute.xlu0 35
        %2332 = vperm.xlu0 %2331, %v743
        %v2333 = vpop.permute.xlu0 %2332
        %2335 = vset.pattern.permute.xlu0 35
        %2336 = vperm.xlu0 %2335, %v748
        %v2337 = vpop.permute.xlu0 %2336
        %2339 = vset.pattern.permute.xlu0 35
        %2340 = vperm.xlu0 %2339, %v753
        %v2341 = vpop.permute.xlu0 %2340
        %2343 = vset.pattern.permute.xlu0 35
        %2344 = vperm.xlu0 %2343, %v758
        %v2345 = vpop.permute.xlu0 %2344
        %2347 = vset.pattern.permute.xlu0 35
        %2348 = vperm.xlu0 %2347, %v763
        %v2349 = vpop.permute.xlu0 %2348
        %2351 = vset.pattern.permute.xlu0 35
        %2352 = vperm.xlu0 %2351, %v768
        %v2353 = vpop.permute.xlu0 %2352
        %2355 = vset.pattern.permute.xlu0 35
        %2356 = vperm.xlu0 %2355, %v773
        %v2357 = vpop.permute.xlu0 %2356
        %2359 = vset.pattern.permute.xlu0 35
        %2360 = vperm.xlu0 %2359, %v778
        %v2361 = vpop.permute.xlu0 %2360
        %2363 = vset.pattern.permute.xlu0 35
        %2364 = vperm.xlu0 %2363, %v783
        %v2365 = vpop.permute.xlu0 %2364
        %2367 = vset.pattern.permute.xlu0 35
        %2368 = vperm.xlu0 %2367, %v788
        %v2369 = vpop.permute.xlu0 %2368
        %2371 = vset.pattern.permute.xlu0 35
        %2372 = vperm.xlu0 %2371, %v793
        %v2373 = vpop.permute.xlu0 %2372
        %2375 = vset.pattern.permute.xlu0 35
        %2376 = vperm.xlu0 %2375, %v798
        %v2377 = vpop.permute.xlu0 %2376
        %2379 = vset.pattern.permute.xlu0 35
        %2380 = vperm.xlu0 %2379, %v803
        %v2381 = vpop.permute.xlu0 %2380
        %2383 = vset.pattern.permute.xlu0 35
        %2384 = vperm.xlu0 %2383, %v808
        %v2385 = vpop.permute.xlu0 %2384
        %v2387 = vlaneseq
        %v2388 = vshrl.u32 %v2387, 7
        %v2389 = vsub.s32 3, %v2388
        %v2390 = vrot.slane %v930, %v2389
        %v2391 = vadd.f32 %v2325, %v2390
        %v2392 = vadd.f32 %v2329, %v2390
        %v2393 = vadd.f32 %v2333, %v2390
        %v2394 = vadd.f32 %v2337, %v2390
        %v2395 = vadd.f32 %v2341, %v2390
        %v2396 = vadd.f32 %v2345, %v2390
        %v2397 = vadd.f32 %v2349, %v2390
        %v2398 = vadd.f32 %v2353, %v2390
        %v2399 = vadd.f32 %v2357, %v2390
        %v2400 = vadd.f32 %v2361, %v2390
        %v2401 = vadd.f32 %v2365, %v2390
        %v2402 = vadd.f32 %v2369, %v2390
        %v2403 = vadd.f32 %v2373, %v2390
        %v2404 = vadd.f32 %v2377, %v2390
        %v2405 = vadd.f32 %v2381, %v2390
        %v2406 = vadd.f32 %v2385, %v2390
        %v2407 = vmul.f32 %v2391, 0.2
        %v2408 = vmul.f32 %v2392, 0.2
        %v2409 = vmul.f32 %v2393, 0.2
        %v2410 = vmul.f32 %v2394, 0.2
        %v2411 = vmul.f32 %v2395, 0.2
        %v2412 = vmul.f32 %v2396, 0.2
        %v2413 = vmul.f32 %v2397, 0.2
        %v2414 = vmul.f32 %v2398, 0.2
        %v2415 = vmul.f32 %v2399, 0.2
        %v2416 = vmul.f32 %v2400, 0.2
        %v2417 = vmul.f32 %v2401, 0.2
        %v2418 = vmul.f32 %v2402, 0.2
        %v2419 = vmul.f32 %v2403, 0.2
        %v2420 = vmul.f32 %v2404, 0.2
        %v2421 = vmul.f32 %v2405, 0.2
        %v2422 = vmul.f32 %v2406, 0.2
        %v2423 = vmax.f32 %v2391, %v2407
        %v2424 = vmax.f32 %v2392, %v2408
        %v2425 = vmax.f32 %v2393, %v2409
        %v2426 = vmax.f32 %v2394, %v2410
        %v2427 = vmax.f32 %v2395, %v2411
        %v2428 = vmax.f32 %v2396, %v2412
        %v2429 = vmax.f32 %v2397, %v2413
        %v2430 = vmax.f32 %v2398, %v2414
        %v2431 = vmax.f32 %v2399, %v2415
        %v2432 = vmax.f32 %v2400, %v2416
        %v2433 = vmax.f32 %v2401, %v2417
        %v2434 = vmax.f32 %v2402, %v2418
        %v2435 = vmax.f32 %v2403, %v2419
        %v2436 = vmax.f32 %v2404, %v2420
        %v2437 = vmax.f32 %v2405, %v2421
        %v2438 = vmax.f32 %v2406, %v2422
        %v2439 = vadd.f32 %v2423, %v933
        %v2440 = vadd.f32 %v2424, %v934
        %v2441 = vadd.f32 %v2425, %v935
        %v2442 = vadd.f32 %v2426, %v936
        %v2443 = vadd.f32 %v2427, %v937
        %v2444 = vadd.f32 %v2428, %v938
        %v2445 = vadd.f32 %v2429, %v939
        %v2446 = vadd.f32 %v2430, %v940
        %v2447 = vadd.f32 %v2431, %v941
        %v2448 = vadd.f32 %v2432, %v942
        %v2449 = vadd.f32 %v2433, %v943
        %v2450 = vadd.f32 %v2434, %v944
        %v2451 = vadd.f32 %v2435, %v945
        %v2452 = vadd.f32 %v2436, %v946
        %v2453 = vadd.f32 %v2437, %v947
        %v2454 = vadd.f32 %v2438, %v948
        %2455 = vmax.xlane.f32.xlu0 %v2439
        %v2456 = vpop.xlane.xlu0 %2455
        %2457 = vmax.xlane.f32.xlu0 %v2440
        %v2458 = vpop.xlane.xlu0 %2457
        %2459 = vmax.xlane.f32.xlu0 %v2441
        %v2460 = vpop.xlane.xlu0 %2459
        %2461 = vmax.xlane.f32.xlu0 %v2442
        %v2462 = vpop.xlane.xlu0 %2461
        %2463 = vmax.xlane.f32.xlu0 %v2443
        %v2464 = vpop.xlane.xlu0 %2463
        %2465 = vmax.xlane.f32.xlu0 %v2444
        %v2466 = vpop.xlane.xlu0 %2465
        %2467 = vmax.xlane.f32.xlu0 %v2445
        %v2468 = vpop.xlane.xlu0 %2467
        %2469 = vmax.xlane.f32.xlu0 %v2446
        %v2470 = vpop.xlane.xlu0 %2469
        %2471 = vmax.xlane.f32.xlu0 %v2447
        %v2472 = vpop.xlane.xlu0 %2471
        %2473 = vmax.xlane.f32.xlu0 %v2448
        %v2474 = vpop.xlane.xlu0 %2473
        %2475 = vmax.xlane.f32.xlu0 %v2449
        %v2476 = vpop.xlane.xlu0 %2475
        %2477 = vmax.xlane.f32.xlu0 %v2450
        %v2478 = vpop.xlane.xlu0 %2477
        %2479 = vmax.xlane.f32.xlu0 %v2451
        %v2480 = vpop.xlane.xlu0 %2479
        %2481 = vmax.xlane.f32.xlu0 %v2452
        %v2482 = vpop.xlane.xlu0 %2481
        %2483 = vmax.xlane.f32.xlu0 %v2453
        %v2484 = vpop.xlane.xlu0 %2483
        %2485 = vmax.xlane.f32.xlu0 %v2454
        %v2486 = vpop.xlane.xlu0 %2485
        %v2487 = vsub.f32 %v2439, %v2456
        %v2488 = vsub.f32 %v2440, %v2458
        %v2489 = vsub.f32 %v2441, %v2460
        %v2490 = vsub.f32 %v2442, %v2462
        %v2491 = vsub.f32 %v2443, %v2464
        %v2492 = vsub.f32 %v2444, %v2466
        %v2493 = vsub.f32 %v2445, %v2468
        %v2494 = vsub.f32 %v2446, %v2470
        %v2495 = vsub.f32 %v2447, %v2472
        %v2496 = vsub.f32 %v2448, %v2474
        %v2497 = vsub.f32 %v2449, %v2476
        %v2498 = vsub.f32 %v2450, %v2478
        %v2499 = vsub.f32 %v2451, %v2480
        %v2500 = vsub.f32 %v2452, %v2482
        %v2501 = vsub.f32 %v2453, %v2484
        %v2502 = vsub.f32 %v2454, %v2486
        %v2503 = vmul.f32 %v2487, 1.442695
        %v2504 = vpow.pop %v2503
        %v2505 = vmul.f32 %v2488, 1.442695
        %v2506 = vpow.pop %v2505
        %v2507 = vmul.f32 %v2489, 1.442695
        %v2508 = vpow.pop %v2507
        %v2509 = vmul.f32 %v2490, 1.442695
        %v2510 = vpow.pop %v2509
        %v2511 = vmul.f32 %v2491, 1.442695
        %v2512 = vpow.pop %v2511
        %v2513 = vmul.f32 %v2492, 1.442695
        %v2514 = vpow.pop %v2513
        %v2515 = vmul.f32 %v2493, 1.442695
        %v2516 = vpow.pop %v2515
        %v2517 = vmul.f32 %v2494, 1.442695
        %v2518 = vpow.pop %v2517
        %v2519 = vmul.f32 %v2495, 1.442695
        %v2520 = vpow.pop %v2519
        %v2521 = vmul.f32 %v2496, 1.442695
        %v2522 = vpow.pop %v2521
        %v2523 = vmul.f32 %v2497, 1.442695
        %v2524 = vpow.pop %v2523
        %v2525 = vmul.f32 %v2498, 1.442695
        %v2526 = vpow.pop %v2525
        %v2527 = vmul.f32 %v2499, 1.442695
        %v2528 = vpow.pop %v2527
        %v2529 = vmul.f32 %v2500, 1.442695
        %v2530 = vpow.pop %v2529
        %v2531 = vmul.f32 %v2501, 1.442695
        %v2532 = vpow.pop %v2531
        %v2533 = vmul.f32 %v2502, 1.442695
        %v2534 = vpow.pop %v2533
        %2535 = vadd.xlane.f32.xlu0 %v2504
        %v2536 = vpop.xlane.xlu0 %2535
        %2537 = vadd.xlane.f32.xlu0 %v2506
        %v2538 = vpop.xlane.xlu0 %2537
        %2539 = vadd.xlane.f32.xlu0 %v2508
        %v2540 = vpop.xlane.xlu0 %2539
        %2541 = vadd.xlane.f32.xlu0 %v2510
        %v2542 = vpop.xlane.xlu0 %2541
        %2543 = vadd.xlane.f32.xlu0 %v2512
        %v2544 = vpop.xlane.xlu0 %2543
        %2545 = vadd.xlane.f32.xlu0 %v2514
        %v2546 = vpop.xlane.xlu0 %2545
        %2547 = vadd.xlane.f32.xlu0 %v2516
        %v2548 = vpop.xlane.xlu0 %2547
        %2549 = vadd.xlane.f32.xlu0 %v2518
        %v2550 = vpop.xlane.xlu0 %2549
        %2551 = vadd.xlane.f32.xlu0 %v2520
        %v2552 = vpop.xlane.xlu0 %2551
        %2553 = vadd.xlane.f32.xlu0 %v2522
        %v2554 = vpop.xlane.xlu0 %2553
        %2555 = vadd.xlane.f32.xlu0 %v2524
        %v2556 = vpop.xlane.xlu0 %2555
        %2557 = vadd.xlane.f32.xlu0 %v2526
        %v2558 = vpop.xlane.xlu0 %2557
        %2559 = vadd.xlane.f32.xlu0 %v2528
        %v2560 = vpop.xlane.xlu0 %2559
        %2561 = vadd.xlane.f32.xlu0 %v2530
        %v2562 = vpop.xlane.xlu0 %2561
        %2563 = vadd.xlane.f32.xlu0 %v2532
        %v2564 = vpop.xlane.xlu0 %2563
        %2565 = vadd.xlane.f32.xlu0 %v2534
        %v2566 = vpop.xlane.xlu0 %2565
        %v2567 = vrcp.pop %v2536
        %v2568 = vrcp.pop %v2538
        %v2569 = vrcp.pop %v2540
        %v2570 = vrcp.pop %v2542
        %v2571 = vrcp.pop %v2544
        %v2572 = vrcp.pop %v2546
        %v2573 = vrcp.pop %v2548
        %v2574 = vrcp.pop %v2550
        %v2575 = vrcp.pop %v2552
        %v2576 = vrcp.pop %v2554
        %v2577 = vrcp.pop %v2556
        %v2578 = vrcp.pop %v2558
        %v2579 = vrcp.pop %v2560
        %v2580 = vrcp.pop %v2562
        %v2581 = vrcp.pop %v2564
        %v2582 = vrcp.pop %v2566
        %v2583 = vmul.f32 %v2504, %v2567
        %v2584 = vmul.f32 %v2506, %v2568
        %v2585 = vmul.f32 %v2508, %v2569
        %v2586 = vmul.f32 %v2510, %v2570
        %v2587 = vmul.f32 %v2512, %v2571
        %v2588 = vmul.f32 %v2514, %v2572
        %v2589 = vmul.f32 %v2516, %v2573
        %v2590 = vmul.f32 %v2518, %v2574
        %v2591 = vmul.f32 %v2520, %v2575
        %v2592 = vmul.f32 %v2522, %v2576
        %v2593 = vmul.f32 %v2524, %v2577
        %v2594 = vmul.f32 %v2526, %v2578
        %v2595 = vmul.f32 %v2528, %v2579
        %v2596 = vmul.f32 %v2530, %v2580
        %v2597 = vmul.f32 %v2532, %v2581
        %v2598 = vmul.f32 %v2534, %v2582
        %2599 = vmatprep.subr.mxu0 0.0
        %2600 = vmatpush1.msra.mxu0 %v808
        %2601 = vmatprep.subr.mxu0 0.0
        %2602 = vmatpush1.msra.mxu0 %v803
        %2603 = vmatprep.subr.mxu0 0.0
        %2604 = vmatpush1.msra.mxu0 %v798
        %2605 = vmatprep.subr.mxu0 0.0
        %2606 = vmatpush1.msra.mxu0 %v793
        %2607 = vmatprep.subr.mxu0 0.0
        %2608 = vmatpush1.msra.mxu0 %v788
        %2609 = vmatprep.subr.mxu0 0.0
        %2610 = vmatpush1.msra.mxu0 %v783
        %2611 = vmatprep.subr.mxu0 0.0
        %2612 = vmatpush1.msra.mxu0 %v778
        %2613 = vmatprep.subr.mxu0 0.0
        %2614 = vmatpush1.msra.mxu0 %v773
        %2615 = vmatprep.subr.mxu0 0.0
        %2616 = vmatpush1.msra.mxu0 %v768
        %2617 = vmatprep.subr.mxu0 0.0
        %2618 = vmatpush1.msra.mxu0 %v763
        %2619 = vmatprep.subr.mxu0 0.0
        %2620 = vmatpush1.msra.mxu0 %v758
        %2621 = vmatprep.subr.mxu0 0.0
        %2622 = vmatpush1.msra.mxu0 %v753
        %2623 = vmatprep.subr.mxu0 0.0
        %2624 = vmatpush1.msra.mxu0 %v748
        %2625 = vmatprep.subr.mxu0 0.0
        %2626 = vmatpush1.msra.mxu0 %v743
        %2627 = vmatprep.subr.mxu0 0.0
        %2628 = vmatpush1.msra.mxu0 %v738
        %2629 = vmatprep.subr.mxu0 0.0
        %2630 = vmatpush1.msra.mxu0 %v733
        %2631 = vmatprep.subr.mxu0 0.0
        %2632 = vmatpush2.msra.mxu0 0.0
        %2633 = vmatprep.subr.mxu0 0.0
        %2634 = vmatpush2.msra.mxu0 0.0
        %2635 = vmatprep.subr.mxu0 0.0
        %2636 = vmatpush2.msra.mxu0 0.0
        %2637 = vmatprep.subr.mxu0 0.0
        %2638 = vmatpush2.msra.mxu0 0.0
        %2639 = vmatprep.subr.mxu0 0.0
        %2640 = vmatpush2.msra.mxu0 0.0
        %2641 = vmatprep.subr.mxu0 0.0
        %2642 = vmatpush2.msra.mxu0 0.0
        %2643 = vmatprep.subr.mxu0 0.0
        %2644 = vmatpush2.msra.mxu0 0.0
        %2645 = vmatprep.subr.mxu0 0.0
        %2646 = vmatpush2.msra.mxu0 0.0
        %2647 = vmatprep.subr.mxu0 0.0
        %2648 = vmatpush2.msra.mxu0 0.0
        %2649 = vmatprep.subr.mxu0 0.0
        %2650 = vmatpush2.msra.mxu0 0.0
        %2651 = vmatprep.subr.mxu0 0.0
        %2652 = vmatpush2.msra.mxu0 0.0
        %2653 = vmatprep.subr.mxu0 0.0
        %2654 = vmatpush2.msra.mxu0 0.0
        %2655 = vmatprep.subr.mxu0 0.0
        %2656 = vmatpush2.msra.mxu0 0.0
        %2657 = vmatprep.subr.mxu0 0.0
        %2658 = vmatpush2.msra.mxu0 0.0
        %2659 = vmatprep.subr.mxu0 0.0
        %2660 = vmatpush2.msra.mxu0 0.0
        %2661 = vmatprep.subr.mxu0 0.0
        %2662 = vmatpush2.msra.mxu0 0.0
        %2663 = vmatprep.mubr.f32.mxu0 0.0
        %2664 = vmatmul.mubr.f32.gmra.mxu0 %v2583
        %v2665 = vpop.f32.mrf.mxu0
        %v2666 = vadd.f32 0.0, %v2665
        %v2667 = vpop.f32.mrf.mxu0
        %2668 = vmatprep.mubr.f32.mxu0 0.0
        %2669 = vmatmul.mubr.f32.gmra.mxu0 %v2584
        %v2670 = vpop.f32.mrf.mxu0
        %v2671 = vadd.f32 0.0, %v2670
        %v2672 = vpop.f32.mrf.mxu0
        %2673 = vmatprep.mubr.f32.mxu0 0.0
        %2674 = vmatmul.mubr.f32.gmra.mxu0 %v2585
        %v2675 = vpop.f32.mrf.mxu0
        %v2676 = vadd.f32 0.0, %v2675
        %v2677 = vpop.f32.mrf.mxu0
        %2678 = vmatprep.mubr.f32.mxu0 0.0
        %2679 = vmatmul.mubr.f32.gmra.mxu0 %v2586
        %v2680 = vpop.f32.mrf.mxu0
        %v2681 = vadd.f32 0.0, %v2680
        %v2682 = vpop.f32.mrf.mxu0
        %2683 = vmatprep.mubr.f32.mxu0 0.0
        %2684 = vmatmul.mubr.f32.gmra.mxu0 %v2587
        %v2685 = vpop.f32.mrf.mxu0
        %v2686 = vadd.f32 0.0, %v2685
        %v2687 = vpop.f32.mrf.mxu0
        %2688 = vmatprep.mubr.f32.mxu0 0.0
        %2689 = vmatmul.mubr.f32.gmra.mxu0 %v2588
        %v2690 = vpop.f32.mrf.mxu0
        %v2691 = vadd.f32 0.0, %v2690
        %v2692 = vpop.f32.mrf.mxu0
        %2693 = vmatprep.mubr.f32.mxu0 0.0
        %2694 = vmatmul.mubr.f32.gmra.mxu0 %v2589
        %v2695 = vpop.f32.mrf.mxu0
        %v2696 = vadd.f32 0.0, %v2695
        %v2697 = vpop.f32.mrf.mxu0
        %2698 = vmatprep.mubr.f32.mxu0 0.0
        %2699 = vmatmul.mubr.f32.gmra.mxu0 %v2590
        %v2700 = vpop.f32.mrf.mxu0
        %v2701 = vadd.f32 0.0, %v2700
        %v2702 = vpop.f32.mrf.mxu0
        %2703 = vmatprep.mubr.f32.mxu0 0.0
        %2704 = vmatmul.mubr.f32.gmra.mxu0 %v2591
        %v2705 = vpop.f32.mrf.mxu0
        %v2706 = vadd.f32 0.0, %v2705
        %v2707 = vpop.f32.mrf.mxu0
        %2708 = vmatprep.mubr.f32.mxu0 0.0
        %2709 = vmatmul.mubr.f32.gmra.mxu0 %v2592
        %v2710 = vpop.f32.mrf.mxu0
        %v2711 = vadd.f32 0.0, %v2710
        %v2712 = vpop.f32.mrf.mxu0
        %2713 = vmatprep.mubr.f32.mxu0 0.0
        %2714 = vmatmul.mubr.f32.gmra.mxu0 %v2593
        %v2715 = vpop.f32.mrf.mxu0
        %v2716 = vadd.f32 0.0, %v2715
        %v2717 = vpop.f32.mrf.mxu0
        %2718 = vmatprep.mubr.f32.mxu0 0.0
        %2719 = vmatmul.mubr.f32.gmra.mxu0 %v2594
        %v2720 = vpop.f32.mrf.mxu0
        %v2721 = vadd.f32 0.0, %v2720
        %v2722 = vpop.f32.mrf.mxu0
        %2723 = vmatprep.mubr.f32.mxu0 0.0
        %2724 = vmatmul.mubr.f32.gmra.mxu0 %v2595
        %v2725 = vpop.f32.mrf.mxu0
        %v2726 = vadd.f32 0.0, %v2725
        %v2727 = vpop.f32.mrf.mxu0
        %2728 = vmatprep.mubr.f32.mxu0 0.0
        %2729 = vmatmul.mubr.f32.gmra.mxu0 %v2596
        %v2730 = vpop.f32.mrf.mxu0
        %v2731 = vadd.f32 0.0, %v2730
        %v2732 = vpop.f32.mrf.mxu0
        %2733 = vmatprep.mubr.f32.mxu0 0.0
        %2734 = vmatmul.mubr.f32.gmra.mxu0 %v2597
        %v2735 = vpop.f32.mrf.mxu0
        %v2736 = vadd.f32 0.0, %v2735
        %v2737 = vpop.f32.mrf.mxu0
        %2738 = vmatprep.mubr.f32.mxu0 0.0
        %2739 = vmatmul.mubr.f32.gmra.mxu0 %v2598
        %v2740 = vpop.f32.mrf.mxu0
        %v2741 = vadd.f32 0.0, %v2740
        %v2742 = vpop.f32.mrf.mxu0
        %2743 = vdwg.mxu0
        %v2744 = vld [vmem:[%s2 + $0x2b] sm:$0x1]
        %v2745 = vlaneseq
        %v2746 = vshrl.u32 %v2745, 7
        %v2747 = vsub.s32 0, %v2746
        %v2748 = vrot.slane %v2744, %v2747
        %v2749 = vmul.f32 %v2666, %v2748
        %v2750 = vmul.f32 %v2671, %v2748
        %v2751 = vmul.f32 %v2676, %v2748
        %v2752 = vmul.f32 %v2681, %v2748
        %v2753 = vmul.f32 %v2686, %v2748
        %v2754 = vmul.f32 %v2691, %v2748
        %v2755 = vmul.f32 %v2696, %v2748
        %v2756 = vmul.f32 %v2701, %v2748
        %v2757 = vmul.f32 %v2706, %v2748
        %v2758 = vmul.f32 %v2711, %v2748
        %v2759 = vmul.f32 %v2716, %v2748
        %v2760 = vmul.f32 %v2721, %v2748
        %v2761 = vmul.f32 %v2726, %v2748
        %v2762 = vmul.f32 %v2731, %v2748
        %v2763 = vmul.f32 %v2736, %v2748
        %v2764 = vmul.f32 %v2741, %v2748
        %v2765 = vadd.f32 %v2307, %v2749
        %v2766 = vadd.f32 %v2308, %v2750
        %v2767 = vadd.f32 %v2309, %v2751
        %v2768 = vadd.f32 %v2310, %v2752
        %v2769 = vadd.f32 %v2311, %v2753
        %v2770 = vadd.f32 %v2312, %v2754
        %v2771 = vadd.f32 %v2313, %v2755
        %v2772 = vadd.f32 %v2314, %v2756
        %v2773 = vadd.f32 %v2315, %v2757
        %v2774 = vadd.f32 %v2316, %v2758
        %v2775 = vadd.f32 %v2317, %v2759
        %v2776 = vadd.f32 %v2318, %v2760
        %v2777 = vadd.f32 %v2319, %v2761
        %v2778 = vadd.f32 %v2320, %v2762
        %v2779 = vadd.f32 %v2321, %v2763
        %v2780 = vadd.f32 %v2322, %v2764
        %v2781 = vld [vmem:[%s2 + $0xf3] sm:$0x1]
        %v2782 = vlaneseq
        %v2783 = vshrl.u32 %v2782, 7
        %v2784 = vsub.s32 0, %v2783
        %v2785 = vrot.slane %v2781, %v2784
        %v2786 = vmul.f32 %v2765, %v2785
        %v2787 = vmul.f32 %v2766, %v2785
        %v2788 = vmul.f32 %v2767, %v2785
        %v2789 = vmul.f32 %v2768, %v2785
        %v2790 = vmul.f32 %v2769, %v2785
        %v2791 = vmul.f32 %v2770, %v2785
        %v2792 = vmul.f32 %v2771, %v2785
        %v2793 = vmul.f32 %v2772, %v2785
        %v2794 = vmul.f32 %v2773, %v2785
        %v2795 = vmul.f32 %v2774, %v2785
        %v2796 = vmul.f32 %v2775, %v2785
        %v2797 = vmul.f32 %v2776, %v2785
        %v2798 = vmul.f32 %v2777, %v2785
        %v2799 = vmul.f32 %v2778, %v2785
        %v2800 = vmul.f32 %v2779, %v2785
        %v2801 = vmul.f32 %v2780, %v2785
        %v2802 = vld [vmem:[%s2 + $0xf4] sm:$0x1]
        %v2803 = vlaneseq
        %v2804 = vshrl.u32 %v2803, 7
        %v2805 = vsub.s32 0, %v2804
        %v2806 = vrot.slane %v2802, %v2805
        %v2807 = vadd.f32 %v2786, %v2806
        %v2808 = vadd.f32 %v2787, %v2806
        %v2809 = vadd.f32 %v2788, %v2806
        %v2810 = vadd.f32 %v2789, %v2806
        %v2811 = vadd.f32 %v2790, %v2806
        %v2812 = vadd.f32 %v2791, %v2806
        %v2813 = vadd.f32 %v2792, %v2806
        %v2814 = vadd.f32 %v2793, %v2806
        %v2815 = vadd.f32 %v2794, %v2806
        %v2816 = vadd.f32 %v2795, %v2806
        %v2817 = vadd.f32 %v2796, %v2806
        %v2818 = vadd.f32 %v2797, %v2806
        %v2819 = vadd.f32 %v2798, %v2806
        %v2820 = vadd.f32 %v2799, %v2806
        %v2821 = vadd.f32 %v2800, %v2806
        %v2822 = vadd.f32 %v2801, %v2806
        %v2823 = vmax.f32 %v2807, 0.0
        %v2824 = vmax.f32 %v2808, 0.0
        %v2825 = vmax.f32 %v2809, 0.0
        %v2826 = vmax.f32 %v2810, 0.0
        %v2827 = vmax.f32 %v2811, 0.0
        %v2828 = vmax.f32 %v2812, 0.0
        %v2829 = vmax.f32 %v2813, 0.0
        %v2830 = vmax.f32 %v2814, 0.0
        %v2831 = vmax.f32 %v2815, 0.0
        %v2832 = vmax.f32 %v2816, 0.0
        %v2833 = vmax.f32 %v2817, 0.0
        %v2834 = vmax.f32 %v2818, 0.0
        %v2835 = vmax.f32 %v2819, 0.0
        %v2836 = vmax.f32 %v2820, 0.0
        %v2837 = vmax.f32 %v2821, 0.0
        %v2838 = vmax.f32 %v2822, 0.0
        %v2839 = vld [vmem:[%s177 + $0x80] sm:$0xff]
        %v2840 = vld [vmem:[%s177 + $0x88] sm:$0xff]
        %v2841 = vld [vmem:[%s177 + $0x90] sm:$0xff]
        %v2842 = vld [vmem:[%s177 + $0x98] sm:$0xff]
        %v2843 = vld [vmem:[%s177 + $0xa0] sm:$0xff]
        %v2844 = vld [vmem:[%s177 + $0xa8] sm:$0xff]
        %v2845 = vld [vmem:[%s177 + $0xb0] sm:$0xff]
        %v2846 = vld [vmem:[%s177 + $0xb8] sm:$0xff]
        %v2847 = vld [vmem:[%s177 + $0xc0] sm:$0xff]
        %v2848 = vld [vmem:[%s177 + $0xc8] sm:$0xff]
        %v2849 = vld [vmem:[%s177 + $0xd0] sm:$0xff]
        %v2850 = vld [vmem:[%s177 + $0xd8] sm:$0xff]
        %v2851 = vld [vmem:[%s177 + $0xe0] sm:$0xff]
        %v2852 = vld [vmem:[%s177 + $0xe8] sm:$0xff]
        %v2853 = vld [vmem:[%s177 + $0xf0] sm:$0xff]
        %v2854 = vld [vmem:[%s177 + $0xf8] sm:$0xff]
        %2855 = vmatprep.subr.mxu0 0.0
        %2856 = vmatpush1.msra.mxu0 %v2838
        %2857 = vmatprep.subr.mxu0 0.0
        %2858 = vmatpush1.msra.mxu0 %v2837
        %2859 = vmatprep.subr.mxu0 0.0
        %2860 = vmatpush1.msra.mxu0 %v2836
        %2861 = vmatprep.subr.mxu0 0.0
        %2862 = vmatpush1.msra.mxu0 %v2835
        %2863 = vmatprep.subr.mxu0 0.0
        %2864 = vmatpush1.msra.mxu0 %v2834
        %2865 = vmatprep.subr.mxu0 0.0
        %2866 = vmatpush1.msra.mxu0 %v2833
        %2867 = vmatprep.subr.mxu0 0.0
        %2868 = vmatpush1.msra.mxu0 %v2832
        %2869 = vmatprep.subr.mxu0 0.0
        %2870 = vmatpush1.msra.mxu0 %v2831
        %2871 = vmatprep.subr.mxu0 0.0
        %2872 = vmatpush1.msra.mxu0 %v2830
        %2873 = vmatprep.subr.mxu0 0.0
        %2874 = vmatpush1.msra.mxu0 %v2829
        %2875 = vmatprep.subr.mxu0 0.0
        %2876 = vmatpush1.msra.mxu0 %v2828
        %2877 = vmatprep.subr.mxu0 0.0
        %2878 = vmatpush1.msra.mxu0 %v2827
        %2879 = vmatprep.subr.mxu0 0.0
        %2880 = vmatpush1.msra.mxu0 %v2826
        %2881 = vmatprep.subr.mxu0 0.0
        %2882 = vmatpush1.msra.mxu0 %v2825
        %2883 = vmatprep.subr.mxu0 0.0
        %2884 = vmatpush1.msra.mxu0 %v2824
        %2885 = vmatprep.subr.mxu0 0.0
        %2886 = vmatpush1.msra.mxu0 %v2823
        %2887 = vmatprep.subr.mxu0 0.0
        %2888 = vmatpush2.msra.mxu0 0.0
        %2889 = vmatprep.subr.mxu0 0.0
        %2890 = vmatpush2.msra.mxu0 0.0
        %2891 = vmatprep.subr.mxu0 0.0
        %2892 = vmatpush2.msra.mxu0 0.0
        %2893 = vmatprep.subr.mxu0 0.0
        %2894 = vmatpush2.msra.mxu0 0.0
        %2895 = vmatprep.subr.mxu0 0.0
        %2896 = vmatpush2.msra.mxu0 0.0
        %2897 = vmatprep.subr.mxu0 0.0
        %2898 = vmatpush2.msra.mxu0 0.0
        %2899 = vmatprep.subr.mxu0 0.0
        %2900 = vmatpush2.msra.mxu0 0.0
        %2901 = vmatprep.subr.mxu0 0.0
        %2902 = vmatpush2.msra.mxu0 0.0
        %2903 = vmatprep.subr.mxu0 0.0
        %2904 = vmatpush2.msra.mxu0 0.0
        %2905 = vmatprep.subr.mxu0 0.0
        %2906 = vmatpush2.msra.mxu0 0.0
        %2907 = vmatprep.subr.mxu0 0.0
        %2908 = vmatpush2.msra.mxu0 0.0
        %2909 = vmatprep.subr.mxu0 0.0
        %2910 = vmatpush2.msra.mxu0 0.0
        %2911 = vmatprep.subr.mxu0 0.0
        %2912 = vmatpush2.msra.mxu0 0.0
        %2913 = vmatprep.subr.mxu0 0.0
        %2914 = vmatpush2.msra.mxu0 0.0
        %2915 = vmatprep.subr.mxu0 0.0
        %2916 = vmatpush2.msra.mxu0 0.0
        %2917 = vmatprep.subr.mxu0 0.0
        %2918 = vmatpush2.msra.mxu0 0.0
        %2919 = vmatprep.mubr.f32.mxu0 0.0
        %2920 = vmatmul.mubr.f32.gmra.mxu0 %v2839
        %v2921 = vpop.f32.mrf.mxu0
        %v2922 = vadd.f32 0.0, %v2921
        %v2923 = vpop.f32.mrf.mxu0
        %2924 = vmatprep.mubr.f32.mxu0 0.0
        %2925 = vmatmul.mubr.f32.gmra.mxu0 %v2840
        %v2926 = vpop.f32.mrf.mxu0
        %v2927 = vadd.f32 0.0, %v2926
        %v2928 = vpop.f32.mrf.mxu0
        %2929 = vmatprep.mubr.f32.mxu0 0.0
        %2930 = vmatmul.mubr.f32.gmra.mxu0 %v2841
        %v2931 = vpop.f32.mrf.mxu0
        %v2932 = vadd.f32 0.0, %v2931
        %v2933 = vpop.f32.mrf.mxu0
        %2934 = vmatprep.mubr.f32.mxu0 0.0
        %2935 = vmatmul.mubr.f32.gmra.mxu0 %v2842
        %v2936 = vpop.f32.mrf.mxu0
        %v2937 = vadd.f32 0.0, %v2936
        %v2938 = vpop.f32.mrf.mxu0
        %2939 = vmatprep.mubr.f32.mxu0 0.0
        %2940 = vmatmul.mubr.f32.gmra.mxu0 %v2843
        %v2941 = vpop.f32.mrf.mxu0
        %v2942 = vadd.f32 0.0, %v2941
        %v2943 = vpop.f32.mrf.mxu0
        %2944 = vmatprep.mubr.f32.mxu0 0.0
        %2945 = vmatmul.mubr.f32.gmra.mxu0 %v2844
        %v2946 = vpop.f32.mrf.mxu0
        %v2947 = vadd.f32 0.0, %v2946
        %v2948 = vpop.f32.mrf.mxu0
        %2949 = vmatprep.mubr.f32.mxu0 0.0
        %2950 = vmatmul.mubr.f32.gmra.mxu0 %v2845
        %v2951 = vpop.f32.mrf.mxu0
        %v2952 = vadd.f32 0.0, %v2951
        %v2953 = vpop.f32.mrf.mxu0
        %2954 = vmatprep.mubr.f32.mxu0 0.0
        %2955 = vmatmul.mubr.f32.gmra.mxu0 %v2846
        %v2956 = vpop.f32.mrf.mxu0
        %v2957 = vadd.f32 0.0, %v2956
        %v2958 = vpop.f32.mrf.mxu0
        %2959 = vmatprep.mubr.f32.mxu0 0.0
        %2960 = vmatmul.mubr.f32.gmra.mxu0 %v2847
        %v2961 = vpop.f32.mrf.mxu0
        %v2962 = vadd.f32 0.0, %v2961
        %v2963 = vpop.f32.mrf.mxu0
        %2964 = vmatprep.mubr.f32.mxu0 0.0
        %2965 = vmatmul.mubr.f32.gmra.mxu0 %v2848
        %v2966 = vpop.f32.mrf.mxu0
        %v2967 = vadd.f32 0.0, %v2966
        %v2968 = vpop.f32.mrf.mxu0
        %2969 = vmatprep.mubr.f32.mxu0 0.0
        %2970 = vmatmul.mubr.f32.gmra.mxu0 %v2849
        %v2971 = vpop.f32.mrf.mxu0
        %v2972 = vadd.f32 0.0, %v2971
        %v2973 = vpop.f32.mrf.mxu0
        %2974 = vmatprep.mubr.f32.mxu0 0.0
        %2975 = vmatmul.mubr.f32.gmra.mxu0 %v2850
        %v2976 = vpop.f32.mrf.mxu0
        %v2977 = vadd.f32 0.0, %v2976
        %v2978 = vpop.f32.mrf.mxu0
        %2979 = vmatprep.mubr.f32.mxu0 0.0
        %2980 = vmatmul.mubr.f32.gmra.mxu0 %v2851
        %v2981 = vpop.f32.mrf.mxu0
        %v2982 = vadd.f32 0.0, %v2981
        %v2983 = vpop.f32.mrf.mxu0
        %2984 = vmatprep.mubr.f32.mxu0 0.0
        %2985 = vmatmul.mubr.f32.gmra.mxu0 %v2852
        %v2986 = vpop.f32.mrf.mxu0
        %v2987 = vadd.f32 0.0, %v2986
        %v2988 = vpop.f32.mrf.mxu0
        %2989 = vmatprep.mubr.f32.mxu0 0.0
        %2990 = vmatmul.mubr.f32.gmra.mxu0 %v2853
        %v2991 = vpop.f32.mrf.mxu0
        %v2992 = vadd.f32 0.0, %v2991
        %v2993 = vpop.f32.mrf.mxu0
        %2994 = vmatprep.mubr.f32.mxu0 0.0
        %2995 = vmatmul.mubr.f32.gmra.mxu0 %v2854
        %v2996 = vpop.f32.mrf.mxu0
        %v2997 = vadd.f32 0.0, %v2996
        %v2998 = vpop.f32.mrf.mxu0
        %2999 = vdwg.mxu0
        %v3000 = vld [vmem:[%s2 + $0x30] sm:$0xff]
        %v3001 = vld [vmem:[%s2 + $0x38] sm:$0xff]
        %v3002 = vld [vmem:[%s2 + $0x40] sm:$0xff]
        %v3003 = vld [vmem:[%s2 + $0x48] sm:$0xff]
        %v3004 = vld [vmem:[%s2 + $0xf5] sm:$0x1]
        %v3005 = vlaneseq
        %v3006 = vshrl.u32 %v3005, 7
        %v3007 = vsub.s32 0, %v3006
        %v3008 = vrot.slane %v3004, %v3007
        %v3010 = vsel %vm617, %v2922, 0
        %v3013 = vsel %vm617, %v2927, 0
        %v3016 = vsel %vm617, %v2932, 0
        %v3019 = vsel %vm617, %v2937, 0
        %v3022 = vsel %vm617, %v2942, 0
        %v3025 = vsel %vm617, %v2947, 0
        %v3028 = vsel %vm617, %v2952, 0
        %v3031 = vsel %vm617, %v2957, 0
        %v3034 = vsel %vm617, %v2962, 0
        %v3037 = vsel %vm617, %v2967, 0
        %v3040 = vsel %vm617, %v2972, 0
        %v3043 = vsel %vm617, %v2977, 0
        %v3046 = vsel %vm617, %v2982, 0
        %v3049 = vsel %vm617, %v2987, 0
        %v3052 = vsel %vm617, %v2992, 0
        %v3055 = vsel %vm617, %v2997, 0
        %3057 = vmatprep.subr.mxu0 0.0
        %3058 = vmatpush1.msra.mxu0 0.0
        %3059 = vmatprep.subr.mxu0 0.0
        %3060 = vmatpush1.msra.mxu0 0.0
        %3061 = vmatprep.subr.mxu0 0.0
        %3062 = vmatpush1.msra.mxu0 0.0
        %3063 = vmatprep.subr.mxu0 0.0
        %3064 = vmatpush1.msra.mxu0 0.0
        %3065 = vmatprep.subr.mxu0 0.0
        %3066 = vmatpush1.msra.mxu0 0.0
        %3067 = vmatprep.subr.mxu0 0.0
        %3068 = vmatpush1.msra.mxu0 0.0
        %3069 = vmatprep.subr.mxu0 0.0
        %3070 = vmatpush1.msra.mxu0 0.0
        %3071 = vmatprep.subr.mxu0 0.0
        %3072 = vmatpush1.msra.mxu0 0.0
        %3073 = vmatprep.subr.mxu0 0.0
        %3074 = vmatpush1.msra.mxu0 0.0
        %3075 = vmatprep.subr.mxu0 0.0
        %3076 = vmatpush1.msra.mxu0 0.0
        %3077 = vmatprep.subr.mxu0 0.0
        %3078 = vmatpush1.msra.mxu0 0.0
        %3079 = vmatprep.subr.mxu0 0.0
        %3080 = vmatpush1.msra.mxu0 0.0
        %3081 = vmatprep.subr.mxu0 0.0
        %3082 = vmatpush1.msra.mxu0 %v3003
        %3083 = vmatprep.subr.mxu0 0.0
        %3084 = vmatpush1.msra.mxu0 %v3002
        %3085 = vmatprep.subr.mxu0 0.0
        %3086 = vmatpush1.msra.mxu0 %v3001
        %3087 = vmatprep.subr.mxu0 0.0
        %3088 = vmatpush1.msra.mxu0 %v3000
        %3089 = vmatprep.subr.mxu0 0.0
        %3090 = vmatpush2.msra.mxu0 0.0
        %3091 = vmatprep.subr.mxu0 0.0
        %3092 = vmatpush2.msra.mxu0 0.0
        %3093 = vmatprep.subr.mxu0 0.0
        %3094 = vmatpush2.msra.mxu0 0.0
        %3095 = vmatprep.subr.mxu0 0.0
        %3096 = vmatpush2.msra.mxu0 0.0
        %3097 = vmatprep.subr.mxu0 0.0
        %3098 = vmatpush2.msra.mxu0 0.0
        %3099 = vmatprep.subr.mxu0 0.0
        %3100 = vmatpush2.msra.mxu0 0.0
        %3101 = vmatprep.subr.mxu0 0.0
        %3102 = vmatpush2.msra.mxu0 0.0
        %3103 = vmatprep.subr.mxu0 0.0
        %3104 = vmatpush2.msra.mxu0 0.0
        %3105 = vmatprep.subr.mxu0 0.0
        %3106 = vmatpush2.msra.mxu0 0.0
        %3107 = vmatprep.subr.mxu0 0.0
        %3108 = vmatpush2.msra.mxu0 0.0
        %3109 = vmatprep.subr.mxu0 0.0
        %3110 = vmatpush2.msra.mxu0 0.0
        %3111 = vmatprep.subr.mxu0 0.0
        %3112 = vmatpush2.msra.mxu0 0.0
        %3113 = vmatprep.subr.mxu0 0.0
        %3114 = vmatpush2.msra.mxu0 0.0
        %3115 = vmatprep.subr.mxu0 0.0
        %3116 = vmatpush2.msra.mxu0 0.0
        %3117 = vmatprep.subr.mxu0 0.0
        %3118 = vmatpush2.msra.mxu0 0.0
        %3119 = vmatprep.subr.mxu0 0.0
        %3120 = vmatpush2.msra.mxu0 0.0
        %3121 = vmatprep.mubr.f32.mxu0 0.0
        %3122 = vmatmul.mubr.f32.gmra.mxu0 %v3010
        %v3123 = vpop.f32.mrf.mxu0
        %v3124 = vadd.f32 %v3008, %v3123
        %v3125 = vpop.f32.mrf.mxu0
        %3126 = vmatprep.mubr.f32.mxu0 0.0
        %3127 = vmatmul.mubr.f32.gmra.mxu0 %v3013
        %v3128 = vpop.f32.mrf.mxu0
        %v3129 = vadd.f32 %v3008, %v3128
        %v3130 = vpop.f32.mrf.mxu0
        %3131 = vmatprep.mubr.f32.mxu0 0.0
        %3132 = vmatmul.mubr.f32.gmra.mxu0 %v3016
        %v3133 = vpop.f32.mrf.mxu0
        %v3134 = vadd.f32 %v3008, %v3133
        %v3135 = vpop.f32.mrf.mxu0
        %3136 = vmatprep.mubr.f32.mxu0 0.0
        %3137 = vmatmul.mubr.f32.gmra.mxu0 %v3019
        %v3138 = vpop.f32.mrf.mxu0
        %v3139 = vadd.f32 %v3008, %v3138
        %v3140 = vpop.f32.mrf.mxu0
        %3141 = vmatprep.mubr.f32.mxu0 0.0
        %3142 = vmatmul.mubr.f32.gmra.mxu0 %v3022
        %v3143 = vpop.f32.mrf.mxu0
        %v3144 = vadd.f32 %v3008, %v3143
        %v3145 = vpop.f32.mrf.mxu0
        %3146 = vmatprep.mubr.f32.mxu0 0.0
        %3147 = vmatmul.mubr.f32.gmra.mxu0 %v3025
        %v3148 = vpop.f32.mrf.mxu0
        %v3149 = vadd.f32 %v3008, %v3148
        %v3150 = vpop.f32.mrf.mxu0
        %3151 = vmatprep.mubr.f32.mxu0 0.0
        %3152 = vmatmul.mubr.f32.gmra.mxu0 %v3028
        %v3153 = vpop.f32.mrf.mxu0
        %v3154 = vadd.f32 %v3008, %v3153
        %v3155 = vpop.f32.mrf.mxu0
        %3156 = vmatprep.mubr.f32.mxu0 0.0
        %3157 = vmatmul.mubr.f32.gmra.mxu0 %v3031
        %v3158 = vpop.f32.mrf.mxu0
        %v3159 = vadd.f32 %v3008, %v3158
        %v3160 = vpop.f32.mrf.mxu0
        %3161 = vmatprep.mubr.f32.mxu0 0.0
        %3162 = vmatmul.mubr.f32.gmra.mxu0 %v3034
        %v3163 = vpop.f32.mrf.mxu0
        %v3164 = vadd.f32 %v3008, %v3163
        %v3165 = vpop.f32.mrf.mxu0
        %3166 = vmatprep.mubr.f32.mxu0 0.0
        %3167 = vmatmul.mubr.f32.gmra.mxu0 %v3037
        %v3168 = vpop.f32.mrf.mxu0
        %v3169 = vadd.f32 %v3008, %v3168
        %v3170 = vpop.f32.mrf.mxu0
        %3171 = vmatprep.mubr.f32.mxu0 0.0
        %3172 = vmatmul.mubr.f32.gmra.mxu0 %v3040
        %v3173 = vpop.f32.mrf.mxu0
        %v3174 = vadd.f32 %v3008, %v3173
        %v3175 = vpop.f32.mrf.mxu0
        %3176 = vmatprep.mubr.f32.mxu0 0.0
        %3177 = vmatmul.mubr.f32.gmra.mxu0 %v3043
        %v3178 = vpop.f32.mrf.mxu0
        %v3179 = vadd.f32 %v3008, %v3178
        %v3180 = vpop.f32.mrf.mxu0
        %3181 = vmatprep.mubr.f32.mxu0 0.0
        %3182 = vmatmul.mubr.f32.gmra.mxu0 %v3046
        %v3183 = vpop.f32.mrf.mxu0
        %v3184 = vadd.f32 %v3008, %v3183
        %v3185 = vpop.f32.mrf.mxu0
        %3186 = vmatprep.mubr.f32.mxu0 0.0
        %3187 = vmatmul.mubr.f32.gmra.mxu0 %v3049
        %v3188 = vpop.f32.mrf.mxu0
        %v3189 = vadd.f32 %v3008, %v3188
        %v3190 = vpop.f32.mrf.mxu0
        %3191 = vmatprep.mubr.f32.mxu0 0.0
        %3192 = vmatmul.mubr.f32.gmra.mxu0 %v3052
        %v3193 = vpop.f32.mrf.mxu0
        %v3194 = vadd.f32 %v3008, %v3193
        %v3195 = vpop.f32.mrf.mxu0
        %3196 = vmatprep.mubr.f32.mxu0 0.0
        %3197 = vmatmul.mubr.f32.gmra.mxu0 %v3055
        %v3198 = vpop.f32.mrf.mxu0
        %v3199 = vadd.f32 %v3008, %v3198
        %v3200 = vpop.f32.mrf.mxu0
        %3201 = vdwg.mxu0
        %v3202 = vmax.f32 %v3124, 0.0
        %v3203 = vmax.f32 %v3129, 0.0
        %v3204 = vmax.f32 %v3134, 0.0
        %v3205 = vmax.f32 %v3139, 0.0
        %v3206 = vmax.f32 %v3144, 0.0
        %v3207 = vmax.f32 %v3149, 0.0
        %v3208 = vmax.f32 %v3154, 0.0
        %v3209 = vmax.f32 %v3159, 0.0
        %v3210 = vmax.f32 %v3164, 0.0
        %v3211 = vmax.f32 %v3169, 0.0
        %v3212 = vmax.f32 %v3174, 0.0
        %v3213 = vmax.f32 %v3179, 0.0
        %v3214 = vmax.f32 %v3184, 0.0
        %v3215 = vmax.f32 %v3189, 0.0
        %v3216 = vmax.f32 %v3194, 0.0
        %v3217 = vmax.f32 %v3199, 0.0
        %v3218 = vld [vmem:[%s2 + $0x50] sm:$0xff]
        %v3219 = vld [vmem:[%s2 + $0x58] sm:$0xff]
        %v3220 = vld [vmem:[%s2 + $0x60] sm:$0xff]
        %v3221 = vld [vmem:[%s2 + $0x68] sm:$0xff]
        %v3222 = vld [vmem:[%s2 + $0x70] sm:$0xff]
        %v3223 = vld [vmem:[%s2 + $0x78] sm:$0xff]
        %v3224 = vld [vmem:[%s2 + $0x80] sm:$0xff]
        %v3225 = vld [vmem:[%s2 + $0x88] sm:$0xff]
        %v3226 = vld [vmem:[%s2 + $0xf6] sm:$0x1]
        %v3227 = vlaneseq
        %v3228 = vshrl.u32 %v3227, 7
        %v3229 = vsub.s32 0, %v3228
        %v3230 = vrot.slane %v3226, %v3229
        %vm3231 = vcmask 523264
        %v3233 = vsel %vm3231, %v3202, 0
        %v3236 = vsel %vm3231, %v3203, 0
        %v3239 = vsel %vm3231, %v3204, 0
        %v3242 = vsel %vm3231, %v3205, 0
        %v3245 = vsel %vm3231, %v3206, 0
        %v3248 = vsel %vm3231, %v3207, 0
        %v3251 = vsel %vm3231, %v3208, 0
        %v3254 = vsel %vm3231, %v3209, 0
        %v3257 = vsel %vm3231, %v3210, 0
        %v3260 = vsel %vm3231, %v3211, 0
        %v3263 = vsel %vm3231, %v3212, 0
        %v3266 = vsel %vm3231, %v3213, 0
        %v3269 = vsel %vm3231, %v3214, 0
        %v3272 = vsel %vm3231, %v3215, 0
        %v3275 = vsel %vm3231, %v3216, 0
        %v3278 = vsel %vm3231, %v3217, 0
        %3280 = vmatprep.subr.mxu0 0.0
        %3281 = vmatpush1.msra.mxu0 0.0
        %3282 = vmatprep.subr.mxu0 0.0
        %3283 = vmatpush1.msra.mxu0 0.0
        %3284 = vmatprep.subr.mxu0 0.0
        %3285 = vmatpush1.msra.mxu0 0.0
        %3286 = vmatprep.subr.mxu0 0.0
        %3287 = vmatpush1.msra.mxu0 0.0
        %3288 = vmatprep.subr.mxu0 0.0
        %3289 = vmatpush1.msra.mxu0 0.0
        %3290 = vmatprep.subr.mxu0 0.0
        %3291 = vmatpush1.msra.mxu0 0.0
        %3292 = vmatprep.subr.mxu0 0.0
        %3293 = vmatpush1.msra.mxu0 0.0
        %3294 = vmatprep.subr.mxu0 0.0
        %3295 = vmatpush1.msra.mxu0 0.0
        %3296 = vmatprep.subr.mxu0 0.0
        %3297 = vmatpush1.msra.mxu0 %v3225
        %3298 = vmatprep.subr.mxu0 0.0
        %3299 = vmatpush1.msra.mxu0 %v3224
        %3300 = vmatprep.subr.mxu0 0.0
        %3301 = vmatpush1.msra.mxu0 %v3223
        %3302 = vmatprep.subr.mxu0 0.0
        %3303 = vmatpush1.msra.mxu0 %v3222
        %3304 = vmatprep.subr.mxu0 0.0
        %3305 = vmatpush1.msra.mxu0 %v3221
        %3306 = vmatprep.subr.mxu0 0.0
        %3307 = vmatpush1.msra.mxu0 %v3220
        %3308 = vmatprep.subr.mxu0 0.0
        %3309 = vmatpush1.msra.mxu0 %v3219
        %3310 = vmatprep.subr.mxu0 0.0
        %3311 = vmatpush1.msra.mxu0 %v3218
        %3312 = vmatprep.subr.mxu0 0.0
        %3313 = vmatpush2.msra.mxu0 0.0
        %3314 = vmatprep.subr.mxu0 0.0
        %3315 = vmatpush2.msra.mxu0 0.0
        %3316 = vmatprep.subr.mxu0 0.0
        %3317 = vmatpush2.msra.mxu0 0.0
        %3318 = vmatprep.subr.mxu0 0.0
        %3319 = vmatpush2.msra.mxu0 0.0
        %3320 = vmatprep.subr.mxu0 0.0
        %3321 = vmatpush2.msra.mxu0 0.0
        %3322 = vmatprep.subr.mxu0 0.0
        %3323 = vmatpush2.msra.mxu0 0.0
        %3324 = vmatprep.subr.mxu0 0.0
        %3325 = vmatpush2.msra.mxu0 0.0
        %3326 = vmatprep.subr.mxu0 0.0
        %3327 = vmatpush2.msra.mxu0 0.0
        %3328 = vmatprep.subr.mxu0 0.0
        %3329 = vmatpush2.msra.mxu0 0.0
        %3330 = vmatprep.subr.mxu0 0.0
        %3331 = vmatpush2.msra.mxu0 0.0
        %3332 = vmatprep.subr.mxu0 0.0
        %3333 = vmatpush2.msra.mxu0 0.0
        %3334 = vmatprep.subr.mxu0 0.0
        %3335 = vmatpush2.msra.mxu0 0.0
        %3336 = vmatprep.subr.mxu0 0.0
        %3337 = vmatpush2.msra.mxu0 0.0
        %3338 = vmatprep.subr.mxu0 0.0
        %3339 = vmatpush2.msra.mxu0 0.0
        %3340 = vmatprep.subr.mxu0 0.0
        %3341 = vmatpush2.msra.mxu0 0.0
        %3342 = vmatprep.subr.mxu0 0.0
        %3343 = vmatpush2.msra.mxu0 0.0
        %3344 = vmatprep.mubr.f32.mxu0 0.0
        %3345 = vmatmul.mubr.f32.gmra.mxu0 %v3233
        %v3346 = vpop.f32.mrf.mxu0
        %v3347 = vadd.f32 %v3230, %v3346
        %v3348 = vpop.f32.mrf.mxu0
        %3349 = vmatprep.mubr.f32.mxu0 0.0
        %3350 = vmatmul.mubr.f32.gmra.mxu0 %v3236
        %v3351 = vpop.f32.mrf.mxu0
        %v3352 = vadd.f32 %v3230, %v3351
        %v3353 = vpop.f32.mrf.mxu0
        %3354 = vmatprep.mubr.f32.mxu0 0.0
        %3355 = vmatmul.mubr.f32.gmra.mxu0 %v3239
        %v3356 = vpop.f32.mrf.mxu0
        %v3357 = vadd.f32 %v3230, %v3356
        %v3358 = vpop.f32.mrf.mxu0
        %3359 = vmatprep.mubr.f32.mxu0 0.0
        %3360 = vmatmul.mubr.f32.gmra.mxu0 %v3242
        %v3361 = vpop.f32.mrf.mxu0
        %v3362 = vadd.f32 %v3230, %v3361
        %v3363 = vpop.f32.mrf.mxu0
        %3364 = vmatprep.mubr.f32.mxu0 0.0
        %3365 = vmatmul.mubr.f32.gmra.mxu0 %v3245
        %v3366 = vpop.f32.mrf.mxu0
        %v3367 = vadd.f32 %v3230, %v3366
        %v3368 = vpop.f32.mrf.mxu0
        %3369 = vmatprep.mubr.f32.mxu0 0.0
        %3370 = vmatmul.mubr.f32.gmra.mxu0 %v3248
        %v3371 = vpop.f32.mrf.mxu0
        %v3372 = vadd.f32 %v3230, %v3371
        %v3373 = vpop.f32.mrf.mxu0
        %3374 = vmatprep.mubr.f32.mxu0 0.0
        %3375 = vmatmul.mubr.f32.gmra.mxu0 %v3251
        %v3376 = vpop.f32.mrf.mxu0
        %v3377 = vadd.f32 %v3230, %v3376
        %v3378 = vpop.f32.mrf.mxu0
        %3379 = vmatprep.mubr.f32.mxu0 0.0
        %3380 = vmatmul.mubr.f32.gmra.mxu0 %v3254
        %v3381 = vpop.f32.mrf.mxu0
        %v3382 = vadd.f32 %v3230, %v3381
        %v3383 = vpop.f32.mrf.mxu0
        %3384 = vmatprep.mubr.f32.mxu0 0.0
        %3385 = vmatmul.mubr.f32.gmra.mxu0 %v3257
        %v3386 = vpop.f32.mrf.mxu0
        %v3387 = vadd.f32 %v3230, %v3386
        %v3388 = vpop.f32.mrf.mxu0
        %3389 = vmatprep.mubr.f32.mxu0 0.0
        %3390 = vmatmul.mubr.f32.gmra.mxu0 %v3260
        %v3391 = vpop.f32.mrf.mxu0
        %v3392 = vadd.f32 %v3230, %v3391
        %v3393 = vpop.f32.mrf.mxu0
        %3394 = vmatprep.mubr.f32.mxu0 0.0
        %3395 = vmatmul.mubr.f32.gmra.mxu0 %v3263
        %v3396 = vpop.f32.mrf.mxu0
        %v3397 = vadd.f32 %v3230, %v3396
        %v3398 = vpop.f32.mrf.mxu0
        %3399 = vmatprep.mubr.f32.mxu0 0.0
        %3400 = vmatmul.mubr.f32.gmra.mxu0 %v3266
        %v3401 = vpop.f32.mrf.mxu0
        %v3402 = vadd.f32 %v3230, %v3401
        %v3403 = vpop.f32.mrf.mxu0
        %3404 = vmatprep.mubr.f32.mxu0 0.0
        %3405 = vmatmul.mubr.f32.gmra.mxu0 %v3269
        %v3406 = vpop.f32.mrf.mxu0
        %v3407 = vadd.f32 %v3230, %v3406
        %v3408 = vpop.f32.mrf.mxu0
        %3409 = vmatprep.mubr.f32.mxu0 0.0
        %3410 = vmatmul.mubr.f32.gmra.mxu0 %v3272
        %v3411 = vpop.f32.mrf.mxu0
        %v3412 = vadd.f32 %v3230, %v3411
        %v3413 = vpop.f32.mrf.mxu0
        %3414 = vmatprep.mubr.f32.mxu0 0.0
        %3415 = vmatmul.mubr.f32.gmra.mxu0 %v3275
        %v3416 = vpop.f32.mrf.mxu0
        %v3417 = vadd.f32 %v3230, %v3416
        %v3418 = vpop.f32.mrf.mxu0
        %3419 = vmatprep.mubr.f32.mxu0 0.0
        %3420 = vmatmul.mubr.f32.gmra.mxu0 %v3278
        %v3421 = vpop.f32.mrf.mxu0
        %v3422 = vadd.f32 %v3230, %v3421
        %v3423 = vpop.f32.mrf.mxu0
        %3424 = vdwg.mxu0
        %v3425 = vld [vmem:[%s2 + $0xf7] sm:$0x1]
        %v3426 = vlaneseq
        %v3427 = vshrl.u32 %v3426, 7
        %v3428 = vsub.s32 0, %v3427
        %v3429 = vrot.slane %v3425, %v3428
        %v3430 = vmul.f32 %v597, %v3429
        %v3431 = vmul.f32 %v598, %v3429
        %v3432 = vmul.f32 %v599, %v3429
        %v3433 = vmul.f32 %v600, %v3429
        %v3434 = vmul.f32 %v601, %v3429
        %v3435 = vmul.f32 %v602, %v3429
        %v3436 = vmul.f32 %v603, %v3429
        %v3437 = vmul.f32 %v604, %v3429
        %v3438 = vmul.f32 %v605, %v3429
        %v3439 = vmul.f32 %v606, %v3429
        %v3440 = vmul.f32 %v607, %v3429
        %v3441 = vmul.f32 %v608, %v3429
        %v3442 = vmul.f32 %v609, %v3429
        %v3443 = vmul.f32 %v610, %v3429
        %v3444 = vmul.f32 %v611, %v3429
        %v3445 = vmul.f32 %v612, %v3429
        %v3446 = vadd.f32 %v3347, %v3430
        %v3447 = vadd.f32 %v3352, %v3431
        %v3448 = vadd.f32 %v3357, %v3432
        %v3449 = vadd.f32 %v3362, %v3433
        %v3450 = vadd.f32 %v3367, %v3434
        %v3451 = vadd.f32 %v3372, %v3435
        %v3452 = vadd.f32 %v3377, %v3436
        %v3453 = vadd.f32 %v3382, %v3437
        %v3454 = vadd.f32 %v3387, %v3438
        %v3455 = vadd.f32 %v3392, %v3439
        %v3456 = vadd.f32 %v3397, %v3440
        %v3457 = vadd.f32 %v3402, %v3441
        %v3458 = vadd.f32 %v3407, %v3442
        %v3459 = vadd.f32 %v3412, %v3443
        %v3460 = vadd.f32 %v3417, %v3444
        %v3461 = vadd.f32 %v3422, %v3445
        %v3462 = vmax.f32 %v3446, 0.0
        %v3463 = vmax.f32 %v3447, 0.0
        %v3464 = vmax.f32 %v3448, 0.0
        %v3465 = vmax.f32 %v3449, 0.0
        %v3466 = vmax.f32 %v3450, 0.0
        %v3467 = vmax.f32 %v3451, 0.0
        %v3468 = vmax.f32 %v3452, 0.0
        %v3469 = vmax.f32 %v3453, 0.0
        %v3470 = vmax.f32 %v3454, 0.0
        %v3471 = vmax.f32 %v3455, 0.0
        %v3472 = vmax.f32 %v3456, 0.0
        %v3473 = vmax.f32 %v3457, 0.0
        %v3474 = vmax.f32 %v3458, 0.0
        %v3475 = vmax.f32 %v3459, 0.0
        %v3476 = vmax.f32 %v3460, 0.0
        %v3477 = vmax.f32 %v3461, 0.0
        %v3478 = vld [vmem:[%s177 + $0x180] sm:$0xff]
        %v3479 = vld [vmem:[%s177 + $0x188] sm:$0xff]
        %3480 = vst.msk [vmem:[#allocation2] sm:$0xff] %vm617, %v597
        %3481 = vst.msk [vmem:[#allocation2 + $0x8] sm:$0xff] %vm617, %v598
        %3482 = vst.msk [vmem:[#allocation2 + $0x10] sm:$0xff] %vm617, %v599
        %3483 = vst.msk [vmem:[#allocation2 + $0x18] sm:$0xff] %vm617, %v600
        %3484 = vst.msk [vmem:[#allocation2 + $0x20] sm:$0xff] %vm617, %v601
        %3485 = vst.msk [vmem:[#allocation2 + $0x28] sm:$0xff] %vm617, %v602
        %3486 = vst.msk [vmem:[#allocation2 + $0x30] sm:$0xff] %vm617, %v603
        %3487 = vst.msk [vmem:[#allocation2 + $0x38] sm:$0xff] %vm617, %v604
        %3488 = vst.msk [vmem:[#allocation2 + $0x40] sm:$0xff] %vm617, %v605
        %3489 = vst.msk [vmem:[#allocation2 + $0x48] sm:$0xff] %vm617, %v606
        %3490 = vst.msk [vmem:[#allocation2 + $0x50] sm:$0xff] %vm617, %v607
        %3491 = vst.msk [vmem:[#allocation2 + $0x58] sm:$0xff] %vm617, %v608
        %3492 = vst.msk [vmem:[#allocation2 + $0x60] sm:$0xff] %vm617, %v609
        %3493 = vst.msk [vmem:[#allocation2 + $0x68] sm:$0xff] %vm617, %v610
        %3494 = vst.msk [vmem:[#allocation2 + $0x70] sm:$0xff] %vm617, %v611
        %3495 = vst.msk [vmem:[#allocation2 + $0x78] sm:$0xff] %vm617, %v612
        %v3496 = vld [vmem:[#allocation2] ss:$8 sm:$0xf]
        %v3497 = vld [vmem:[#allocation2] ss:$8 sm:$0xf0]
        %v3498 = vor.u32 %v3496, %v3497
        %s3499 = scalar_lea.vmem [#allocation2], 64
        %v3500 = vld [vmem:[%s3499] ss:$8 sm:$0xf]
        %v3501 = vld [vmem:[%s3499] ss:$8 sm:$0xf0]
        %v3502 = vor.u32 %v3500, %v3501
        %s3503 = scalar_lea.vmem [#allocation2], 1
        %v3504 = vld [vmem:[%s3503] ss:$8 sm:$0xf]
        %v3505 = vld [vmem:[%s3503] ss:$8 sm:$0xf0]
        %v3506 = vor.u32 %v3504, %v3505
        %s3507 = scalar_lea.vmem [#allocation2], 65
        %v3508 = vld [vmem:[%s3507] ss:$8 sm:$0xf]
        %v3509 = vld [vmem:[%s3507] ss:$8 sm:$0xf0]
        %v3510 = vor.u32 %v3508, %v3509
        %v3511 = vmax.f32 %v3498, %v3506
        %v3512 = vmax.f32 %v3502, %v3510
        %s3513 = scalar_lea.vmem [#allocation2], 2
        %v3514 = vld [vmem:[%s3513] ss:$8 sm:$0xf]
        %v3515 = vld [vmem:[%s3513] ss:$8 sm:$0xf0]
        %v3516 = vor.u32 %v3514, %v3515
        %s3517 = scalar_lea.vmem [#allocation2], 66
        %v3518 = vld [vmem:[%s3517] ss:$8 sm:$0xf]
        %v3519 = vld [vmem:[%s3517] ss:$8 sm:$0xf0]
        %v3520 = vor.u32 %v3518, %v3519
        %v3521 = vmax.f32 %v3511, %v3516
        %v3522 = vmax.f32 %v3512, %v3520
        %s3523 = scalar_lea.vmem [#allocation2], 3
        %v3524 = vld [vmem:[%s3523] ss:$8 sm:$0xf]
        %v3525 = vld [vmem:[%s3523] ss:$8 sm:$0xf0]
        %v3526 = vor.u32 %v3524, %v3525
        %s3527 = scalar_lea.vmem [#allocation2], 67
        %v3528 = vld [vmem:[%s3527] ss:$8 sm:$0xf]
        %v3529 = vld [vmem:[%s3527] ss:$8 sm:$0xf0]
        %v3530 = vor.u32 %v3528, %v3529
        %v3531 = vmax.f32 %v3521, %v3526
        %v3532 = vmax.f32 %v3522, %v3530
        %s3533 = scalar_lea.vmem [#allocation2], 4
        %v3534 = vld [vmem:[%s3533] ss:$8 sm:$0xf]
        %v3535 = vld [vmem:[%s3533] ss:$8 sm:$0xf0]
        %v3536 = vor.u32 %v3534, %v3535
        %s3537 = scalar_lea.vmem [#allocation2], 68
        %v3538 = vld [vmem:[%s3537] ss:$8 sm:$0xf]
        %v3539 = vld [vmem:[%s3537] ss:$8 sm:$0xf0]
        %v3540 = vor.u32 %v3538, %v3539
        %v3541 = vmax.f32 %v3531, %v3536
        %v3542 = vmax.f32 %v3532, %v3540
        %s3543 = scalar_lea.vmem [#allocation2], 5
        %v3544 = vld [vmem:[%s3543] ss:$8 sm:$0xf]
        %v3545 = vld [vmem:[%s3543] ss:$8 sm:$0xf0]
        %v3546 = vor.u32 %v3544, %v3545
        %s3547 = scalar_lea.vmem [#allocation2], 69
        %v3548 = vld [vmem:[%s3547] ss:$8 sm:$0xf]
        %v3549 = vld [vmem:[%s3547] ss:$8 sm:$0xf0]
        %v3550 = vor.u32 %v3548, %v3549
        %v3551 = vmax.f32 %v3541, %v3546
        %v3552 = vmax.f32 %v3542, %v3550
        %s3553 = scalar_lea.vmem [#allocation2], 6
        %v3554 = vld [vmem:[%s3553] ss:$8 sm:$0xf]
        %v3555 = vld [vmem:[%s3553] ss:$8 sm:$0xf0]
        %v3556 = vor.u32 %v3554, %v3555
        %s3557 = scalar_lea.vmem [#allocation2], 70
        %v3558 = vld [vmem:[%s3557] ss:$8 sm:$0xf]
        %v3559 = vld [vmem:[%s3557] ss:$8 sm:$0xf0]
        %v3560 = vor.u32 %v3558, %v3559
        %v3561 = vmax.f32 %v3551, %v3556
        %v3562 = vmax.f32 %v3552, %v3560
        %s3563 = scalar_lea.vmem [#allocation2], 7
        %v3564 = vld [vmem:[%s3563] ss:$8 sm:$0xf]
        %v3565 = vld [vmem:[%s3563] ss:$8 sm:$0xf0]
        %v3566 = vor.u32 %v3564, %v3565
        %s3567 = scalar_lea.vmem [#allocation2], 71
        %v3568 = vld [vmem:[%s3567] ss:$8 sm:$0xf]
        %v3569 = vld [vmem:[%s3567] ss:$8 sm:$0xf0]
        %v3570 = vor.u32 %v3568, %v3569
        %v3571 = vmax.f32 %v3561, %v3566
        %v3572 = vmax.f32 %v3562, %v3570
        %3573 = vmatprep.subr.mxu0 0.0
        %3574 = vmatpush1.msra.mxu0 %v612
        %3575 = vmatprep.subr.mxu0 0.0
        %3576 = vmatpush1.msra.mxu0 %v611
        %3577 = vmatprep.subr.mxu0 0.0
        %3578 = vmatpush1.msra.mxu0 %v610
        %3579 = vmatprep.subr.mxu0 0.0
        %3580 = vmatpush1.msra.mxu0 %v609
        %3581 = vmatprep.subr.mxu0 0.0
        %3582 = vmatpush1.msra.mxu0 %v608
        %3583 = vmatprep.subr.mxu0 0.0
        %3584 = vmatpush1.msra.mxu0 %v607
        %3585 = vmatprep.subr.mxu0 0.0
        %3586 = vmatpush1.msra.mxu0 %v606
        %3587 = vmatprep.subr.mxu0 0.0
        %3588 = vmatpush1.msra.mxu0 %v605
        %3589 = vmatprep.subr.mxu0 0.0
        %3590 = vmatpush1.msra.mxu0 %v604
        %3591 = vmatprep.subr.mxu0 0.0
        %3592 = vmatpush1.msra.mxu0 %v603
        %3593 = vmatprep.subr.mxu0 0.0
        %3594 = vmatpush1.msra.mxu0 %v602
        %3595 = vmatprep.subr.mxu0 0.0
        %3596 = vmatpush1.msra.mxu0 %v601
        %3597 = vmatprep.subr.mxu0 0.0
        %3598 = vmatpush1.msra.mxu0 %v600
        %3599 = vmatprep.subr.mxu0 0.0
        %3600 = vmatpush1.msra.mxu0 %v599
        %3601 = vmatprep.subr.mxu0 0.0
        %3602 = vmatpush1.msra.mxu0 %v598
        %3603 = vmatprep.subr.mxu0 0.0
        %3604 = vmatpush1.msra.mxu0 %v597
        %3605 = vmatprep.subr.mxu0 0.0
        %3606 = vmatpush2.msra.mxu0 0.0
        %3607 = vmatprep.subr.mxu0 0.0
        %3608 = vmatpush2.msra.mxu0 0.0
        %3609 = vmatprep.subr.mxu0 0.0
        %3610 = vmatpush2.msra.mxu0 0.0
        %3611 = vmatprep.subr.mxu0 0.0
        %3612 = vmatpush2.msra.mxu0 0.0
        %3613 = vmatprep.subr.mxu0 0.0
        %3614 = vmatpush2.msra.mxu0 0.0
        %3615 = vmatprep.subr.mxu0 0.0
        %3616 = vmatpush2.msra.mxu0 0.0
        %3617 = vmatprep.subr.mxu0 0.0
        %3618 = vmatpush2.msra.mxu0 0.0
        %3619 = vmatprep.subr.mxu0 0.0
        %3620 = vmatpush2.msra.mxu0 0.0
        %3621 = vmatprep.subr.mxu0 0.0
        %3622 = vmatpush2.msra.mxu0 0.0
        %3623 = vmatprep.subr.mxu0 0.0
        %3624 = vmatpush2.msra.mxu0 0.0
        %3625 = vmatprep.subr.mxu0 0.0
        %3626 = vmatpush2.msra.mxu0 0.0
        %3627 = vmatprep.subr.mxu0 0.0
        %3628 = vmatpush2.msra.mxu0 0.0
        %3629 = vmatprep.subr.mxu0 0.0
        %3630 = vmatpush2.msra.mxu0 0.0
        %3631 = vmatprep.subr.mxu0 0.0
        %3632 = vmatpush2.msra.mxu0 0.0
        %3633 = vmatprep.subr.mxu0 0.0
        %3634 = vmatpush2.msra.mxu0 0.0
        %3635 = vmatprep.subr.mxu0 0.0
        %3636 = vmatpush2.msra.mxu0 0.0
        %3637 = vmatprep.mubr.f32.mxu0 0.0
        %3638 = vmatmul.mubr.f32.gmra.mxu0 %v3478
        %v3639 = vpop.f32.mrf.mxu0
        %v3640 = vadd.f32 %v3571, %v3639
        %v3641 = vpop.f32.mrf.mxu0
        %3642 = vmatprep.mubr.f32.mxu0 0.0
        %3643 = vmatmul.mubr.f32.gmra.mxu0 %v3479
        %v3644 = vpop.f32.mrf.mxu0
        %v3645 = vadd.f32 %v3572, %v3644
        %v3646 = vpop.f32.mrf.mxu0
        %3647 = vdwg.mxu0
        %v3648 = vld [vmem:[%s2 + $0x90] sm:$0xff]
        %v3649 = vld [vmem:[%s2 + $0x98] sm:$0xff]
        %v3650 = vld [vmem:[%s2 + $0xa0] sm:$0xff]
        %v3651 = vld [vmem:[%s2 + $0xa8] sm:$0xff]
        %3652 = vst.msk [vmem:[#allocation2] sm:$0xff] %vm617, %v2823
        %3653 = vst.msk [vmem:[#allocation2 + $0x8] sm:$0xff] %vm617, %v2824
        %3654 = vst.msk [vmem:[#allocation2 + $0x10] sm:$0xff] %vm617, %v2825
        %3655 = vst.msk [vmem:[#allocation2 + $0x18] sm:$0xff] %vm617, %v2826
        %3656 = vst.msk [vmem:[#allocation2 + $0x20] sm:$0xff] %vm617, %v2827
        %3657 = vst.msk [vmem:[#allocation2 + $0x28] sm:$0xff] %vm617, %v2828
        %3658 = vst.msk [vmem:[#allocation2 + $0x30] sm:$0xff] %vm617, %v2829
        %3659 = vst.msk [vmem:[#allocation2 + $0x38] sm:$0xff] %vm617, %v2830
        %3660 = vst.msk [vmem:[#allocation2 + $0x40] sm:$0xff] %vm617, %v2831
        %3661 = vst.msk [vmem:[#allocation2 + $0x48] sm:$0xff] %vm617, %v2832
        %3662 = vst.msk [vmem:[#allocation2 + $0x50] sm:$0xff] %vm617, %v2833
        %3663 = vst.msk [vmem:[#allocation2 + $0x58] sm:$0xff] %vm617, %v2834
        %3664 = vst.msk [vmem:[#allocation2 + $0x60] sm:$0xff] %vm617, %v2835
        %3665 = vst.msk [vmem:[#allocation2 + $0x68] sm:$0xff] %vm617, %v2836
        %3666 = vst.msk [vmem:[#allocation2 + $0x70] sm:$0xff] %vm617, %v2837
        %3667 = vst.msk [vmem:[#allocation2 + $0x78] sm:$0xff] %vm617, %v2838
        %v3668 = vld [vmem:[#allocation2] ss:$8 sm:$0xf]
        %v3669 = vld [vmem:[#allocation2] ss:$8 sm:$0xf0]
        %v3670 = vor.u32 %v3668, %v3669
        %v3671 = vld [vmem:[%s3499] ss:$8 sm:$0xf]
        %v3672 = vld [vmem:[%s3499] ss:$8 sm:$0xf0]
        %v3673 = vor.u32 %v3671, %v3672
        %v3674 = vld [vmem:[%s3503] ss:$8 sm:$0xf]
        %v3675 = vld [vmem:[%s3503] ss:$8 sm:$0xf0]
        %v3676 = vor.u32 %v3674, %v3675
        %v3677 = vld [vmem:[%s3507] ss:$8 sm:$0xf]
        %v3678 = vld [vmem:[%s3507] ss:$8 sm:$0xf0]
        %v3679 = vor.u32 %v3677, %v3678
        %v3680 = vmax.f32 %v3670, %v3676
        %v3681 = vmax.f32 %v3673, %v3679
        %v3682 = vld [vmem:[%s3513] ss:$8 sm:$0xf]
        %v3683 = vld [vmem:[%s3513] ss:$8 sm:$0xf0]
        %v3684 = vor.u32 %v3682, %v3683
        %v3685 = vld [vmem:[%s3517] ss:$8 sm:$0xf]
        %v3686 = vld [vmem:[%s3517] ss:$8 sm:$0xf0]
        %v3687 = vor.u32 %v3685, %v3686
        %v3688 = vmax.f32 %v3680, %v3684
        %v3689 = vmax.f32 %v3681, %v3687
        %v3690 = vld [vmem:[%s3523] ss:$8 sm:$0xf]
        %v3691 = vld [vmem:[%s3523] ss:$8 sm:$0xf0]
        %v3692 = vor.u32 %v3690, %v3691
        %v3693 = vld [vmem:[%s3527] ss:$8 sm:$0xf]
        %v3694 = vld [vmem:[%s3527] ss:$8 sm:$0xf0]
        %v3695 = vor.u32 %v3693, %v3694
        %v3696 = vmax.f32 %v3688, %v3692
        %v3697 = vmax.f32 %v3689, %v3695
        %v3698 = vld [vmem:[%s3533] ss:$8 sm:$0xf]
        %v3699 = vld [vmem:[%s3533] ss:$8 sm:$0xf0]
        %v3700 = vor.u32 %v3698, %v3699
        %v3701 = vld [vmem:[%s3537] ss:$8 sm:$0xf]
        %v3702 = vld [vmem:[%s3537] ss:$8 sm:$0xf0]
        %v3703 = vor.u32 %v3701, %v3702
        %v3704 = vmax.f32 %v3696, %v3700
        %v3705 = vmax.f32 %v3697, %v3703
        %v3706 = vld [vmem:[%s3543] ss:$8 sm:$0xf]
        %v3707 = vld [vmem:[%s3543] ss:$8 sm:$0xf0]
        %v3708 = vor.u32 %v3706, %v3707
        %v3709 = vld [vmem:[%s3547] ss:$8 sm:$0xf]
        %v3710 = vld [vmem:[%s3547] ss:$8 sm:$0xf0]
        %v3711 = vor.u32 %v3709, %v3710
        %v3712 = vmax.f32 %v3704, %v3708
        %v3713 = vmax.f32 %v3705, %v3711
        %v3714 = vld [vmem:[%s3553] ss:$8 sm:$0xf]
        %v3715 = vld [vmem:[%s3553] ss:$8 sm:$0xf0]
        %v3716 = vor.u32 %v3714, %v3715
        %v3717 = vld [vmem:[%s3557] ss:$8 sm:$0xf]
        %v3718 = vld [vmem:[%s3557] ss:$8 sm:$0xf0]
        %v3719 = vor.u32 %v3717, %v3718
        %v3720 = vmax.f32 %v3712, %v3716
        %v3721 = vmax.f32 %v3713, %v3719
        %v3722 = vld [vmem:[%s3563] ss:$8 sm:$0xf]
        %v3723 = vld [vmem:[%s3563] ss:$8 sm:$0xf0]
        %v3724 = vor.u32 %v3722, %v3723
        %v3725 = vld [vmem:[%s3567] ss:$8 sm:$0xf]
        %v3726 = vld [vmem:[%s3567] ss:$8 sm:$0xf0]
        %v3727 = vor.u32 %v3725, %v3726
        %v3728 = vmax.f32 %v3720, %v3724
        %v3729 = vmax.f32 %v3721, %v3727
        %3730 = vmatprep.subr.mxu0 0.0
        %3731 = vmatpush1.msra.mxu0 %v2838
        %3732 = vmatprep.subr.mxu0 0.0
        %3733 = vmatpush1.msra.mxu0 %v2837
        %3734 = vmatprep.subr.mxu0 0.0
        %3735 = vmatpush1.msra.mxu0 %v2836
        %3736 = vmatprep.subr.mxu0 0.0
        %3737 = vmatpush1.msra.mxu0 %v2835
        %3738 = vmatprep.subr.mxu0 0.0
        %3739 = vmatpush1.msra.mxu0 %v2834
        %3740 = vmatprep.subr.mxu0 0.0
        %3741 = vmatpush1.msra.mxu0 %v2833
        %3742 = vmatprep.subr.mxu0 0.0
        %3743 = vmatpush1.msra.mxu0 %v2832
        %3744 = vmatprep.subr.mxu0 0.0
        %3745 = vmatpush1.msra.mxu0 %v2831
        %3746 = vmatprep.subr.mxu0 0.0
        %3747 = vmatpush1.msra.mxu0 %v2830
        %3748 = vmatprep.subr.mxu0 0.0
        %3749 = vmatpush1.msra.mxu0 %v2829
        %3750 = vmatprep.subr.mxu0 0.0
        %3751 = vmatpush1.msra.mxu0 %v2828
        %3752 = vmatprep.subr.mxu0 0.0
        %3753 = vmatpush1.msra.mxu0 %v2827
        %3754 = vmatprep.subr.mxu0 0.0
        %3755 = vmatpush1.msra.mxu0 %v2826
        %3756 = vmatprep.subr.mxu0 0.0
        %3757 = vmatpush1.msra.mxu0 %v2825
        %3758 = vmatprep.subr.mxu0 0.0
        %3759 = vmatpush1.msra.mxu0 %v2824
        %3760 = vmatprep.subr.mxu0 0.0
        %3761 = vmatpush1.msra.mxu0 %v2823
        %3762 = vmatprep.subr.mxu0 0.0
        %3763 = vmatpush2.msra.mxu0 0.0
        %3764 = vmatprep.subr.mxu0 0.0
        %3765 = vmatpush2.msra.mxu0 0.0
        %3766 = vmatprep.subr.mxu0 0.0
        %3767 = vmatpush2.msra.mxu0 0.0
        %3768 = vmatprep.subr.mxu0 0.0
        %3769 = vmatpush2.msra.mxu0 0.0
        %3770 = vmatprep.subr.mxu0 0.0
        %3771 = vmatpush2.msra.mxu0 0.0
        %3772 = vmatprep.subr.mxu0 0.0
        %3773 = vmatpush2.msra.mxu0 0.0
        %3774 = vmatprep.subr.mxu0 0.0
        %3775 = vmatpush2.msra.mxu0 0.0
        %3776 = vmatprep.subr.mxu0 0.0
        %3777 = vmatpush2.msra.mxu0 0.0
        %3778 = vmatprep.subr.mxu0 0.0
        %3779 = vmatpush2.msra.mxu0 0.0
        %3780 = vmatprep.subr.mxu0 0.0
        %3781 = vmatpush2.msra.mxu0 0.0
        %3782 = vmatprep.subr.mxu0 0.0
        %3783 = vmatpush2.msra.mxu0 0.0
        %3784 = vmatprep.subr.mxu0 0.0
        %3785 = vmatpush2.msra.mxu0 0.0
        %3786 = vmatprep.subr.mxu0 0.0
        %3787 = vmatpush2.msra.mxu0 0.0
        %3788 = vmatprep.subr.mxu0 0.0
        %3789 = vmatpush2.msra.mxu0 0.0
        %3790 = vmatprep.subr.mxu0 0.0
        %3791 = vmatpush2.msra.mxu0 0.0
        %3792 = vmatprep.subr.mxu0 0.0
        %3793 = vmatpush2.msra.mxu0 0.0
        %3794 = vmatprep.mubr.f32.mxu0 0.0
        %3795 = vmatmul.mubr.f32.gmra.mxu0 %v3478
        %v3796 = vpop.f32.mrf.mxu0
        %v3797 = vadd.f32 %v3728, %v3796
        %v3798 = vpop.f32.mrf.mxu0
        %3799 = vmatprep.mubr.f32.mxu0 0.0
        %3800 = vmatmul.mubr.f32.gmra.mxu0 %v3479
        %v3801 = vpop.f32.mrf.mxu0
        %v3802 = vadd.f32 %v3729, %v3801
        %v3803 = vpop.f32.mrf.mxu0
        %3804 = vdwg.mxu0
        %v3805 = vld [vmem:[%s2 + $0xb0] sm:$0xff]
        %v3806 = vld [vmem:[%s2 + $0xb8] sm:$0xff]
        %v3807 = vld [vmem:[%s2 + $0xc0] sm:$0xff]
        %v3808 = vld [vmem:[%s2 + $0xc8] sm:$0xff]
        %v3810 = vsel %vm617, %v3797, 0
        %v3813 = vsel %vm617, %v3802, 0
        %3815 = vmatprep.subr.mxu0 0.0
        %3816 = vmatpush1.msra.mxu0 0.0
        %3817 = vmatprep.subr.mxu0 0.0
        %3818 = vmatpush1.msra.mxu0 0.0
        %3819 = vmatprep.subr.mxu0 0.0
        %3820 = vmatpush1.msra.mxu0 0.0
        %3821 = vmatprep.subr.mxu0 0.0
        %3822 = vmatpush1.msra.mxu0 0.0
        %3823 = vmatprep.subr.mxu0 0.0
        %3824 = vmatpush1.msra.mxu0 0.0
        %3825 = vmatprep.subr.mxu0 0.0
        %3826 = vmatpush1.msra.mxu0 0.0
        %3827 = vmatprep.subr.mxu0 0.0
        %3828 = vmatpush1.msra.mxu0 0.0
        %3829 = vmatprep.subr.mxu0 0.0
        %3830 = vmatpush1.msra.mxu0 0.0
        %3831 = vmatprep.subr.mxu0 0.0
        %3832 = vmatpush1.msra.mxu0 0.0
        %3833 = vmatprep.subr.mxu0 0.0
        %3834 = vmatpush1.msra.mxu0 0.0
        %3835 = vmatprep.subr.mxu0 0.0
        %3836 = vmatpush1.msra.mxu0 0.0
        %3837 = vmatprep.subr.mxu0 0.0
        %3838 = vmatpush1.msra.mxu0 0.0
        %3839 = vmatprep.subr.mxu0 0.0
        %3840 = vmatpush1.msra.mxu0 %v3808
        %3841 = vmatprep.subr.mxu0 0.0
        %3842 = vmatpush1.msra.mxu0 %v3807
        %3843 = vmatprep.subr.mxu0 0.0
        %3844 = vmatpush1.msra.mxu0 %v3806
        %3845 = vmatprep.subr.mxu0 0.0
        %3846 = vmatpush1.msra.mxu0 %v3805
        %3847 = vmatprep.subr.mxu0 0.0
        %3848 = vmatpush2.msra.mxu0 0.0
        %3849 = vmatprep.subr.mxu0 0.0
        %3850 = vmatpush2.msra.mxu0 0.0
        %3851 = vmatprep.subr.mxu0 0.0
        %3852 = vmatpush2.msra.mxu0 0.0
        %3853 = vmatprep.subr.mxu0 0.0
        %3854 = vmatpush2.msra.mxu0 0.0
        %3855 = vmatprep.subr.mxu0 0.0
        %3856 = vmatpush2.msra.mxu0 0.0
        %3857 = vmatprep.subr.mxu0 0.0
        %3858 = vmatpush2.msra.mxu0 0.0
        %3859 = vmatprep.subr.mxu0 0.0
        %3860 = vmatpush2.msra.mxu0 0.0
        %3861 = vmatprep.subr.mxu0 0.0
        %3862 = vmatpush2.msra.mxu0 0.0
        %3863 = vmatprep.subr.mxu0 0.0
        %3864 = vmatpush2.msra.mxu0 0.0
        %3865 = vmatprep.subr.mxu0 0.0
        %3866 = vmatpush2.msra.mxu0 0.0
        %3867 = vmatprep.subr.mxu0 0.0
        %3868 = vmatpush2.msra.mxu0 0.0
        %3869 = vmatprep.subr.mxu0 0.0
        %3870 = vmatpush2.msra.mxu0 0.0
        %3871 = vmatprep.subr.mxu0 0.0
        %3872 = vmatpush2.msra.mxu0 0.0
        %3873 = vmatprep.subr.mxu0 0.0
        %3874 = vmatpush2.msra.mxu0 0.0
        %3875 = vmatprep.subr.mxu0 0.0
        %3876 = vmatpush2.msra.mxu0 0.0
        %3877 = vmatprep.subr.mxu0 0.0
        %3878 = vmatpush2.msra.mxu0 0.0
        %3879 = vmatprep.mubr.f32.mxu0 0.0
        %3880 = vmatmul.mubr.f32.gmra.mxu0 %v3810
        %v3881 = vpop.f32.mrf.mxu0
        %v3882 = vadd.f32 0.0, %v3881
        %v3883 = vpop.f32.mrf.mxu0
        %3884 = vmatprep.mubr.f32.mxu0 0.0
        %3885 = vmatmul.mubr.f32.gmra.mxu0 %v3813
        %v3886 = vpop.f32.mrf.mxu0
        %v3887 = vadd.f32 0.0, %v3886
        %v3888 = vpop.f32.mrf.mxu0
        %3889 = vdwg.mxu0
        %v3891 = vsel %vm617, %v3640, 0
        %v3894 = vsel %vm617, %v3645, 0
        %3896 = vmatprep.subr.mxu0 0.0
        %3897 = vmatpush1.msra.mxu0 0.0
        %3898 = vmatprep.subr.mxu0 0.0
        %3899 = vmatpush1.msra.mxu0 0.0
        %3900 = vmatprep.subr.mxu0 0.0
        %3901 = vmatpush1.msra.mxu0 0.0
        %3902 = vmatprep.subr.mxu0 0.0
        %3903 = vmatpush1.msra.mxu0 0.0
        %3904 = vmatprep.subr.mxu0 0.0
        %3905 = vmatpush1.msra.mxu0 0.0
        %3906 = vmatprep.subr.mxu0 0.0
        %3907 = vmatpush1.msra.mxu0 0.0
        %3908 = vmatprep.subr.mxu0 0.0
        %3909 = vmatpush1.msra.mxu0 0.0
        %3910 = vmatprep.subr.mxu0 0.0
        %3911 = vmatpush1.msra.mxu0 0.0
        %3912 = vmatprep.subr.mxu0 0.0
        %3913 = vmatpush1.msra.mxu0 0.0
        %3914 = vmatprep.subr.mxu0 0.0
        %3915 = vmatpush1.msra.mxu0 0.0
        %3916 = vmatprep.subr.mxu0 0.0
        %3917 = vmatpush1.msra.mxu0 0.0
        %3918 = vmatprep.subr.mxu0 0.0
        %3919 = vmatpush1.msra.mxu0 0.0
        %3920 = vmatprep.subr.mxu0 0.0
        %3921 = vmatpush1.msra.mxu0 %v3651
        %3922 = vmatprep.subr.mxu0 0.0
        %3923 = vmatpush1.msra.mxu0 %v3650
        %3924 = vmatprep.subr.mxu0 0.0
        %3925 = vmatpush1.msra.mxu0 %v3649
        %3926 = vmatprep.subr.mxu0 0.0
        %3927 = vmatpush1.msra.mxu0 %v3648
        %3928 = vmatprep.subr.mxu0 0.0
        %3929 = vmatpush2.msra.mxu0 0.0
        %3930 = vmatprep.subr.mxu0 0.0
        %3931 = vmatpush2.msra.mxu0 0.0
        %3932 = vmatprep.subr.mxu0 0.0
        %3933 = vmatpush2.msra.mxu0 0.0
        %3934 = vmatprep.subr.mxu0 0.0
        %3935 = vmatpush2.msra.mxu0 0.0
        %3936 = vmatprep.subr.mxu0 0.0
        %3937 = vmatpush2.msra.mxu0 0.0
        %3938 = vmatprep.subr.mxu0 0.0
        %3939 = vmatpush2.msra.mxu0 0.0
        %3940 = vmatprep.subr.mxu0 0.0
        %3941 = vmatpush2.msra.mxu0 0.0
        %3942 = vmatprep.subr.mxu0 0.0
        %3943 = vmatpush2.msra.mxu0 0.0
        %3944 = vmatprep.subr.mxu0 0.0
        %3945 = vmatpush2.msra.mxu0 0.0
        %3946 = vmatprep.subr.mxu0 0.0
        %3947 = vmatpush2.msra.mxu0 0.0
        %3948 = vmatprep.subr.mxu0 0.0
        %3949 = vmatpush2.msra.mxu0 0.0
        %3950 = vmatprep.subr.mxu0 0.0
        %3951 = vmatpush2.msra.mxu0 0.0
        %3952 = vmatprep.subr.mxu0 0.0
        %3953 = vmatpush2.msra.mxu0 0.0
        %3954 = vmatprep.subr.mxu0 0.0
        %3955 = vmatpush2.msra.mxu0 0.0
        %3956 = vmatprep.subr.mxu0 0.0
        %3957 = vmatpush2.msra.mxu0 0.0
        %3958 = vmatprep.subr.mxu0 0.0
        %3959 = vmatpush2.msra.mxu0 0.0
        %3960 = vmatprep.mubr.f32.mxu0 0.0
        %3961 = vmatmul.mubr.f32.gmra.mxu0 %v3891
        %v3962 = vpop.f32.mrf.mxu0
        %v3963 = vadd.f32 %v3882, %v3962
        %v3964 = vpop.f32.mrf.mxu0
        %3965 = vmatprep.mubr.f32.mxu0 0.0
        %3966 = vmatmul.mubr.f32.gmra.mxu0 %v3894
        %v3967 = vpop.f32.mrf.mxu0
        %v3968 = vadd.f32 %v3887, %v3967
        %v3969 = vpop.f32.mrf.mxu0
        %3970 = vdwg.mxu0
        %3971 = vst.msk [vmem:[#allocation2] sm:$0xff] %vm617, %v3462
        %3972 = vst.msk [vmem:[#allocation2 + $0x8] sm:$0xff] %vm617, %v3463
        %3973 = vst.msk [vmem:[#allocation2 + $0x10] sm:$0xff] %vm617, %v3464
        %3974 = vst.msk [vmem:[#allocation2 + $0x18] sm:$0xff] %vm617, %v3465
        %3975 = vst.msk [vmem:[#allocation2 + $0x20] sm:$0xff] %vm617, %v3466
        %3976 = vst.msk [vmem:[#allocation2 + $0x28] sm:$0xff] %vm617, %v3467
        %3977 = vst.msk [vmem:[#allocation2 + $0x30] sm:$0xff] %vm617, %v3468
        %3978 = vst.msk [vmem:[#allocation2 + $0x38] sm:$0xff] %vm617, %v3469
        %3979 = vst.msk [vmem:[#allocation2 + $0x40] sm:$0xff] %vm617, %v3470
        %3980 = vst.msk [vmem:[#allocation2 + $0x48] sm:$0xff] %vm617, %v3471
        %3981 = vst.msk [vmem:[#allocation2 + $0x50] sm:$0xff] %vm617, %v3472
        %3982 = vst.msk [vmem:[#allocation2 + $0x58] sm:$0xff] %vm617, %v3473
        %3983 = vst.msk [vmem:[#allocation2 + $0x60] sm:$0xff] %vm617, %v3474
        %3984 = vst.msk [vmem:[#allocation2 + $0x68] sm:$0xff] %vm617, %v3475
        %3985 = vst.msk [vmem:[#allocation2 + $0x70] sm:$0xff] %vm617, %v3476
        %3986 = vst.msk [vmem:[#allocation2 + $0x78] sm:$0xff] %vm617, %v3477
        %v3987 = vld [vmem:[#allocation2] ss:$8 sm:$0xf]
        %v3988 = vld [vmem:[#allocation2] ss:$8 sm:$0xf0]
        %v3989 = vor.u32 %v3987, %v3988
        %v3990 = vld [vmem:[%s3499] ss:$8 sm:$0xf]
        %v3991 = vld [vmem:[%s3499] ss:$8 sm:$0xf0]
        %v3992 = vor.u32 %v3990, %v3991
        %v3993 = vld [vmem:[%s3503] ss:$8 sm:$0xf]
        %v3994 = vld [vmem:[%s3503] ss:$8 sm:$0xf0]
        %v3995 = vor.u32 %v3993, %v3994
        %v3996 = vld [vmem:[%s3507] ss:$8 sm:$0xf]
        %v3997 = vld [vmem:[%s3507] ss:$8 sm:$0xf0]
        %v3998 = vor.u32 %v3996, %v3997
        %v3999 = vmax.f32 %v3989, %v3995
        %v4000 = vmax.f32 %v3992, %v3998
        %v4001 = vld [vmem:[%s3513] ss:$8 sm:$0xf]
        %v4002 = vld [vmem:[%s3513] ss:$8 sm:$0xf0]
        %v4003 = vor.u32 %v4001, %v4002
        %v4004 = vld [vmem:[%s3517] ss:$8 sm:$0xf]
        %v4005 = vld [vmem:[%s3517] ss:$8 sm:$0xf0]
        %v4006 = vor.u32 %v4004, %v4005
        %v4007 = vmax.f32 %v3999, %v4003
        %v4008 = vmax.f32 %v4000, %v4006
        %v4009 = vld [vmem:[%s3523] ss:$8 sm:$0xf]
        %v4010 = vld [vmem:[%s3523] ss:$8 sm:$0xf0]
        %v4011 = vor.u32 %v4009, %v4010
        %v4012 = vld [vmem:[%s3527] ss:$8 sm:$0xf]
        %v4013 = vld [vmem:[%s3527] ss:$8 sm:$0xf0]
        %v4014 = vor.u32 %v4012, %v4013
        %v4015 = vmax.f32 %v4007, %v4011
        %v4016 = vmax.f32 %v4008, %v4014
        %v4017 = vld [vmem:[%s3533] ss:$8 sm:$0xf]
        %v4018 = vld [vmem:[%s3533] ss:$8 sm:$0xf0]
        %v4019 = vor.u32 %v4017, %v4018
        %v4020 = vld [vmem:[%s3537] ss:$8 sm:$0xf]
        %v4021 = vld [vmem:[%s3537] ss:$8 sm:$0xf0]
        %v4022 = vor.u32 %v4020, %v4021
        %v4023 = vmax.f32 %v4015, %v4019
        %v4024 = vmax.f32 %v4016, %v4022
        %v4025 = vld [vmem:[%s3543] ss:$8 sm:$0xf]
        %v4026 = vld [vmem:[%s3543] ss:$8 sm:$0xf0]
        %v4027 = vor.u32 %v4025, %v4026
        %v4028 = vld [vmem:[%s3547] ss:$8 sm:$0xf]
        %v4029 = vld [vmem:[%s3547] ss:$8 sm:$0xf0]
        %v4030 = vor.u32 %v4028, %v4029
        %v4031 = vmax.f32 %v4023, %v4027
        %v4032 = vmax.f32 %v4024, %v4030
        %v4033 = vld [vmem:[%s3553] ss:$8 sm:$0xf]
        %v4034 = vld [vmem:[%s3553] ss:$8 sm:$0xf0]
        %v4035 = vor.u32 %v4033, %v4034
        %v4036 = vld [vmem:[%s3557] ss:$8 sm:$0xf]
        %v4037 = vld [vmem:[%s3557] ss:$8 sm:$0xf0]
        %v4038 = vor.u32 %v4036, %v4037
        %v4039 = vmax.f32 %v4031, %v4035
        %v4040 = vmax.f32 %v4032, %v4038
        %v4041 = vld [vmem:[%s3563] ss:$8 sm:$0xf]
        %v4042 = vld [vmem:[%s3563] ss:$8 sm:$0xf0]
        %v4043 = vor.u32 %v4041, %v4042
        %v4044 = vld [vmem:[%s3567] ss:$8 sm:$0xf]
        %v4045 = vld [vmem:[%s3567] ss:$8 sm:$0xf0]
        %v4046 = vor.u32 %v4044, %v4045
        %v4047 = vmax.f32 %v4039, %v4043
        %v4048 = vmax.f32 %v4040, %v4046
        %4049 = vmatprep.subr.mxu0 0.0
        %4050 = vmatpush1.msra.mxu0 %v3477
        %4051 = vmatprep.subr.mxu0 0.0
        %4052 = vmatpush1.msra.mxu0 %v3476
        %4053 = vmatprep.subr.mxu0 0.0
        %4054 = vmatpush1.msra.mxu0 %v3475
        %4055 = vmatprep.subr.mxu0 0.0
        %4056 = vmatpush1.msra.mxu0 %v3474
        %4057 = vmatprep.subr.mxu0 0.0
        %4058 = vmatpush1.msra.mxu0 %v3473
        %4059 = vmatprep.subr.mxu0 0.0
        %4060 = vmatpush1.msra.mxu0 %v3472
        %4061 = vmatprep.subr.mxu0 0.0
        %4062 = vmatpush1.msra.mxu0 %v3471
        %4063 = vmatprep.subr.mxu0 0.0
        %4064 = vmatpush1.msra.mxu0 %v3470
        %4065 = vmatprep.subr.mxu0 0.0
        %4066 = vmatpush1.msra.mxu0 %v3469
        %4067 = vmatprep.subr.mxu0 0.0
        %4068 = vmatpush1.msra.mxu0 %v3468
        %4069 = vmatprep.subr.mxu0 0.0
        %4070 = vmatpush1.msra.mxu0 %v3467
        %4071 = vmatprep.subr.mxu0 0.0
        %4072 = vmatpush1.msra.mxu0 %v3466
        %4073 = vmatprep.subr.mxu0 0.0
        %4074 = vmatpush1.msra.mxu0 %v3465
        %4075 = vmatprep.subr.mxu0 0.0
        %4076 = vmatpush1.msra.mxu0 %v3464
        %4077 = vmatprep.subr.mxu0 0.0
        %4078 = vmatpush1.msra.mxu0 %v3463
        %4079 = vmatprep.subr.mxu0 0.0
        %4080 = vmatpush1.msra.mxu0 %v3462
        %4081 = vmatprep.subr.mxu0 0.0
        %4082 = vmatpush2.msra.mxu0 0.0
        %4083 = vmatprep.subr.mxu0 0.0
        %4084 = vmatpush2.msra.mxu0 0.0
        %4085 = vmatprep.subr.mxu0 0.0
        %4086 = vmatpush2.msra.mxu0 0.0
        %4087 = vmatprep.subr.mxu0 0.0
        %4088 = vmatpush2.msra.mxu0 0.0
        %4089 = vmatprep.subr.mxu0 0.0
        %4090 = vmatpush2.msra.mxu0 0.0
        %4091 = vmatprep.subr.mxu0 0.0
        %4092 = vmatpush2.msra.mxu0 0.0
        %4093 = vmatprep.subr.mxu0 0.0
        %4094 = vmatpush2.msra.mxu0 0.0
        %4095 = vmatprep.subr.mxu0 0.0
        %4096 = vmatpush2.msra.mxu0 0.0
        %4097 = vmatprep.subr.mxu0 0.0
        %4098 = vmatpush2.msra.mxu0 0.0
        %4099 = vmatprep.subr.mxu0 0.0
        %4100 = vmatpush2.msra.mxu0 0.0
        %4101 = vmatprep.subr.mxu0 0.0
        %4102 = vmatpush2.msra.mxu0 0.0
        %4103 = vmatprep.subr.mxu0 0.0
        %4104 = vmatpush2.msra.mxu0 0.0
        %4105 = vmatprep.subr.mxu0 0.0
        %4106 = vmatpush2.msra.mxu0 0.0
        %4107 = vmatprep.subr.mxu0 0.0
        %4108 = vmatpush2.msra.mxu0 0.0
        %4109 = vmatprep.subr.mxu0 0.0
        %4110 = vmatpush2.msra.mxu0 0.0
        %4111 = vmatprep.subr.mxu0 0.0
        %4112 = vmatpush2.msra.mxu0 0.0
        %4113 = vmatprep.mubr.f32.mxu0 0.0
        %4114 = vmatmul.mubr.f32.gmra.mxu0 %v3478
        %v4115 = vpop.f32.mrf.mxu0
        %v4116 = vadd.f32 %v4047, %v4115
        %v4117 = vpop.f32.mrf.mxu0
        %4118 = vmatprep.mubr.f32.mxu0 0.0
        %4119 = vmatmul.mubr.f32.gmra.mxu0 %v3479
        %v4120 = vpop.f32.mrf.mxu0
        %v4121 = vadd.f32 %v4048, %v4120
        %v4122 = vpop.f32.mrf.mxu0
        %4123 = vdwg.mxu0
        %v4124 = vld [vmem:[%s2 + $0xd0] sm:$0xff]
        %v4125 = vld [vmem:[%s2 + $0xd8] sm:$0xff]
        %v4126 = vld [vmem:[%s2 + $0xe0] sm:$0xff]
        %v4127 = vld [vmem:[%s2 + $0xe8] sm:$0xff]
        %v4129 = vsel %vm617, %v4116, 0
        %v4132 = vsel %vm617, %v4121, 0
        %4134 = vmatprep.subr.mxu0 0.0
        %4135 = vmatpush1.msra.mxu0 0.0
        %4136 = vmatprep.subr.mxu0 0.0
        %4137 = vmatpush1.msra.mxu0 0.0
        %4138 = vmatprep.subr.mxu0 0.0
        %4139 = vmatpush1.msra.mxu0 0.0
        %4140 = vmatprep.subr.mxu0 0.0
        %4141 = vmatpush1.msra.mxu0 0.0
        %4142 = vmatprep.subr.mxu0 0.0
        %4143 = vmatpush1.msra.mxu0 0.0
        %4144 = vmatprep.subr.mxu0 0.0
        %4145 = vmatpush1.msra.mxu0 0.0
        %4146 = vmatprep.subr.mxu0 0.0
        %4147 = vmatpush1.msra.mxu0 0.0
        %4148 = vmatprep.subr.mxu0 0.0
        %4149 = vmatpush1.msra.mxu0 0.0
        %4150 = vmatprep.subr.mxu0 0.0
        %4151 = vmatpush1.msra.mxu0 0.0
        %4152 = vmatprep.subr.mxu0 0.0
        %4153 = vmatpush1.msra.mxu0 0.0
        %4154 = vmatprep.subr.mxu0 0.0
        %4155 = vmatpush1.msra.mxu0 0.0
        %4156 = vmatprep.subr.mxu0 0.0
        %4157 = vmatpush1.msra.mxu0 0.0
        %4158 = vmatprep.subr.mxu0 0.0
        %4159 = vmatpush1.msra.mxu0 %v4127
        %4160 = vmatprep.subr.mxu0 0.0
        %4161 = vmatpush1.msra.mxu0 %v4126
        %4162 = vmatprep.subr.mxu0 0.0
        %4163 = vmatpush1.msra.mxu0 %v4125
        %4164 = vmatprep.subr.mxu0 0.0
        %4165 = vmatpush1.msra.mxu0 %v4124
        %4166 = vmatprep.subr.mxu0 0.0
        %4167 = vmatpush2.msra.mxu0 0.0
        %4168 = vmatprep.subr.mxu0 0.0
        %4169 = vmatpush2.msra.mxu0 0.0
        %4170 = vmatprep.subr.mxu0 0.0
        %4171 = vmatpush2.msra.mxu0 0.0
        %4172 = vmatprep.subr.mxu0 0.0
        %4173 = vmatpush2.msra.mxu0 0.0
        %4174 = vmatprep.subr.mxu0 0.0
        %4175 = vmatpush2.msra.mxu0 0.0
        %4176 = vmatprep.subr.mxu0 0.0
        %4177 = vmatpush2.msra.mxu0 0.0
        %4178 = vmatprep.subr.mxu0 0.0
        %4179 = vmatpush2.msra.mxu0 0.0
        %4180 = vmatprep.subr.mxu0 0.0
        %4181 = vmatpush2.msra.mxu0 0.0
        %4182 = vmatprep.subr.mxu0 0.0
        %4183 = vmatpush2.msra.mxu0 0.0
        %4184 = vmatprep.subr.mxu0 0.0
        %4185 = vmatpush2.msra.mxu0 0.0
        %4186 = vmatprep.subr.mxu0 0.0
        %4187 = vmatpush2.msra.mxu0 0.0
        %4188 = vmatprep.subr.mxu0 0.0
        %4189 = vmatpush2.msra.mxu0 0.0
        %4190 = vmatprep.subr.mxu0 0.0
        %4191 = vmatpush2.msra.mxu0 0.0
        %4192 = vmatprep.subr.mxu0 0.0
        %4193 = vmatpush2.msra.mxu0 0.0
        %4194 = vmatprep.subr.mxu0 0.0
        %4195 = vmatpush2.msra.mxu0 0.0
        %4196 = vmatprep.subr.mxu0 0.0
        %4197 = vmatpush2.msra.mxu0 0.0
        %4198 = vmatprep.mubr.f32.mxu0 0.0
        %4199 = vmatmul.mubr.f32.gmra.mxu0 %v4129
        %v4200 = vpop.f32.mrf.mxu0
        %v4201 = vadd.f32 0.0, %v4200
        %v4202 = vpop.f32.mrf.mxu0
        %4203 = vmatprep.mubr.f32.mxu0 0.0
        %4204 = vmatmul.mubr.f32.gmra.mxu0 %v4132
        %v4205 = vpop.f32.mrf.mxu0
        %v4206 = vadd.f32 0.0, %v4205
        %v4207 = vpop.f32.mrf.mxu0
        %4208 = vdwg.mxu0
        %v4209 = vadd.f32 %v3963, %v4201
        %v4210 = vadd.f32 %v3968, %v4206
        %v4211 = vld [vmem:[%s2 + $0xf8] sm:$0x1]
        %v4212 = vlaneseq
        %v4213 = vshrl.u32 %v4212, 7
        %v4214 = vsub.s32 0, %v4213
        %v4215 = vrot.slane %v4211, %v4214
        %v4216 = vadd.f32 %v4209, %v4215
        %v4217 = vadd.f32 %v4210, %v4215
        %4218 = vst [vmem:[%s204] sm:$0xff] %v4216
        %4219 = vst [vmem:[%s204 + $0x8] sm:$0xff] %v4217
        %s4220 = sand.u32 %s101, 1
        %s4221 = scalar_lea.sflag [#allocation5], %s4220
        %s4222 = sand.u32 %s101, 1
        %s4223 = smul.addr %s4222, 16
        %s4224 = scalar_lea.vmem [#allocation6], %s4223
        // Predicated region
        $region37: #{tpu_custom_call.1} parent=31 // pred_check
          %p4225 = pneg %p111
        $region38: #{tpu_custom_call.1} parent=31 // pred_check_branch
          %4227 = sbr.rel (%p4225) target = $region40
        $region39: #{tpu_custom_call.1} parent=31 // pred_region
          %s4228 = smul.u32 2, %s20
          %s4230 = ssub.s32 256, 256
          %4231 = vsyncadd %s4221, %s4230
          %s4232 = smul.addr %s4228, 128
          %s4233 = scalar_lea.hbm %s3, %s4232
          %s4234 = sshll.u32 %s4224, 4
          %s4235 = int_to_ptr.vmem [resolvable:$true] %s4234
          %4240 = dma.vmem_to_hbm [thread:$0]  %s4235, 256, %s4233, %s4221, 128, 128, 8
        $region40: #{tpu_custom_call.1} parent=31 // pred_fallthru
          _
      $region32: #{tpu_custom_call.1} parent=5 // pred_fallthru
        _
      %p4241 = scmp.le.s32.totalorder 2, %s15
      // Predicated region
      $region41: #{tpu_custom_call.1} parent=5 // pred_check
        %p4242 = pneg %p4241
      $region42: #{tpu_custom_call.1} parent=5 // pred_check_branch
        %4244 = sbr.rel (%p4242) target = $region44
      $region43: #{tpu_custom_call.1} parent=5 // pred_region
        %s4245 = ssub.s32 %s15, 2
        // Predicated region
        $region45: #{tpu_custom_call.1} parent=43 // pred_check
          %p4246 = pneg %p117
        $region46: #{tpu_custom_call.1} parent=43 // pred_check_branch
          %4248 = sbr.rel (%p4246) target = $region48
        $region47: #{tpu_custom_call.1} parent=43 // pred_region
          %s4249 = sand.u32 %s102, 1
          %s4250 = scalar_lea.sflag [#allocation5], %s4249
          %s4251 = sand.u32 %s102, 1
          %s4252 = smul.addr %s4251, 16
          %s4253 = scalar_lea.vmem [#allocation6], %s4252
          %4254 = dma.done %s4250, 256
        $region48: #{tpu_custom_call.1} parent=43 // pred_fallthru
          _
      $region44: #{tpu_custom_call.1} parent=5 // pred_fallthru
        _
    $region6: #{tpu_custom_call.1} parent=1 // loop_footer
      %s19 = sadd.s32 1, %s15
    $region7: #{tpu_custom_call.1} parent=1 // loop_footer_branch
      %14 = sbr.rel target = $region3
    $region8: #{tpu_custom_call.1} parent=1 // loop_exit
      _
    %4255 = vsyncpa [#allocation4], 1
    %s4256 = scalar_lea.sflag [#allocation4], 1
    %4257 = vsyncpa %s4256, 1
    %4258 = vsyncpa [#allocation5], 1
    %s4259 = scalar_lea.sflag [#allocation5], 1
    %4260 = vsyncpa %s4259, 1

</llo_original>
